<compile_context>
chip_gen: v5e
topology: v5e:2x2
jax: 0.10.0
libtpu: 0.0.40
codegen_flags: <defaults>
</compile_context>

<pallas_src>
import functools
import math

import jax
import jax.numpy as jnp
from jax.experimental import pallas as pl
from jax.experimental.pallas import tpu as pltpu


# bf16 MXU operands on real TPUs (f32 accumulation everywhere); plain f32 on non-TPU
# backends (e.g. CPU interpret mode, whose DotThunk rejects BF16 x BF16 = F32).
_MXU_DTYPE = jnp.bfloat16 if jax.default_backend() == "tpu" else jnp.float32


# ----------------------------- in-kernel helpers -----------------------------

def _group_norm(x, gamma, beta, groups, eps=1e-5):
    """GroupNorm on a channel-major slab.  x: (C, H*W) f32, gamma/beta: (C, 1)."""
    c, hw = x.shape
    cg = c // groups
    xg = x.reshape(groups, cg, hw)
    inv_n = 1.0 / float(cg * hw)
    mu = jnp.sum(jnp.sum(xg, axis=2, keepdims=True), axis=1, keepdims=True) * inv_n
    d = xg - mu
    var = jnp.sum(jnp.sum(d * d, axis=2, keepdims=True), axis=1, keepdims=True) * inv_n
    # fold affine scale into the normalisation scale (fewer VPU ops on the big slab)
    a = jax.lax.rsqrt(var + eps) * gamma.reshape(groups, cg, 1)
    return (d * a + beta.reshape(groups, cg, 1)).reshape(c, hw)


def _swish(x):
    return x * jax.nn.sigmoid(x)


def _conv3x3_same(act, w_t, bias, width, cdtype):
    """3x3 'same' conv on a channel-major slab.

    act:  (Cin, H*W) f32, flat spatial index j = y*width + x (row-major).
    w_t:  (Cout, 9*Cin_pad) cdtype, column index = (ky*3 + kx)*Cin_pad + ci
          (columns ci >= Cin are zero).
    bias: (Cout, 1) f32.
    Returns (Cout, H*W) f32.
    """
    cin, hw = act.shape
    cin_pad = -(-cin // 8) * 8
    if cin_pad != cin:
        # align each tap to an 8-sublane boundary so the 9-tap stack needs no relayout
        act = jnp.concatenate(
            [act, jnp.zeros((cin_pad - cin, hw), act.dtype)], axis=0)

    if (width & (width - 1)) == 0:
        wpos = jax.lax.broadcasted_iota(jnp.int32, (1, hw), 1) & (width - 1)
    else:
        wpos = jax.lax.rem(jax.lax.broadcasted_iota(jnp.int32, (1, hw), 1), width)

    taps = []
    for ky in range(3):
        for kx in range(3):
            shift = (ky - 1) * width + (kx - 1)
            if shift > 0:
                t = jnp.concatenate(
                    [act[:, shift:], jnp.zeros((cin_pad, shift), act.dtype)], axis=1)
            elif shift < 0:
                t = jnp.concatenate(
                    [jnp.zeros((cin_pad, -shift), act.dtype), act[:, :shift]], axis=1)
            else:
                t = act
            # zero the columns whose horizontal source fell outside the row; vertically
            # out-of-range sources are already zero after the flat shift above.
            if kx == 2:
                t = jnp.where(wpos == width - 1, 0.0, t)
            elif kx == 0:
                t = jnp.where(wpos == 0, 0.0, t)
            taps.append(t)

    slab = jnp.concatenate(taps, axis=0).astype(cdtype)          # (9*Cin_pad, H*W) im2col
    out = jnp.dot(w_t, slab, preferred_element_type=jnp.float32)  # single MXU matmul
    return out + bias


# ---------------------------------- kernel -----------------------------------

def _fused_kernel(x_ref, s_ref, pin_ref, pout_ref,
                  w1_ref, w2_ref, wres_ref,
                  wq_ref, wk_ref, wv_ref, wo_ref,
                  o_ref, *, groups, width, cdtype):
    """Fused ResnetBlock + SelfAttention for one batch element (channel-major slabs)."""
    x = x_ref[0].astype(jnp.float32)                              # (Cin, H*W)

    # packed per-channel params (column slices -> (C, 1) with no relayout)
    g1, b1 = pin_ref[:, 0:1], pin_ref[:, 1:2]
    cb1 = pout_ref[:, 0:1]
    g2, b2 = pout_ref[:, 1:2], pout_ref[:, 2:3]
    cb2 = pout_ref[:, 3:4]
    bres = pout_ref[:, 4:5]
    ga, ba = pout_ref[:, 5:6], pout_ref[:, 6:7]
    bo = pout_ref[:, 7:8]

    # ---------------- ResnetBlock ----------------
    # block1: GroupNorm -> Swish -> Conv3x3   (dropout=0 -> Identity)
    a1 = _swish(_group_norm(x, g1, b1, groups))
    h = _conv3x3_same(a1, w1_ref[...], cb1, width, cdtype)        # (Cout, H*W)

    # FeatureWiseAffine (use_affine_level=True): h = h*(1+s) + s, s = 0.5*(gamma+beta)
    s = s_ref[0]                                                  # (Cout, 1) per batch
    h = h * (1.0 + s) + s

    # block2: GroupNorm -> Swish -> Conv3x3
    a2 = _swish(_group_norm(h, g2, b2, groups))
    h = _conv3x3_same(a2, w2_ref[...], cb2, width, cdtype)

    # residual: 1x1 conv on the original input
    r = jnp.dot(wres_ref[...], x.astype(cdtype),
                preferred_element_type=jnp.float32) + bres
    h = h + r                                                     # ResnetBlock output (f32)

    # ---------------- SelfAttention (n_head = 1) ----------------
    c = h.shape[0]
    nrm = _group_norm(h, ga, ba, groups).astype(cdtype)           # (C, H*W)
    q = jnp.dot(wq_ref[...], nrm, preferred_element_type=jnp.float32)
    k = jnp.dot(wk_ref[...], nrm, preferred_element_type=jnp.float32)
    v = jnp.dot(wv_ref[...], nrm, preferred_element_type=jnp.float32)

    # scores[q_idx, k_idx] = sum_c q[c, q_idx] * k[c, k_idx]   (no explicit transpose)
    scores = jax.lax.dot_general(q.astype(cdtype), k.astype(cdtype),
                                 (((0,), (0,)), ((), ())),
                                 preferred_element_type=jnp.float32)
    scores = scores * (1.0 / math.sqrt(c))
    m = jnp.max(scores, axis=-1, keepdims=True)                   # stats stay f32
    e = jnp.exp(scores - m)
    probs = e / jnp.sum(e, axis=-1, keepdims=True)

    # ctx[c, q_idx] = sum_k v[c, k_idx] * probs[q_idx, k_idx]
    ctx = jax.lax.dot_general(v.astype(cdtype), probs.astype(cdtype),
                              (((1,), (1,)), ((), ())),
                              preferred_element_type=jnp.float32)  # (C, H*W)
    y = jnp.dot(wo_ref[...], ctx.astype(cdtype),
                preferred_element_type=jnp.float32) + bo

    o_ref[0] = (y + h).astype(o_ref.dtype)                        # lane-dense store


# --------------------------------- wrapper -----------------------------------

def prepare_params(p, *, dim, dim_out):
    """One-time layout transforms / casts (cached outside the sampling loop)."""
    cin_pad = -(-dim // 8) * 8
    cout_pad = -(-dim_out // 8) * 8

    def tap_major(w, cin, cin_p):
        cout = w.shape[0]
        wt = jnp.transpose(w, (0, 2, 3, 1))                       # (Cout, 3, 3, Cin)
        wt = jnp.pad(wt, ((0, 0), (0, 0), (0, 0), (0, cin_p - cin)))
        return wt.reshape(cout, 9 * cin_p).astype(_MXU_DTYPE)

    wqkv = p["wqkv"][:, :, 0, 0]                                  # (3*Cout, Cout)
    return {
        "w1_t": tap_major(p["w1"], dim, cin_pad),
        "w2_t": tap_major(p["w2"], dim_out, cout_pad),
        "w_res": p["wres"][:, :, 0, 0].astype(_MXU_DTYPE),        # (Cout, Cin)
        "w_q": wqkv[:dim_out].astype(_MXU_DTYPE),
        "w_k": wqkv[dim_out:2 * dim_out].astype(_MXU_DTYPE),
        "w_v": wqkv[2 * dim_out:].astype(_MXU_DTYPE),
        "w_o": p["wo"][:, :, 0, 0].astype(_MXU_DTYPE),
        # packed per-channel parameters (one small DMA each instead of 10+)
        "p_in": jnp.stack([p["g1"], p["b1"]], axis=1).astype(jnp.float32),          # (Cin, 2)
        "p_out": jnp.stack([p["cb1"], p["g2"], p["b2"], p["cb2"], p["bres"],
                            p["ga"], p["ba"], p["bo"]], axis=1).astype(jnp.float32),  # (Cout, 8)
        "w_fwa": p["w_fwa"].astype(jnp.float32),
        "b_fwa": p["b_fwa"].astype(jnp.float32),
    }


def resnet_bloc_with_attn_forward(x_nchw, time_emb, pre, *, norm_groups):
    """x_nchw: (N, Cin, H, W) f32, time_emb: (N, E) f32 or None.  Returns (N, Cout, H, W)."""
    N, Cin, H, W = x_nchw.shape
    HW = H * W
    Cout = pre["w_o"].shape[0]

    # Native NCHW is already channel-major -> free reshapes only, no HBM transposes.
    x_flat = x_nchw.reshape(N, Cin, HW)

    # FeatureWiseAffine scale (tiny Linear on the noise embedding, evaluated in plain JAX).
    if time_emb is not None:
        fwa = time_emb @ pre["w_fwa"].T + pre["b_fwa"]            # (N, 2*Cout)
        s_fwa = 0.5 * (fwa[:, :Cout] + fwa[:, Cout:])
    else:
        s_fwa = jnp.zeros((N, Cout), jnp.float32)                 # h*(1+0)+0 == h
    s_fwa = s_fwa.reshape(N, Cout, 1).astype(jnp.float32)

    def full(a):                                                  # whole-array (replicated) spec
        return pl.BlockSpec(a.shape, lambda n, nd=a.ndim: (0,) * nd)

    out = pl.pallas_call(
        functools.partial(_fused_kernel, groups=norm_groups, width=W, cdtype=_MXU_DTYPE),
        out_shape=jax.ShapeDtypeStruct((N, Cout, HW), x_nchw.dtype),
        grid_spec=pltpu.PrefetchScalarGridSpec(
            num_scalar_prefetch=0,
            grid=(N,),
            in_specs=[
                pl.BlockSpec((1, Cin, HW), lambda n: (n, 0, 0)),
                pl.BlockSpec((1, Cout, 1), lambda n: (n, 0, 0)),
                full(pre["p_in"]), full(pre["p_out"]),
                full(pre["w1_t"]), full(pre["w2_t"]), full(pre["w_res"]),
                full(pre["w_q"]), full(pre["w_k"]), full(pre["w_v"]), full(pre["w_o"]),
            ],
            out_specs=pl.BlockSpec((1, Cout, HW), lambda n: (n, 0, 0)),
        ),
        compiler_params=pltpu.CompilerParams(
            dimension_semantics=("parallel",),        # shard the batch across v7x TensorCores
            vmem_limit_bytes=32 * 1024 * 1024,
        ),
    )(x_flat, s_fwa, pre["p_in"], pre["p_out"],
      pre["w1_t"], pre["w2_t"], pre["w_res"],
      pre["w_q"], pre["w_k"], pre["w_v"], pre["w_o"])

    return out.reshape(N, Cout, H, W)


# ----------------------------- params & reference ----------------------------

def init_params(key, dim, dim_out, noise_dim):
    """Deterministic, PyTorch-default-style init (GN affines perturbed to exercise the path)."""
    ks = jax.random.split(key, 18)

    def uni(k, shape, fan_in):
        b = 1.0 / math.sqrt(fan_in)
        return jax.random.uniform(k, shape, jnp.float32, -b, b)

    p = {}
    # FeatureWiseAffine: Linear(noise_dim, 2*dim_out)
    p["w_fwa"] = uni(ks[0], (2 * dim_out, noise_dim), noise_dim)
    p["b_fwa"] = uni(ks[1], (2 * dim_out,), noise_dim)
    # block1: GroupNorm(dim) + Conv2d(dim, dim_out, 3, padding=1)
    p["g1"] = 1.0 + 0.1 * jax.random.normal(ks[2], (dim,), jnp.float32)
    p["b1"] = 0.1 * jax.random.normal(ks[3], (dim,), jnp.float32)
    p["w1"] = uni(ks[4], (dim_out, dim, 3, 3), dim * 9)
    p["cb1"] = uni(ks[5], (dim_out,), dim * 9)
    # block2: GroupNorm(dim_out) + Conv2d(dim_out, dim_out, 3, padding=1)
    p["g2"] = 1.0 + 0.1 * jax.random.normal(ks[6], (dim_out,), jnp.float32)
    p["b2"] = 0.1 * jax.random.normal(ks[7], (dim_out,), jnp.float32)
    p["w2"] = uni(ks[8], (dim_out, dim_out, 3, 3), dim_out * 9)
    p["cb2"] = uni(ks[9], (dim_out,), dim_out * 9)
    # res_conv: Conv2d(dim, dim_out, 1)  (dim != dim_out in the example)
    p["wres"] = uni(ks[10], (dim_out, dim, 1, 1), dim)
    p["bres"] = uni(ks[11], (dim_out,), dim)
    # SelfAttention: GroupNorm + Conv2d(dim_out, 3*dim_out, 1, bias=False) + Conv2d(dim_out, dim_out, 1)
    p["ga"] = 1.0 + 0.1 * jax.random.normal(ks[12], (dim_out,), jnp.float32)
    p["ba"] = 0.1 * jax.random.normal(ks[13], (dim_out,), jnp.float32)
    p["wqkv"] = uni(ks[14], (3 * dim_out, dim_out, 1, 1), dim_out)
    p["wo"] = uni(ks[15], (dim_out, dim_out, 1, 1), dim_out)
    p["bo"] = uni(ks[16], (dim_out,), dim_out)
    return p


def reference_forward(x, time_emb, p, *, norm_groups):
    """Pure-JAX NCHW reference mirroring the PyTorch module (n_head=1, dropout=0)."""
    def group_norm(z, g, b):
        n_, c_, h_, w_ = z.shape
        zg = z.reshape(n_, norm_groups, c_ // norm_groups, h_, w_)
        mu = zg.mean(axis=(2, 3, 4), keepdims=True)
        var = zg.var(axis=(2, 3, 4), keepdims=True)
        zn = ((zg - mu) / jnp.sqrt(var + 1e-5)).reshape(n_, c_, h_, w_)
        return zn * g[None, :, None, None] + b[None, :, None, None]

    def swish(z):
        return z * jax.nn.sigmoid(z)

    def conv(z, w, b=None, pad=0):
        y = jax.lax.conv_general_dilated(z, w, (1, 1), ((pad, pad), (pad, pad)),
                                         dimension_numbers=("NCHW", "OIHW", "NCHW"))
        return y if b is None else y + b[None, :, None, None]

    c_out = p["w1"].shape[0]
    # ResnetBlock
    h = conv(swish(group_norm(x, p["g1"], p["b1"])), p["w1"], p["cb1"], pad=1)
    if time_emb is not None:
        fwa = time_emb @ p["w_fwa"].T + p["b_fwa"]
        gam, bet = fwa[:, :c_out], fwa[:, c_out:]
        s = (0.5 * (gam + bet))[:, :, None, None]
        h = h + s * h + s
    h = conv(swish(group_norm(h, p["g2"], p["b2"])), p["w2"], p["cb2"], pad=1)
    h = h + conv(x, p["wres"], p["bres"])
    # SelfAttention (n_head = 1)
    inp = h
    c = c_out
    nrm = group_norm(inp, p["ga"], p["ba"])
    qkv = conv(nrm, p["wqkv"])
    q, k, v = qkv[:, :c], qkv[:, c:2 * c], qkv[:, 2 * c:]
    nb, _, hh, ww = q.shape
    attn = jnp.einsum("nchw,ncyx->nhwyx", q, k) / math.sqrt(c)
    attn = jax.nn.softmax(attn.reshape(nb, hh, ww, hh * ww), axis=-1).reshape(nb, hh, ww, hh, ww)
    ctx = jnp.einsum("nhwyx,ncyx->nchw", attn, v)
    out = conv(ctx, p["wo"], p["bo"])
    return out + inp


# ----------------------------------- main ------------------------------------

if __name__ == "__main__":
    # Small shapes consistent with the module: ResnetBlocWithAttn(dim=4, dim_out=8,
    # noise_level_emb_dim=16, norm_groups=2, dropout=0) on a (2, 4, 16, 16) input.
    N, DIM, DIM_OUT, H, W = 2, 4, 8, 16, 16
    NORM_GROUPS = 2
    NOISE_DIM = 16

    root = jax.random.PRNGKey(0)
    kx, kt, kp = jax.random.split(root, 3)
    x = jax.random.normal(kx, (N, DIM, H, W), jnp.float32)
    time_emb = jax.random.normal(kt, (N, NOISE_DIM), jnp.float32)
    params = init_params(kp, DIM, DIM_OUT, NOISE_DIM)
    prepped = prepare_params(params, dim=DIM, dim_out=DIM_OUT)

    out = resnet_bloc_with_attn_forward(x, time_emb, prepped, norm_groups=NORM_GROUPS)
    out = jax.block_until_ready(out)

    ref = jax.block_until_ready(reference_forward(x, time_emb, params, norm_groups=NORM_GROUPS))
    assert out.shape == (N, DIM_OUT, H, W)
    # bf16 MXU operands (on TPU) leave ~1% relative error vs the pure-f32 reference.
    err = float(jnp.max(jnp.abs(out - ref)))
    assert jnp.allclose(out, ref, rtol=3e-2, atol=3e-2), err
    print("KERNEL_OK")
</pallas_src>

<mosaic_0001>
module attributes {stable_mosaic.version = 11 : i64} {
  func.func @_fused_kernel(%arg0: i32, %arg1: memref<1x4x256xf32, #tpu.memory_space<vmem>>, %arg2: memref<1x8x1xf32, #tpu.memory_space<vmem>>, %arg3: memref<4x2xf32, #tpu.memory_space<vmem>>, %arg4: memref<8x8xf32, #tpu.memory_space<vmem>>, %arg5: memref<8x72xf32, #tpu.memory_space<vmem>>, %arg6: memref<8x72xf32, #tpu.memory_space<vmem>>, %arg7: memref<8x4xf32, #tpu.memory_space<vmem>>, %arg8: memref<8x8xf32, #tpu.memory_space<vmem>>, %arg9: memref<8x8xf32, #tpu.memory_space<vmem>>, %arg10: memref<8x8xf32, #tpu.memory_space<vmem>>, %arg11: memref<8x8xf32, #tpu.memory_space<vmem>>, %arg12: memref<1x8x256xf32, #tpu.memory_space<vmem>>) attributes {dimension_semantics = [#tpu.dimension_semantics<parallel>], iteration_bounds = array<i64: 2>, scalar_prefetch = 0 : i64, scratch_operands = 0 : i64, tpu.core_type = #tpu.core_type<tc>, window_params = [{transform_indices = @transform_0, window_bounds = array<i64: 1, 4, 256>}, {transform_indices = @transform_1, window_bounds = array<i64: 1, 8, 1>}, {pipeline_mode = #tpu.pipeline_mode<synchronous>, transform_indices = @transform_2, window_bounds = array<i64: 4, 2>}, {pipeline_mode = #tpu.pipeline_mode<synchronous>, transform_indices = @transform_3, window_bounds = array<i64: 8, 8>}, {pipeline_mode = #tpu.pipeline_mode<synchronous>, transform_indices = @transform_4, window_bounds = array<i64: 8, 72>}, {pipeline_mode = #tpu.pipeline_mode<synchronous>, transform_indices = @transform_5, window_bounds = array<i64: 8, 72>}, {pipeline_mode = #tpu.pipeline_mode<synchronous>, transform_indices = @transform_6, window_bounds = array<i64: 8, 4>}, {pipeline_mode = #tpu.pipeline_mode<synchronous>, transform_indices = @transform_7, window_bounds = array<i64: 8, 8>}, {pipeline_mode = #tpu.pipeline_mode<synchronous>, transform_indices = @transform_8, window_bounds = array<i64: 8, 8>}, {pipeline_mode = #tpu.pipeline_mode<synchronous>, transform_indices = @transform_9, window_bounds = array<i64: 8, 8>}, {pipeline_mode = #tpu.pipeline_mode<synchronous>, transform_indices = @transform_10, window_bounds = array<i64: 8, 8>}, {transform_indices = @transform_11, window_bounds = array<i64: 1, 8, 256>}]} {
    %c0 = arith.constant 0 : index
    %c0_0 = arith.constant 0 : index
    %c0_1 = arith.constant 0 : index
    %0 = vector.load %arg1[%c0, %c0_0, %c0_1] : memref<1x4x256xf32, #tpu.memory_space<vmem>>, vector<1x4x256xf32>
    %1 = vector.shape_cast %0 : vector<1x4x256xf32> to vector<4x256xf32>
    %c0_2 = arith.constant 0 : index
    %c0_3 = arith.constant 0 : index
    %2 = vector.load %arg3[%c0_2, %c0_3] : memref<4x2xf32, #tpu.memory_space<vmem>>, vector<4x1xf32>
    %c0_4 = arith.constant 0 : index
    %c1 = arith.constant 1 : index
    %3 = vector.load %arg3[%c0_4, %c1] : memref<4x2xf32, #tpu.memory_space<vmem>>, vector<4x1xf32>
    %c0_5 = arith.constant 0 : index
    %c0_6 = arith.constant 0 : index
    %4 = vector.load %arg4[%c0_5, %c0_6] : memref<8x8xf32, #tpu.memory_space<vmem>>, vector<8x1xf32>
    %c0_7 = arith.constant 0 : index
    %c1_8 = arith.constant 1 : index
    %5 = vector.load %arg4[%c0_7, %c1_8] : memref<8x8xf32, #tpu.memory_space<vmem>>, vector<8x1xf32>
    %c0_9 = arith.constant 0 : index
    %c2 = arith.constant 2 : index
    %6 = vector.load %arg4[%c0_9, %c2] : memref<8x8xf32, #tpu.memory_space<vmem>>, vector<8x1xf32>
    %c0_10 = arith.constant 0 : index
    %c3 = arith.constant 3 : index
    %7 = vector.load %arg4[%c0_10, %c3] : memref<8x8xf32, #tpu.memory_space<vmem>>, vector<8x1xf32>
    %c0_11 = arith.constant 0 : index
    %c4 = arith.constant 4 : index
    %8 = vector.load %arg4[%c0_11, %c4] : memref<8x8xf32, #tpu.memory_space<vmem>>, vector<8x1xf32>
    %c0_12 = arith.constant 0 : index
    %c5 = arith.constant 5 : index
    %9 = vector.load %arg4[%c0_12, %c5] : memref<8x8xf32, #tpu.memory_space<vmem>>, vector<8x1xf32>
    %c0_13 = arith.constant 0 : index
    %c6 = arith.constant 6 : index
    %10 = vector.load %arg4[%c0_13, %c6] : memref<8x8xf32, #tpu.memory_space<vmem>>, vector<8x1xf32>
    %c0_14 = arith.constant 0 : index
    %c7 = arith.constant 7 : index
    %11 = vector.load %arg4[%c0_14, %c7] : memref<8x8xf32, #tpu.memory_space<vmem>>, vector<8x1xf32>
    %12 = vector.shape_cast %1 : vector<4x256xf32> to vector<2x2x256xf32>
    %cst = arith.constant dense<0.000000e+00> : vector<2x2xf32>
    %13 = vector.multi_reduction <add>, %12, %cst [2] : vector<2x2x256xf32> to vector<2x2xf32>
    %14 = vector.shape_cast %13 : vector<2x2xf32> to vector<2x2x1xf32>
    %cst_15 = arith.constant dense<0.000000e+00> : vector<2x1xf32>
    %15 = vector.multi_reduction <add>, %14, %cst_15 [1] : vector<2x2x1xf32> to vector<2x1xf32>
    %16 = vector.shape_cast %15 : vector<2x1xf32> to vector<2x1x1xf32>
    %cst_16 = arith.constant 0.001953125 : f32
    %17 = vector.broadcast %cst_16 : f32 to vector<2x1x1xf32>
    %18 = arith.mulf %16, %17 : vector<2x1x1xf32>
    %19 = vector.broadcast %18 : vector<2x1x1xf32> to vector<2x2x256xf32>
    %20 = arith.subf %12, %19 : vector<2x2x256xf32>
    %21 = arith.mulf %20, %20 : vector<2x2x256xf32>
    %cst_17 = arith.constant dense<0.000000e+00> : vector<2x2xf32>
    %22 = vector.multi_reduction <add>, %21, %cst_17 [2] : vector<2x2x256xf32> to vector<2x2xf32>
    %23 = vector.shape_cast %22 : vector<2x2xf32> to vector<2x2x1xf32>
    %cst_18 = arith.constant dense<0.000000e+00> : vector<2x1xf32>
    %24 = vector.multi_reduction <add>, %23, %cst_18 [1] : vector<2x2x1xf32> to vector<2x1xf32>
    %25 = vector.shape_cast %24 : vector<2x1xf32> to vector<2x1x1xf32>
    %cst_19 = arith.constant 0.001953125 : f32
    %26 = vector.broadcast %cst_19 : f32 to vector<2x1x1xf32>
    %27 = arith.mulf %25, %26 : vector<2x1x1xf32>
    %cst_20 = arith.constant 9.99999974E-6 : f32
    %28 = vector.broadcast %cst_20 : f32 to vector<2x1x1xf32>
    %29 = arith.addf %27, %28 : vector<2x1x1xf32>
    %30 = math.rsqrt %29 : vector<2x1x1xf32>
    %31 = vector.shape_cast %2 : vector<4x1xf32> to vector<2x2x1xf32>
    %32 = vector.broadcast %30 : vector<2x1x1xf32> to vector<2x2x1xf32>
    %33 = arith.mulf %32, %31 : vector<2x2x1xf32>
    %34 = vector.broadcast %33 : vector<2x2x1xf32> to vector<2x2x256xf32>
    %35 = arith.mulf %20, %34 : vector<2x2x256xf32>
    %36 = vector.shape_cast %3 : vector<4x1xf32> to vector<2x2x1xf32>
    %37 = vector.broadcast %36 : vector<2x2x1xf32> to vector<2x2x256xf32>
    %38 = arith.addf %35, %37 : vector<2x2x256xf32>
    %39 = vector.shape_cast %38 : vector<2x2x256xf32> to vector<4x256xf32>
    %40 = arith.negf %39 : vector<4x256xf32>
    %41 = math.exp %40 : vector<4x256xf32>
    %cst_21 = arith.constant 1.000000e+00 : f32
    %42 = vector.broadcast %cst_21 : f32 to vector<4x256xf32>
    %43 = arith.addf %42, %41 : vector<4x256xf32>
    %44 = arith.divf %42, %43 : vector<4x256xf32>
    %45 = arith.mulf %39, %44 : vector<4x256xf32>
    %c0_22 = arith.constant 0 : index
    %c0_23 = arith.constant 0 : index
    %46 = vector.load %arg5[%c0_22, %c0_23] : memref<8x72xf32, #tpu.memory_space<vmem>>, vector<8x72xf32>
    %cst_24 = arith.constant 0.000000e+00 : f32
    %47 = vector.broadcast %cst_24 : f32 to vector<4x256xf32>
    %48 = tpu.concatenate %45, %47 in 0 : vector<4x256xf32>, vector<4x256xf32> -> vector<8x256xf32>
    %49 = tpu.iota {dimensions = array<i32: 1>} : vector<1x256xi32>
    %c15_i32 = arith.constant 15 : i32
    %50 = vector.broadcast %c15_i32 : i32 to vector<1x256xi32>
    %51 = arith.andi %49, %50 : vector<1x256xi32>
    %cst_25 = arith.constant 0.000000e+00 : f32
    %52 = vector.broadcast %cst_25 : f32 to vector<8x17xf32>
    %53 = vector.extract_strided_slice %48 {offsets = [0, 0], sizes = [8, 239], strides = [1, 1]} : vector<8x256xf32> to vector<8x239xf32>
    %54 = tpu.concatenate %52, %53 in 1 : vector<8x17xf32>, vector<8x239xf32> -> vector<8x256xf32>
    %c0_i32 = arith.constant 0 : i32
    %55 = vector.broadcast %c0_i32 : i32 to vector<1x256xi32>
    %56 = arith.cmpi eq, %51, %55 : vector<1x256xi32>
    %cst_26 = arith.constant 0.000000e+00 : f32
    %57 = vector.shape_cast %56 : vector<1x256xi1> to vector<1x256xi1>
    %58 = vector.broadcast %57 : vector<1x256xi1> to vector<8x256xi1>
    %59 = vector.broadcast %cst_26 : f32 to vector<8x256xf32>
    %60 = arith.select %58, %59, %54 : vector<8x256xi1>, vector<8x256xf32>
    %cst_27 = arith.constant 0.000000e+00 : f32
    %61 = vector.broadcast %cst_27 : f32 to vector<8x16xf32>
    %62 = vector.extract_strided_slice %48 {offsets = [0, 0], sizes = [8, 240], strides = [1, 1]} : vector<8x256xf32> to vector<8x240xf32>
    %63 = tpu.concatenate %61, %62 in 1 : vector<8x16xf32>, vector<8x240xf32> -> vector<8x256xf32>
    %cst_28 = arith.constant 0.000000e+00 : f32
    %64 = vector.broadcast %cst_28 : f32 to vector<8x15xf32>
    %65 = vector.extract_strided_slice %48 {offsets = [0, 0], sizes = [8, 241], strides = [1, 1]} : vector<8x256xf32> to vector<8x241xf32>
    %66 = tpu.concatenate %64, %65 in 1 : vector<8x15xf32>, vector<8x241xf32> -> vector<8x256xf32>
    %c15_i32_29 = arith.constant 15 : i32
    %67 = vector.broadcast %c15_i32_29 : i32 to vector<1x256xi32>
    %68 = arith.cmpi eq, %51, %67 : vector<1x256xi32>
    %cst_30 = arith.constant 0.000000e+00 : f32
    %69 = vector.shape_cast %68 : vector<1x256xi1> to vector<1x256xi1>
    %70 = vector.broadcast %69 : vector<1x256xi1> to vector<8x256xi1>
    %71 = vector.broadcast %cst_30 : f32 to vector<8x256xf32>
    %72 = arith.select %70, %71, %66 : vector<8x256xi1>, vector<8x256xf32>
    %cst_31 = arith.constant 0.000000e+00 : f32
    %73 = vector.broadcast %cst_31 : f32 to vector<8x1xf32>
    %74 = vector.extract_strided_slice %48 {offsets = [0, 0], sizes = [8, 255], strides = [1, 1]} : vector<8x256xf32> to vector<8x255xf32>
    %75 = tpu.concatenate %73, %74 in 1 : vector<8x1xf32>, vector<8x255xf32> -> vector<8x256xf32>
    %c0_i32_32 = arith.constant 0 : i32
    %76 = vector.broadcast %c0_i32_32 : i32 to vector<1x256xi32>
    %77 = arith.cmpi eq, %51, %76 : vector<1x256xi32>
    %cst_33 = arith.constant 0.000000e+00 : f32
    %78 = vector.shape_cast %77 : vector<1x256xi1> to vector<1x256xi1>
    %79 = vector.broadcast %78 : vector<1x256xi1> to vector<8x256xi1>
    %80 = vector.broadcast %cst_33 : f32 to vector<8x256xf32>
    %81 = arith.select %79, %80, %75 : vector<8x256xi1>, vector<8x256xf32>
    %82 = vector.extract_strided_slice %48 {offsets = [0, 1], sizes = [8, 255], strides = [1, 1]} : vector<8x256xf32> to vector<8x255xf32>
    %cst_34 = arith.constant 0.000000e+00 : f32
    %83 = vector.broadcast %cst_34 : f32 to vector<8x1xf32>
    %84 = tpu.concatenate %82, %83 in 1 : vector<8x255xf32>, vector<8x1xf32> -> vector<8x256xf32>
    %c15_i32_35 = arith.constant 15 : i32
    %85 = vector.broadcast %c15_i32_35 : i32 to vector<1x256xi32>
    %86 = arith.cmpi eq, %51, %85 : vector<1x256xi32>
    %cst_36 = arith.constant 0.000000e+00 : f32
    %87 = vector.shape_cast %86 : vector<1x256xi1> to vector<1x256xi1>
    %88 = vector.broadcast %87 : vector<1x256xi1> to vector<8x256xi1>
    %89 = vector.broadcast %cst_36 : f32 to vector<8x256xf32>
    %90 = arith.select %88, %89, %84 : vector<8x256xi1>, vector<8x256xf32>
    %91 = vector.extract_strided_slice %48 {offsets = [0, 15], sizes = [8, 241], strides = [1, 1]} : vector<8x256xf32> to vector<8x241xf32>
    %cst_37 = arith.constant 0.000000e+00 : f32
    %92 = vector.broadcast %cst_37 : f32 to vector<8x15xf32>
    %93 = tpu.concatenate %91, %92 in 1 : vector<8x241xf32>, vector<8x15xf32> -> vector<8x256xf32>
    %c0_i32_38 = arith.constant 0 : i32
    %94 = vector.broadcast %c0_i32_38 : i32 to vector<1x256xi32>
    %95 = arith.cmpi eq, %51, %94 : vector<1x256xi32>
    %cst_39 = arith.constant 0.000000e+00 : f32
    %96 = vector.shape_cast %95 : vector<1x256xi1> to vector<1x256xi1>
    %97 = vector.broadcast %96 : vector<1x256xi1> to vector<8x256xi1>
    %98 = vector.broadcast %cst_39 : f32 to vector<8x256xf32>
    %99 = arith.select %97, %98, %93 : vector<8x256xi1>, vector<8x256xf32>
    %100 = vector.extract_strided_slice %48 {offsets = [0, 16], sizes = [8, 240], strides = [1, 1]} : vector<8x256xf32> to vector<8x240xf32>
    %cst_40 = arith.constant 0.000000e+00 : f32
    %101 = vector.broadcast %cst_40 : f32 to vector<8x16xf32>
    %102 = tpu.concatenate %100, %101 in 1 : vector<8x240xf32>, vector<8x16xf32> -> vector<8x256xf32>
    %103 = vector.extract_strided_slice %48 {offsets = [0, 17], sizes = [8, 239], strides = [1, 1]} : vector<8x256xf32> to vector<8x239xf32>
    %cst_41 = arith.constant 0.000000e+00 : f32
    %104 = vector.broadcast %cst_41 : f32 to vector<8x17xf32>
    %105 = tpu.concatenate %103, %104 in 1 : vector<8x239xf32>, vector<8x17xf32> -> vector<8x256xf32>
    %c15_i32_42 = arith.constant 15 : i32
    %106 = vector.broadcast %c15_i32_42 : i32 to vector<1x256xi32>
    %107 = arith.cmpi eq, %51, %106 : vector<1x256xi32>
    %cst_43 = arith.constant 0.000000e+00 : f32
    %108 = vector.shape_cast %107 : vector<1x256xi1> to vector<1x256xi1>
    %109 = vector.broadcast %108 : vector<1x256xi1> to vector<8x256xi1>
    %110 = vector.broadcast %cst_43 : f32 to vector<8x256xf32>
    %111 = arith.select %109, %110, %105 : vector<8x256xi1>, vector<8x256xf32>
    %112 = tpu.concatenate %60, %63, %72, %81, %48, %90, %99, %102, %111 in 0 : vector<8x256xf32>, vector<8x256xf32>, vector<8x256xf32>, vector<8x256xf32>, vector<8x256xf32>, vector<8x256xf32>, vector<8x256xf32>, vector<8x256xf32>, vector<8x256xf32> -> vector<72x256xf32>
    %cst_44 = arith.constant dense<0.000000e+00> : vector<8x256xf32>
    %113 = tpu.matmul %46, %112, %cst_44 {dimension_numbers = #tpu.dot_dimension_numbers<[1], [0], [0], [1], [0, 0, 1, 1], [], []>} : vector<8x72xf32>, vector<72x256xf32>, vector<8x256xf32> -> vector<8x256xf32>
    %114 = vector.broadcast %4 : vector<8x1xf32> to vector<8x256xf32>
    %115 = arith.addf %113, %114 : vector<8x256xf32>
    %c0_45 = arith.constant 0 : index
    %c0_46 = arith.constant 0 : index
    %c0_47 = arith.constant 0 : index
    %116 = vector.load %arg2[%c0_45, %c0_46, %c0_47] : memref<1x8x1xf32, #tpu.memory_space<vmem>>, vector<1x8x1xf32>
    %117 = vector.shape_cast %116 : vector<1x8x1xf32> to vector<8x1xf32>
    %cst_48 = arith.constant 1.000000e+00 : f32
    %118 = vector.broadcast %cst_48 : f32 to vector<8x1xf32>
    %119 = arith.addf %118, %117 : vector<8x1xf32>
    %120 = vector.broadcast %119 : vector<8x1xf32> to vector<8x256xf32>
    %121 = arith.mulf %115, %120 : vector<8x256xf32>
    %122 = vector.broadcast %117 : vector<8x1xf32> to vector<8x256xf32>
    %123 = arith.addf %121, %122 : vector<8x256xf32>
    %124 = vector.shape_cast %123 : vector<8x256xf32> to vector<2x4x256xf32>
    %cst_49 = arith.constant dense<0.000000e+00> : vector<2x4xf32>
    %125 = vector.multi_reduction <add>, %124, %cst_49 [2] : vector<2x4x256xf32> to vector<2x4xf32>
    %126 = vector.shape_cast %125 : vector<2x4xf32> to vector<2x4x1xf32>
    %cst_50 = arith.constant dense<0.000000e+00> : vector<2x1xf32>
    %127 = vector.multi_reduction <add>, %126, %cst_50 [1] : vector<2x4x1xf32> to vector<2x1xf32>
    %128 = vector.shape_cast %127 : vector<2x1xf32> to vector<2x1x1xf32>
    %cst_51 = arith.constant 9.765625E-4 : f32
    %129 = vector.broadcast %cst_51 : f32 to vector<2x1x1xf32>
    %130 = arith.mulf %128, %129 : vector<2x1x1xf32>
    %131 = vector.broadcast %130 : vector<2x1x1xf32> to vector<2x4x256xf32>
    %132 = arith.subf %124, %131 : vector<2x4x256xf32>
    %133 = arith.mulf %132, %132 : vector<2x4x256xf32>
    %cst_52 = arith.constant dense<0.000000e+00> : vector<2x4xf32>
    %134 = vector.multi_reduction <add>, %133, %cst_52 [2] : vector<2x4x256xf32> to vector<2x4xf32>
    %135 = vector.shape_cast %134 : vector<2x4xf32> to vector<2x4x1xf32>
    %cst_53 = arith.constant dense<0.000000e+00> : vector<2x1xf32>
    %136 = vector.multi_reduction <add>, %135, %cst_53 [1] : vector<2x4x1xf32> to vector<2x1xf32>
    %137 = vector.shape_cast %136 : vector<2x1xf32> to vector<2x1x1xf32>
    %cst_54 = arith.constant 9.765625E-4 : f32
    %138 = vector.broadcast %cst_54 : f32 to vector<2x1x1xf32>
    %139 = arith.mulf %137, %138 : vector<2x1x1xf32>
    %cst_55 = arith.constant 9.99999974E-6 : f32
    %140 = vector.broadcast %cst_55 : f32 to vector<2x1x1xf32>
    %141 = arith.addf %139, %140 : vector<2x1x1xf32>
    %142 = math.rsqrt %141 : vector<2x1x1xf32>
    %143 = vector.shape_cast %5 : vector<8x1xf32> to vector<2x4x1xf32>
    %144 = vector.broadcast %142 : vector<2x1x1xf32> to vector<2x4x1xf32>
    %145 = arith.mulf %144, %143 : vector<2x4x1xf32>
    %146 = vector.broadcast %145 : vector<2x4x1xf32> to vector<2x4x256xf32>
    %147 = arith.mulf %132, %146 : vector<2x4x256xf32>
    %148 = vector.shape_cast %6 : vector<8x1xf32> to vector<2x4x1xf32>
    %149 = vector.broadcast %148 : vector<2x4x1xf32> to vector<2x4x256xf32>
    %150 = arith.addf %147, %149 : vector<2x4x256xf32>
    %151 = vector.shape_cast %150 : vector<2x4x256xf32> to vector<8x256xf32>
    %152 = arith.negf %151 : vector<8x256xf32>
    %153 = math.exp %152 : vector<8x256xf32>
    %cst_56 = arith.constant 1.000000e+00 : f32
    %154 = vector.broadcast %cst_56 : f32 to vector<8x256xf32>
    %155 = arith.addf %154, %153 : vector<8x256xf32>
    %156 = arith.divf %154, %155 : vector<8x256xf32>
    %157 = arith.mulf %151, %156 : vector<8x256xf32>
    %c0_57 = arith.constant 0 : index
    %c0_58 = arith.constant 0 : index
    %158 = vector.load %arg6[%c0_57, %c0_58] : memref<8x72xf32, #tpu.memory_space<vmem>>, vector<8x72xf32>
    %159 = tpu.iota {dimensions = array<i32: 1>} : vector<1x256xi32>
    %c15_i32_59 = arith.constant 15 : i32
    %160 = vector.broadcast %c15_i32_59 : i32 to vector<1x256xi32>
    %161 = arith.andi %159, %160 : vector<1x256xi32>
    %cst_60 = arith.constant 0.000000e+00 : f32
    %162 = vector.broadcast %cst_60 : f32 to vector<8x17xf32>
    %163 = vector.extract_strided_slice %157 {offsets = [0, 0], sizes = [8, 239], strides = [1, 1]} : vector<8x256xf32> to vector<8x239xf32>
    %164 = tpu.concatenate %162, %163 in 1 : vector<8x17xf32>, vector<8x239xf32> -> vector<8x256xf32>
    %c0_i32_61 = arith.constant 0 : i32
    %165 = vector.broadcast %c0_i32_61 : i32 to vector<1x256xi32>
    %166 = arith.cmpi eq, %161, %165 : vector<1x256xi32>
    %cst_62 = arith.constant 0.000000e+00 : f32
    %167 = vector.shape_cast %166 : vector<1x256xi1> to vector<1x256xi1>
    %168 = vector.broadcast %167 : vector<1x256xi1> to vector<8x256xi1>
    %169 = vector.broadcast %cst_62 : f32 to vector<8x256xf32>
    %170 = arith.select %168, %169, %164 : vector<8x256xi1>, vector<8x256xf32>
    %cst_63 = arith.constant 0.000000e+00 : f32
    %171 = vector.broadcast %cst_63 : f32 to vector<8x16xf32>
    %172 = vector.extract_strided_slice %157 {offsets = [0, 0], sizes = [8, 240], strides = [1, 1]} : vector<8x256xf32> to vector<8x240xf32>
    %173 = tpu.concatenate %171, %172 in 1 : vector<8x16xf32>, vector<8x240xf32> -> vector<8x256xf32>
    %cst_64 = arith.constant 0.000000e+00 : f32
    %174 = vector.broadcast %cst_64 : f32 to vector<8x15xf32>
    %175 = vector.extract_strided_slice %157 {offsets = [0, 0], sizes = [8, 241], strides = [1, 1]} : vector<8x256xf32> to vector<8x241xf32>
    %176 = tpu.concatenate %174, %175 in 1 : vector<8x15xf32>, vector<8x241xf32> -> vector<8x256xf32>
    %c15_i32_65 = arith.constant 15 : i32
    %177 = vector.broadcast %c15_i32_65 : i32 to vector<1x256xi32>
    %178 = arith.cmpi eq, %161, %177 : vector<1x256xi32>
    %cst_66 = arith.constant 0.000000e+00 : f32
    %179 = vector.shape_cast %178 : vector<1x256xi1> to vector<1x256xi1>
    %180 = vector.broadcast %179 : vector<1x256xi1> to vector<8x256xi1>
    %181 = vector.broadcast %cst_66 : f32 to vector<8x256xf32>
    %182 = arith.select %180, %181, %176 : vector<8x256xi1>, vector<8x256xf32>
    %cst_67 = arith.constant 0.000000e+00 : f32
    %183 = vector.broadcast %cst_67 : f32 to vector<8x1xf32>
    %184 = vector.extract_strided_slice %157 {offsets = [0, 0], sizes = [8, 255], strides = [1, 1]} : vector<8x256xf32> to vector<8x255xf32>
    %185 = tpu.concatenate %183, %184 in 1 : vector<8x1xf32>, vector<8x255xf32> -> vector<8x256xf32>
    %c0_i32_68 = arith.constant 0 : i32
    %186 = vector.broadcast %c0_i32_68 : i32 to vector<1x256xi32>
    %187 = arith.cmpi eq, %161, %186 : vector<1x256xi32>
    %cst_69 = arith.constant 0.000000e+00 : f32
    %188 = vector.shape_cast %187 : vector<1x256xi1> to vector<1x256xi1>
    %189 = vector.broadcast %188 : vector<1x256xi1> to vector<8x256xi1>
    %190 = vector.broadcast %cst_69 : f32 to vector<8x256xf32>
    %191 = arith.select %189, %190, %185 : vector<8x256xi1>, vector<8x256xf32>
    %192 = vector.extract_strided_slice %157 {offsets = [0, 1], sizes = [8, 255], strides = [1, 1]} : vector<8x256xf32> to vector<8x255xf32>
    %cst_70 = arith.constant 0.000000e+00 : f32
    %193 = vector.broadcast %cst_70 : f32 to vector<8x1xf32>
    %194 = tpu.concatenate %192, %193 in 1 : vector<8x255xf32>, vector<8x1xf32> -> vector<8x256xf32>
    %c15_i32_71 = arith.constant 15 : i32
    %195 = vector.broadcast %c15_i32_71 : i32 to vector<1x256xi32>
    %196 = arith.cmpi eq, %161, %195 : vector<1x256xi32>
    %cst_72 = arith.constant 0.000000e+00 : f32
    %197 = vector.shape_cast %196 : vector<1x256xi1> to vector<1x256xi1>
    %198 = vector.broadcast %197 : vector<1x256xi1> to vector<8x256xi1>
    %199 = vector.broadcast %cst_72 : f32 to vector<8x256xf32>
    %200 = arith.select %198, %199, %194 : vector<8x256xi1>, vector<8x256xf32>
    %201 = vector.extract_strided_slice %157 {offsets = [0, 15], sizes = [8, 241], strides = [1, 1]} : vector<8x256xf32> to vector<8x241xf32>
    %cst_73 = arith.constant 0.000000e+00 : f32
    %202 = vector.broadcast %cst_73 : f32 to vector<8x15xf32>
    %203 = tpu.concatenate %201, %202 in 1 : vector<8x241xf32>, vector<8x15xf32> -> vector<8x256xf32>
    %c0_i32_74 = arith.constant 0 : i32
    %204 = vector.broadcast %c0_i32_74 : i32 to vector<1x256xi32>
    %205 = arith.cmpi eq, %161, %204 : vector<1x256xi32>
    %cst_75 = arith.constant 0.000000e+00 : f32
    %206 = vector.shape_cast %205 : vector<1x256xi1> to vector<1x256xi1>
    %207 = vector.broadcast %206 : vector<1x256xi1> to vector<8x256xi1>
    %208 = vector.broadcast %cst_75 : f32 to vector<8x256xf32>
    %209 = arith.select %207, %208, %203 : vector<8x256xi1>, vector<8x256xf32>
    %210 = vector.extract_strided_slice %157 {offsets = [0, 16], sizes = [8, 240], strides = [1, 1]} : vector<8x256xf32> to vector<8x240xf32>
    %cst_76 = arith.constant 0.000000e+00 : f32
    %211 = vector.broadcast %cst_76 : f32 to vector<8x16xf32>
    %212 = tpu.concatenate %210, %211 in 1 : vector<8x240xf32>, vector<8x16xf32> -> vector<8x256xf32>
    %213 = vector.extract_strided_slice %157 {offsets = [0, 17], sizes = [8, 239], strides = [1, 1]} : vector<8x256xf32> to vector<8x239xf32>
    %cst_77 = arith.constant 0.000000e+00 : f32
    %214 = vector.broadcast %cst_77 : f32 to vector<8x17xf32>
    %215 = tpu.concatenate %213, %214 in 1 : vector<8x239xf32>, vector<8x17xf32> -> vector<8x256xf32>
    %c15_i32_78 = arith.constant 15 : i32
    %216 = vector.broadcast %c15_i32_78 : i32 to vector<1x256xi32>
    %217 = arith.cmpi eq, %161, %216 : vector<1x256xi32>
    %cst_79 = arith.constant 0.000000e+00 : f32
    %218 = vector.shape_cast %217 : vector<1x256xi1> to vector<1x256xi1>
    %219 = vector.broadcast %218 : vector<1x256xi1> to vector<8x256xi1>
    %220 = vector.broadcast %cst_79 : f32 to vector<8x256xf32>
    %221 = arith.select %219, %220, %215 : vector<8x256xi1>, vector<8x256xf32>
    %222 = tpu.concatenate %170, %173, %182, %191, %157, %200, %209, %212, %221 in 0 : vector<8x256xf32>, vector<8x256xf32>, vector<8x256xf32>, vector<8x256xf32>, vector<8x256xf32>, vector<8x256xf32>, vector<8x256xf32>, vector<8x256xf32>, vector<8x256xf32> -> vector<72x256xf32>
    %cst_80 = arith.constant dense<0.000000e+00> : vector<8x256xf32>
    %223 = tpu.matmul %158, %222, %cst_80 {dimension_numbers = #tpu.dot_dimension_numbers<[1], [0], [0], [1], [0, 0, 1, 1], [], []>} : vector<8x72xf32>, vector<72x256xf32>, vector<8x256xf32> -> vector<8x256xf32>
    %224 = vector.broadcast %7 : vector<8x1xf32> to vector<8x256xf32>
    %225 = arith.addf %223, %224 : vector<8x256xf32>
    %c0_81 = arith.constant 0 : index
    %c0_82 = arith.constant 0 : index
    %226 = vector.load %arg7[%c0_81, %c0_82] : memref<8x4xf32, #tpu.memory_space<vmem>>, vector<8x4xf32>
    %cst_83 = arith.constant dense<0.000000e+00> : vector<8x256xf32>
    %227 = tpu.matmul %226, %1, %cst_83 {dimension_numbers = #tpu.dot_dimension_numbers<[1], [0], [0], [1], [0, 0, 1, 1], [], []>} : vector<8x4xf32>, vector<4x256xf32>, vector<8x256xf32> -> vector<8x256xf32>
    %228 = vector.broadcast %8 : vector<8x1xf32> to vector<8x256xf32>
    %229 = arith.addf %227, %228 : vector<8x256xf32>
    %230 = arith.addf %225, %229 : vector<8x256xf32>
    %231 = vector.shape_cast %230 : vector<8x256xf32> to vector<2x4x256xf32>
    %cst_84 = arith.constant dense<0.000000e+00> : vector<2x4xf32>
    %232 = vector.multi_reduction <add>, %231, %cst_84 [2] : vector<2x4x256xf32> to vector<2x4xf32>
    %233 = vector.shape_cast %232 : vector<2x4xf32> to vector<2x4x1xf32>
    %cst_85 = arith.constant dense<0.000000e+00> : vector<2x1xf32>
    %234 = vector.multi_reduction <add>, %233, %cst_85 [1] : vector<2x4x1xf32> to vector<2x1xf32>
    %235 = vector.shape_cast %234 : vector<2x1xf32> to vector<2x1x1xf32>
    %cst_86 = arith.constant 9.765625E-4 : f32
    %236 = vector.broadcast %cst_86 : f32 to vector<2x1x1xf32>
    %237 = arith.mulf %235, %236 : vector<2x1x1xf32>
    %238 = vector.broadcast %237 : vector<2x1x1xf32> to vector<2x4x256xf32>
    %239 = arith.subf %231, %238 : vector<2x4x256xf32>
    %240 = arith.mulf %239, %239 : vector<2x4x256xf32>
    %cst_87 = arith.constant dense<0.000000e+00> : vector<2x4xf32>
    %241 = vector.multi_reduction <add>, %240, %cst_87 [2] : vector<2x4x256xf32> to vector<2x4xf32>
    %242 = vector.shape_cast %241 : vector<2x4xf32> to vector<2x4x1xf32>
    %cst_88 = arith.constant dense<0.000000e+00> : vector<2x1xf32>
    %243 = vector.multi_reduction <add>, %242, %cst_88 [1] : vector<2x4x1xf32> to vector<2x1xf32>
    %244 = vector.shape_cast %243 : vector<2x1xf32> to vector<2x1x1xf32>
    %cst_89 = arith.constant 9.765625E-4 : f32
    %245 = vector.broadcast %cst_89 : f32 to vector<2x1x1xf32>
    %246 = arith.mulf %244, %245 : vector<2x1x1xf32>
    %cst_90 = arith.constant 9.99999974E-6 : f32
    %247 = vector.broadcast %cst_90 : f32 to vector<2x1x1xf32>
    %248 = arith.addf %246, %247 : vector<2x1x1xf32>
    %249 = math.rsqrt %248 : vector<2x1x1xf32>
    %250 = vector.shape_cast %9 : vector<8x1xf32> to vector<2x4x1xf32>
    %251 = vector.broadcast %249 : vector<2x1x1xf32> to vector<2x4x1xf32>
    %252 = arith.mulf %251, %250 : vector<2x4x1xf32>
    %253 = vector.broadcast %252 : vector<2x4x1xf32> to vector<2x4x256xf32>
    %254 = arith.mulf %239, %253 : vector<2x4x256xf32>
    %255 = vector.shape_cast %10 : vector<8x1xf32> to vector<2x4x1xf32>
    %256 = vector.broadcast %255 : vector<2x4x1xf32> to vector<2x4x256xf32>
    %257 = arith.addf %254, %256 : vector<2x4x256xf32>
    %258 = vector.shape_cast %257 : vector<2x4x256xf32> to vector<8x256xf32>
    %c0_91 = arith.constant 0 : index
    %c0_92 = arith.constant 0 : index
    %259 = vector.load %arg8[%c0_91, %c0_92] : memref<8x8xf32, #tpu.memory_space<vmem>>, vector<8x8xf32>
    %cst_93 = arith.constant dense<0.000000e+00> : vector<8x256xf32>
    %260 = tpu.matmul %259, %258, %cst_93 {dimension_numbers = #tpu.dot_dimension_numbers<[1], [0], [0], [1], [0, 0, 1, 1], [], []>} : vector<8x8xf32>, vector<8x256xf32>, vector<8x256xf32> -> vector<8x256xf32>
    %c0_94 = arith.constant 0 : index
    %c0_95 = arith.constant 0 : index
    %261 = vector.load %arg9[%c0_94, %c0_95] : memref<8x8xf32, #tpu.memory_space<vmem>>, vector<8x8xf32>
    %cst_96 = arith.constant dense<0.000000e+00> : vector<8x256xf32>
    %262 = tpu.matmul %261, %258, %cst_96 {dimension_numbers = #tpu.dot_dimension_numbers<[1], [0], [0], [1], [0, 0, 1, 1], [], []>} : vector<8x8xf32>, vector<8x256xf32>, vector<8x256xf32> -> vector<8x256xf32>
    %c0_97 = arith.constant 0 : index
    %c0_98 = arith.constant 0 : index
    %263 = vector.load %arg10[%c0_97, %c0_98] : memref<8x8xf32, #tpu.memory_space<vmem>>, vector<8x8xf32>
    %cst_99 = arith.constant dense<0.000000e+00> : vector<8x256xf32>
    %264 = tpu.matmul %263, %258, %cst_99 {dimension_numbers = #tpu.dot_dimension_numbers<[1], [0], [0], [1], [0, 0, 1, 1], [], []>} : vector<8x8xf32>, vector<8x256xf32>, vector<8x256xf32> -> vector<8x256xf32>
    %cst_100 = arith.constant dense<0.000000e+00> : vector<256x256xf32>
    %265 = tpu.matmul %260, %262, %cst_100 {dimension_numbers = #tpu.dot_dimension_numbers<[0], [0], [1], [1], [0, 1, 1, 1], [], []>} : vector<8x256xf32>, vector<8x256xf32>, vector<256x256xf32> -> vector<256x256xf32>
    %cst_101 = arith.constant 0.353553385 : f32
    %266 = vector.broadcast %cst_101 : f32 to vector<256x256xf32>
    %267 = arith.mulf %265, %266 : vector<256x256xf32>
    %cst_102 = arith.constant dense<0xFF800000> : vector<256xf32>
    %268 = vector.multi_reduction <maximumf>, %267, %cst_102 [1] : vector<256x256xf32> to vector<256xf32>
    %269 = vector.shape_cast %268 : vector<256xf32> to vector<256x1xf32>
    %270 = vector.broadcast %269 : vector<256x1xf32> to vector<256x256xf32>
    %271 = arith.subf %267, %270 : vector<256x256xf32>
    %272 = math.exp %271 : vector<256x256xf32>
    %cst_103 = arith.constant dense<0.000000e+00> : vector<256xf32>
    %273 = vector.multi_reduction <add>, %272, %cst_103 [1] : vector<256x256xf32> to vector<256xf32>
    %274 = vector.shape_cast %273 : vector<256xf32> to vector<256x1xf32>
    %275 = vector.broadcast %274 : vector<256x1xf32> to vector<256x256xf32>
    %276 = arith.divf %272, %275 : vector<256x256xf32>
    %cst_104 = arith.constant dense<0.000000e+00> : vector<8x256xf32>
    %277 = tpu.matmul %264, %276, %cst_104 {dimension_numbers = #tpu.dot_dimension_numbers<[1], [1], [0], [0], [0, 0, 1, 0], [], []>} : vector<8x256xf32>, vector<256x256xf32>, vector<8x256xf32> -> vector<8x256xf32>
    %c0_105 = arith.constant 0 : index
    %c0_106 = arith.constant 0 : index
    %278 = vector.load %arg11[%c0_105, %c0_106] : memref<8x8xf32, #tpu.memory_space<vmem>>, vector<8x8xf32>
    %cst_107 = arith.constant dense<0.000000e+00> : vector<8x256xf32>
    %279 = tpu.matmul %278, %277, %cst_107 {dimension_numbers = #tpu.dot_dimension_numbers<[1], [0], [0], [1], [0, 0, 1, 1], [], []>} : vector<8x8xf32>, vector<8x256xf32>, vector<8x256xf32> -> vector<8x256xf32>
    %280 = vector.broadcast %11 : vector<8x1xf32> to vector<8x256xf32>
    %281 = arith.addf %279, %280 : vector<8x256xf32>
    %282 = arith.addf %281, %230 : vector<8x256xf32>
    %c0_108 = arith.constant 0 : index
    %c0_109 = arith.constant 0 : index
    %c0_110 = arith.constant 0 : index
    %283 = vector.load %arg12[%c0_108, %c0_109, %c0_110] : memref<1x8x256xf32, #tpu.memory_space<vmem>>, vector<1x8x256xf32>
    %284 = vector.shape_cast %283 : vector<1x8x256xf32> to vector<8x256xf32>
    %285 = vector.shape_cast %282 : vector<8x256xf32> to vector<1x8x256xf32>
    tpu.vector_store %arg12[%c0_108, %c0_109, %c0_110], %285 {strides = array<i32>} : memref<1x8x256xf32, #tpu.memory_space<vmem>>, vector<1x8x256xf32>,
    return
  }
  func.func @transform_0(%arg0: i32) -> (i32, i32, i32) {
    %c0_i32 = arith.constant 0 : i32
    %c0_i32_0 = arith.constant 0 : i32
    %c0_i32_1 = arith.constant 0 : i32
    return %arg0, %c0_i32, %c0_i32_0 : i32, i32, i32
  }
  func.func @transform_1(%arg0: i32) -> (i32, i32, i32) {
    %c0_i32 = arith.constant 0 : i32
    %c0_i32_0 = arith.constant 0 : i32
    %c0_i32_1 = arith.constant 0 : i32
    return %arg0, %c0_i32, %c0_i32_0 : i32, i32, i32
  }
  func.func @transform_2(%arg0: i32) -> (i32, i32) {
    %c0_i32 = arith.constant 0 : i32
    %c0_i32_0 = arith.constant 0 : i32
    %c0_i32_1 = arith.constant 0 : i32
    return %c0_i32, %c0_i32_0 : i32, i32
  }
  func.func @transform_3(%arg0: i32) -> (i32, i32) {
    %c0_i32 = arith.constant 0 : i32
    %c0_i32_0 = arith.constant 0 : i32
    %c0_i32_1 = arith.constant 0 : i32
    return %c0_i32, %c0_i32_0 : i32, i32
  }
  func.func @transform_4(%arg0: i32) -> (i32, i32) {
    %c0_i32 = arith.constant 0 : i32
    %c0_i32_0 = arith.constant 0 : i32
    %c0_i32_1 = arith.constant 0 : i32
    return %c0_i32, %c0_i32_0 : i32, i32
  }
  func.func @transform_5(%arg0: i32) -> (i32, i32) {
    %c0_i32 = arith.constant 0 : i32
    %c0_i32_0 = arith.constant 0 : i32
    %c0_i32_1 = arith.constant 0 : i32
    return %c0_i32, %c0_i32_0 : i32, i32
  }
  func.func @transform_6(%arg0: i32) -> (i32, i32) {
    %c0_i32 = arith.constant 0 : i32
    %c0_i32_0 = arith.constant 0 : i32
    %c0_i32_1 = arith.constant 0 : i32
    return %c0_i32, %c0_i32_0 : i32, i32
  }
  func.func @transform_7(%arg0: i32) -> (i32, i32) {
    %c0_i32 = arith.constant 0 : i32
    %c0_i32_0 = arith.constant 0 : i32
    %c0_i32_1 = arith.constant 0 : i32
    return %c0_i32, %c0_i32_0 : i32, i32
  }
  func.func @transform_8(%arg0: i32) -> (i32, i32) {
    %c0_i32 = arith.constant 0 : i32
    %c0_i32_0 = arith.constant 0 : i32
    %c0_i32_1 = arith.constant 0 : i32
    return %c0_i32, %c0_i32_0 : i32, i32
  }
  func.func @transform_9(%arg0: i32) -> (i32, i32) {
    %c0_i32 = arith.constant 0 : i32
    %c0_i32_0 = arith.constant 0 : i32
    %c0_i32_1 = arith.constant 0 : i32
    return %c0_i32, %c0_i32_0 : i32, i32
  }
  func.func @transform_10(%arg0: i32) -> (i32, i32) {
    %c0_i32 = arith.constant 0 : i32
    %c0_i32_0 = arith.constant 0 : i32
    %c0_i32_1 = arith.constant 0 : i32
    return %c0_i32, %c0_i32_0 : i32, i32
  }
  func.func @transform_11(%arg0: i32) -> (i32, i32, i32) {
    %c0_i32 = arith.constant 0 : i32
    %c0_i32_0 = arith.constant 0 : i32
    %c0_i32_1 = arith.constant 0 : i32
    return %arg0, %c0_i32, %c0_i32_0 : i32, i32, i32
  }
}

</mosaic_0001>

<llo_original>
// kernel: tpu_custom_call.1
$region0: #{tpu_custom_call.1}
  #allocation0 [shape = 'u32[]', space=smem, size = 0x4, offset = 0x4, fixed_abs, tag = 'smem constant byte address 0x4 - core index']
  #allocation1 [shape = 'u32[72,128]{1,0:T(1,128)}', space=vmem, size = 0x9000, scoped, tag = 'internal scratch']
  %s0 = inlined_call_operand.vmem [shape: f32[2,4,256], index: 0, kind: input, shape index: {}]
  %s1 = inlined_call_operand.vmem [shape: f32[2,8,1], index: 1, kind: input, shape index: {}]
  %s2 = inlined_call_operand.vmem [shape: f32[4,2], index: 2, kind: input, shape index: {}]
  %s3 = inlined_call_operand.vmem [shape: f32[8,8], index: 3, kind: input, shape index: {}]
  %s4 = inlined_call_operand.hbm [shape: f32[8,72], index: 4, kind: input, shape index: {}]
  %s5 = inlined_call_operand.hbm [shape: f32[8,72], index: 5, kind: input, shape index: {}]
  %s6 = inlined_call_operand.vmem [shape: f32[8,4], index: 6, kind: input, shape index: {}]
  %s7 = inlined_call_operand.vmem [shape: f32[8,8], index: 7, kind: input, shape index: {}]
  %s8 = inlined_call_operand.hbm [shape: f32[8,8], index: 8, kind: input, shape index: {}]
  %s9 = inlined_call_operand.hbm [shape: f32[8,8], index: 9, kind: input, shape index: {}]
  %s10 = inlined_call_operand.hbm [shape: f32[8,8], index: 10, kind: input, shape index: {}]
  %s11 = inlined_call_operand.hbm [shape: f32[2,8,256], index: 11, kind: output, shape index: {}]
  %s12 = sld [smem:[#allocation0]]
  $region97: #{tpu_custom_call.1} parent=0
    _
  %s14 = ssub.s32 1, %s12
  %s15 = scalar_select 0, %s14, %s12
  $region1: #{tpu_custom_call.1} parent=0
    #allocation2 [shape = 'u8[4096]{0}', space=vmem, size = 0x1000, scoped, tag = 'input window, operand 4, single buffered']
    #allocation3 [shape = 's32[2]{0}', space=sflag, size = 0x8, scoped, tag = 'scoped memory for tpu_custom_call.1']
    #allocation4 [shape = 's32[2]{0}', space=sflag, size = 0x8, scoped, tag = 'scoped memory for tpu_custom_call.1']
    #allocation5 [shape = 'u8[4096]{0}', space=vmem, size = 0x1000, scoped, tag = 'input window, operand 5, single buffered']
    #allocation6 [shape = 's32[1]{0}', space=sflag, size = 0x4, scoped, tag = 'scoped memory for tpu_custom_call.1']
    #allocation7 [shape = 'u8[4096]{0}', space=vmem, size = 0x1000, scoped, tag = 'input window, operand 8, single buffered']
    #allocation8 [shape = 'u8[4096]{0}', space=vmem, size = 0x1000, scoped, tag = 'input window, operand 9, single buffered']
    #allocation9 [shape = 's32[1]{0}', space=sflag, size = 0x4, scoped, tag = 'scoped memory for tpu_custom_call.1']
    #allocation10 [shape = 'u8[4096]{0}', space=vmem, size = 0x1000, scoped, tag = 'input window, operand 10, single buffered']
    #allocation11 [shape = 'u8[16384]{0}', space=vmem, size = 0x4000, scoped, tag = 'output window, operand 0']
    %16 = vsyncpa [#allocation3], 0
    %17 = vsyncpa [#allocation6], 0
    %18 = vsyncpa [#allocation9], 0
    %19 = vsyncpa [#allocation4], 0
    %s20 = scalar_lea.sflag [#allocation4], 1
    %21 = vsyncpa %s20, 0
    loop: start=0, step=1, limit=4
    $region2: #{tpu_custom_call.1} parent=1 // loop_pre_header
      _
    $region3: #{tpu_custom_call.1} parent=1 // loop_header
      %s23 = sphi 0, %s27
      %p24 = scmp.ge.s32.totalorder %s23, 4
      %s33 = sphi 0, %s35
      %s36 = sphi 0, %s33
      %s37 = sphi 0, %s36
      %s53 = sphi 0, %s37
      %s59 = sphi 0, %s61
      %s62 = sphi 0, %s59
      %s63 = sphi 0, %s62
      %s79 = sphi 0, %s63
      %s83 = sphi 0, %s83
      %s85 = sphi 0, %s83
      %s86 = sphi 0, %s85
      %s100 = sphi 0, %s86
      %s104 = sphi 0, %s104
      %s106 = sphi 0, %s104
      %s107 = sphi 0, %s106
      %s121 = sphi 0, %s107
      %s125 = sphi 0, %s125
      %s127 = sphi 0, %s125
      %s128 = sphi 0, %s127
      %s142 = sphi 0, %s128
      %s146 = sphi 0, %s146
      %s148 = sphi 0, %s146
      %s149 = sphi 0, %s148
      %s163 = sphi 0, %s149
      %s167 = sphi 0, %s167
      %s169 = sphi 0, %s167
      %s170 = sphi 0, %s169
      %s184 = sphi 0, %s170
      %s188 = sphi 0, %s188
      %s190 = sphi 0, %s188
      %s191 = sphi 0, %s190
      %s205 = sphi 0, %s191
      %s209 = sphi 0, %s209
      %s211 = sphi 0, %s209
      %s212 = sphi 0, %s211
      %s226 = sphi 0, %s212
      %s230 = sphi 0, %s230
      %s232 = sphi 0, %s230
      %s233 = sphi 0, %s232
      %s247 = sphi 0, %s233
      %s251 = sphi 0, %s251
      %s253 = sphi 0, %s251
      %s254 = sphi 0, %s253
      %s268 = sphi 0, %s254
      %s274 = sphi 0, %s276
      %s277 = sphi 0, %s274
      %s278 = sphi 0, %s277
      %s294 = sphi 0, %s278
    $region4: #{tpu_custom_call.1} parent=1 // loop_header_branch
      %26 = sbr.rel (%p24) target = $region8
    $region5: #{tpu_custom_call.1} parent=1 // loop_body
      %s28 = ssub.s32 %s23, 1
      %s29 = ssub.s32 %s23, 2
      %s30 = sadd.s32 %s23, 1
      %s31 = ssub.s32 %s23, %s30
      %p32 = scmp.eq.s32.totalorder %s31, 0
      %s34 = sadd.s32 %s33, 1
      %s35 = scalar_select %p32, %s33, %s34
      %p38 = pneg %p32
      %p39 = scmp.eq.s32.totalorder %s23, 1
      %p40 = por %p38, %p39
      %p41 = scmp.ne.s32.totalorder %s33, %s36
      %p42 = scmp.eq.s32.totalorder %s23, 0
      %p43 = por %p41, %p42
      %p44 = scmp.ne.s32.totalorder %s33, %s36
      %p45 = scmp.eq.s32.totalorder %s28, 1
      %p46 = por %p44, %p45
      %p47 = scmp.ne.s32.totalorder %s36, %s37
      %p48 = scmp.eq.s32.totalorder %s28, 0
      %p49 = por %p47, %p48
      %p50 = scmp.ne.s32.totalorder %s36, %s37
      %p51 = scmp.eq.s32.totalorder %s29, 1
      %p52 = por %p50, %p51
      %p54 = scmp.ne.s32.totalorder %s37, %s53
      %p55 = scmp.eq.s32.totalorder %s29, 0
      %p56 = por %p54, %p55
      %s57 = ssub.s32 %s23, %s30
      %p58 = scmp.eq.s32.totalorder %s57, 0
      %s60 = sadd.s32 %s59, 1
      %s61 = scalar_select %p58, %s59, %s60
      %p64 = pneg %p58
      %p65 = scmp.eq.s32.totalorder %s23, 1
      %p66 = por %p64, %p65
      %p67 = scmp.ne.s32.totalorder %s59, %s62
      %p68 = scmp.eq.s32.totalorder %s23, 0
      %p69 = por %p67, %p68
      %p70 = scmp.ne.s32.totalorder %s59, %s62
      %p71 = scmp.eq.s32.totalorder %s28, 1
      %p72 = por %p70, %p71
      %p73 = scmp.ne.s32.totalorder %s62, %s63
      %p74 = scmp.eq.s32.totalorder %s28, 0
      %p75 = por %p73, %p74
      %p76 = scmp.ne.s32.totalorder %s62, %s63
      %p77 = scmp.eq.s32.totalorder %s29, 1
      %p78 = por %p76, %p77
      %p80 = scmp.ne.s32.totalorder %s63, %s79
      %p81 = scmp.eq.s32.totalorder %s29, 0
      %p82 = por %p80, %p81
      %s84 = sadd.s32 %s83, 1
      %p87 = scmp.eq.s32.totalorder %s23, 1
      %p88 = scmp.ne.s32.totalorder %s83, %s85
      %p89 = scmp.eq.s32.totalorder %s23, 0
      %p90 = por %p88, %p89
      %p91 = scmp.ne.s32.totalorder %s83, %s85
      %p92 = scmp.eq.s32.totalorder %s28, 1
      %p93 = por %p91, %p92
      %p94 = scmp.ne.s32.totalorder %s85, %s86
      %p95 = scmp.eq.s32.totalorder %s28, 0
      %p96 = por %p94, %p95
      %p97 = scmp.ne.s32.totalorder %s85, %s86
      %p98 = scmp.eq.s32.totalorder %s29, 1
      %p99 = por %p97, %p98
      %p101 = scmp.ne.s32.totalorder %s86, %s100
      %p102 = scmp.eq.s32.totalorder %s29, 0
      %p103 = por %p101, %p102
      %s105 = sadd.s32 %s104, 1
      %p108 = scmp.eq.s32.totalorder %s23, 1
      %p109 = scmp.ne.s32.totalorder %s104, %s106
      %p110 = scmp.eq.s32.totalorder %s23, 0
      %p111 = por %p109, %p110
      %p112 = scmp.ne.s32.totalorder %s104, %s106
      %p113 = scmp.eq.s32.totalorder %s28, 1
      %p114 = por %p112, %p113
      %p115 = scmp.ne.s32.totalorder %s106, %s107
      %p116 = scmp.eq.s32.totalorder %s28, 0
      %p117 = por %p115, %p116
      %p118 = scmp.ne.s32.totalorder %s106, %s107
      %p119 = scmp.eq.s32.totalorder %s29, 1
      %p120 = por %p118, %p119
      %p122 = scmp.ne.s32.totalorder %s107, %s121
      %p123 = scmp.eq.s32.totalorder %s29, 0
      %p124 = por %p122, %p123
      %s126 = sadd.s32 %s125, 1
      %p129 = scmp.eq.s32.totalorder %s23, 1
      %p130 = scmp.ne.s32.totalorder %s125, %s127
      %p131 = scmp.eq.s32.totalorder %s23, 0
      %p132 = por %p130, %p131
      %p133 = scmp.ne.s32.totalorder %s125, %s127
      %p134 = scmp.eq.s32.totalorder %s28, 1
      %p135 = por %p133, %p134
      %p136 = scmp.ne.s32.totalorder %s127, %s128
      %p137 = scmp.eq.s32.totalorder %s28, 0
      %p138 = por %p136, %p137
      %p139 = scmp.ne.s32.totalorder %s127, %s128
      %p140 = scmp.eq.s32.totalorder %s29, 1
      %p141 = por %p139, %p140
      %p143 = scmp.ne.s32.totalorder %s128, %s142
      %p144 = scmp.eq.s32.totalorder %s29, 0
      %p145 = por %p143, %p144
      %s147 = sadd.s32 %s146, 1
      %p150 = scmp.eq.s32.totalorder %s23, 1
      %p151 = scmp.ne.s32.totalorder %s146, %s148
      %p152 = scmp.eq.s32.totalorder %s23, 0
      %p153 = por %p151, %p152
      %p154 = scmp.ne.s32.totalorder %s146, %s148
      %p155 = scmp.eq.s32.totalorder %s28, 1
      %p156 = por %p154, %p155
      %p157 = scmp.ne.s32.totalorder %s148, %s149
      %p158 = scmp.eq.s32.totalorder %s28, 0
      %p159 = por %p157, %p158
      %p160 = scmp.ne.s32.totalorder %s148, %s149
      %p161 = scmp.eq.s32.totalorder %s29, 1
      %p162 = por %p160, %p161
      %p164 = scmp.ne.s32.totalorder %s149, %s163
      %p165 = scmp.eq.s32.totalorder %s29, 0
      %p166 = por %p164, %p165
      %s168 = sadd.s32 %s167, 1
      %p171 = scmp.eq.s32.totalorder %s23, 1
      %p172 = scmp.ne.s32.totalorder %s167, %s169
      %p173 = scmp.eq.s32.totalorder %s23, 0
      %p174 = por %p172, %p173
      %p175 = scmp.ne.s32.totalorder %s167, %s169
      %p176 = scmp.eq.s32.totalorder %s28, 1
      %p177 = por %p175, %p176
      %p178 = scmp.ne.s32.totalorder %s169, %s170
      %p179 = scmp.eq.s32.totalorder %s28, 0
      %p180 = por %p178, %p179
      %p181 = scmp.ne.s32.totalorder %s169, %s170
      %p182 = scmp.eq.s32.totalorder %s29, 1
      %p183 = por %p181, %p182
      %p185 = scmp.ne.s32.totalorder %s170, %s184
      %p186 = scmp.eq.s32.totalorder %s29, 0
      %p187 = por %p185, %p186
      %s189 = sadd.s32 %s188, 1
      %p192 = scmp.eq.s32.totalorder %s23, 1
      %p193 = scmp.ne.s32.totalorder %s188, %s190
      %p194 = scmp.eq.s32.totalorder %s23, 0
      %p195 = por %p193, %p194
      %p196 = scmp.ne.s32.totalorder %s188, %s190
      %p197 = scmp.eq.s32.totalorder %s28, 1
      %p198 = por %p196, %p197
      %p199 = scmp.ne.s32.totalorder %s190, %s191
      %p200 = scmp.eq.s32.totalorder %s28, 0
      %p201 = por %p199, %p200
      %p202 = scmp.ne.s32.totalorder %s190, %s191
      %p203 = scmp.eq.s32.totalorder %s29, 1
      %p204 = por %p202, %p203
      %p206 = scmp.ne.s32.totalorder %s191, %s205
      %p207 = scmp.eq.s32.totalorder %s29, 0
      %p208 = por %p206, %p207
      %s210 = sadd.s32 %s209, 1
      %p213 = scmp.eq.s32.totalorder %s23, 1
      %p214 = scmp.ne.s32.totalorder %s209, %s211
      %p215 = scmp.eq.s32.totalorder %s23, 0
      %p216 = por %p214, %p215
      %p217 = scmp.ne.s32.totalorder %s209, %s211
      %p218 = scmp.eq.s32.totalorder %s28, 1
      %p219 = por %p217, %p218
      %p220 = scmp.ne.s32.totalorder %s211, %s212
      %p221 = scmp.eq.s32.totalorder %s28, 0
      %p222 = por %p220, %p221
      %p223 = scmp.ne.s32.totalorder %s211, %s212
      %p224 = scmp.eq.s32.totalorder %s29, 1
      %p225 = por %p223, %p224
      %p227 = scmp.ne.s32.totalorder %s212, %s226
      %p228 = scmp.eq.s32.totalorder %s29, 0
      %p229 = por %p227, %p228
      %s231 = sadd.s32 %s230, 1
      %p234 = scmp.eq.s32.totalorder %s23, 1
      %p235 = scmp.ne.s32.totalorder %s230, %s232
      %p236 = scmp.eq.s32.totalorder %s23, 0
      %p237 = por %p235, %p236
      %p238 = scmp.ne.s32.totalorder %s230, %s232
      %p239 = scmp.eq.s32.totalorder %s28, 1
      %p240 = por %p238, %p239
      %p241 = scmp.ne.s32.totalorder %s232, %s233
      %p242 = scmp.eq.s32.totalorder %s28, 0
      %p243 = por %p241, %p242
      %p244 = scmp.ne.s32.totalorder %s232, %s233
      %p245 = scmp.eq.s32.totalorder %s29, 1
      %p246 = por %p244, %p245
      %p248 = scmp.ne.s32.totalorder %s233, %s247
      %p249 = scmp.eq.s32.totalorder %s29, 0
      %p250 = por %p248, %p249
      %s252 = sadd.s32 %s251, 1
      %p255 = scmp.eq.s32.totalorder %s23, 1
      %p256 = scmp.ne.s32.totalorder %s251, %s253
      %p257 = scmp.eq.s32.totalorder %s23, 0
      %p258 = por %p256, %p257
      %p259 = scmp.ne.s32.totalorder %s251, %s253
      %p260 = scmp.eq.s32.totalorder %s28, 1
      %p261 = por %p259, %p260
      %p262 = scmp.ne.s32.totalorder %s253, %s254
      %p263 = scmp.eq.s32.totalorder %s28, 0
      %p264 = por %p262, %p263
      %p265 = scmp.ne.s32.totalorder %s253, %s254
      %p266 = scmp.eq.s32.totalorder %s29, 1
      %p267 = por %p265, %p266
      %p269 = scmp.ne.s32.totalorder %s254, %s268
      %p270 = scmp.eq.s32.totalorder %s29, 0
      %p271 = por %p269, %p270
      %s272 = ssub.s32 %s23, %s30
      %p273 = scmp.eq.s32.totalorder %s272, 0
      %s275 = sadd.s32 %s274, 1
      %s276 = scalar_select %p273, %s274, %s275
      %p279 = pneg %p273
      %p280 = scmp.eq.s32.totalorder %s23, 1
      %p281 = por %p279, %p280
      %p282 = scmp.ne.s32.totalorder %s274, %s277
      %p283 = scmp.eq.s32.totalorder %s23, 0
      %p284 = por %p282, %p283
      %p285 = scmp.ne.s32.totalorder %s274, %s277
      %p286 = scmp.eq.s32.totalorder %s28, 1
      %p287 = por %p285, %p286
      %p288 = scmp.ne.s32.totalorder %s277, %s278
      %p289 = scmp.eq.s32.totalorder %s28, 0
      %p290 = por %p288, %p289
      %p291 = scmp.ne.s32.totalorder %s277, %s278
      %p292 = scmp.eq.s32.totalorder %s29, 1
      %p293 = por %p291, %p292
      %p295 = scmp.ne.s32.totalorder %s278, %s294
      %p296 = scmp.eq.s32.totalorder %s29, 0
      %p297 = por %p295, %p296
      %p298 = scmp.le.s32.totalorder 1, %s23
      %p299 = scmp.lt.s32.totalorder %s23, 3
      %p300 = pnand %p298, %p299
      %p301 = pneg %p300
      // Predicated region
      $region9: #{tpu_custom_call.1} parent=5 // pred_check
        _
      $region10: #{tpu_custom_call.1} parent=5 // pred_check_branch
        %303 = sbr.rel (%p300) target = $region12
      $region11: #{tpu_custom_call.1} parent=5 // pred_region
        %s304 = ssub.s32 %s23, 1
        // Predicated region
        $region13: #{tpu_custom_call.1} parent=11 // pred_check
          %p305 = pneg %p96
        $region14: #{tpu_custom_call.1} parent=11 // pred_check_branch
          %307 = sbr.rel (%p305) target = $region16
        $region15: #{tpu_custom_call.1} parent=11 // pred_region
          _
        $region16: #{tpu_custom_call.1} parent=11 // pred_fallthru
          _
        // Predicated region
        $region17: #{tpu_custom_call.1} parent=11 // pred_check
          %p308 = pneg %p117
        $region18: #{tpu_custom_call.1} parent=11 // pred_check_branch
          %310 = sbr.rel (%p308) target = $region20
        $region19: #{tpu_custom_call.1} parent=11 // pred_region
          _
        $region20: #{tpu_custom_call.1} parent=11 // pred_fallthru
          _
        // Predicated region
        $region21: #{tpu_custom_call.1} parent=11 // pred_check
          %p311 = pneg %p138
        $region22: #{tpu_custom_call.1} parent=11 // pred_check_branch
          %313 = sbr.rel (%p311) target = $region24
        $region23: #{tpu_custom_call.1} parent=11 // pred_region
          %315 = vsyncadd [#allocation3], 0
          %s317 = sshll.u32 %s4, 4
          %s318 = int_to_ptr.hbm [resolvable:$true] %s317
          %s319 = sshll.u32 [#allocation2], 4
          %s320 = int_to_ptr.vmem [resolvable:$true] %s319
          %322 = dma.hbm_to_vmem [thread:$0]  %s318, 128, %s320, [#allocation3]
        $region24: #{tpu_custom_call.1} parent=11 // pred_fallthru
          _
        // Predicated region
        $region25: #{tpu_custom_call.1} parent=11 // pred_check
          %p323 = pneg %p159
        $region26: #{tpu_custom_call.1} parent=11 // pred_check_branch
          %325 = sbr.rel (%p323) target = $region28
        $region27: #{tpu_custom_call.1} parent=11 // pred_region
          %327 = vsyncadd [#allocation6], 0
          %s329 = sshll.u32 %s5, 4
          %s330 = int_to_ptr.hbm [resolvable:$true] %s329
          %s331 = sshll.u32 [#allocation5], 4
          %s332 = int_to_ptr.vmem [resolvable:$true] %s331
          %334 = dma.hbm_to_vmem [thread:$0]  %s330, 128, %s332, [#allocation6]
        $region28: #{tpu_custom_call.1} parent=11 // pred_fallthru
          _
        // Predicated region
        $region29: #{tpu_custom_call.1} parent=11 // pred_check
          %p335 = pneg %p180
        $region30: #{tpu_custom_call.1} parent=11 // pred_check_branch
          %337 = sbr.rel (%p335) target = $region32
        $region31: #{tpu_custom_call.1} parent=11 // pred_region
          _
        $region32: #{tpu_custom_call.1} parent=11 // pred_fallthru
          _
        // Predicated region
        $region33: #{tpu_custom_call.1} parent=11 // pred_check
          %p338 = pneg %p201
        $region34: #{tpu_custom_call.1} parent=11 // pred_check_branch
          %340 = sbr.rel (%p338) target = $region36
        $region35: #{tpu_custom_call.1} parent=11 // pred_region
          _
        $region36: #{tpu_custom_call.1} parent=11 // pred_fallthru
          _
        // Predicated region
        $region37: #{tpu_custom_call.1} parent=11 // pred_check
          %p341 = pneg %p222
        $region38: #{tpu_custom_call.1} parent=11 // pred_check_branch
          %343 = sbr.rel (%p341) target = $region40
        $region39: #{tpu_custom_call.1} parent=11 // pred_region
          %345 = vsyncadd [#allocation6], 0
          %s347 = sshll.u32 %s8, 4
          %s348 = int_to_ptr.hbm [resolvable:$true] %s347
          %s349 = sshll.u32 [#allocation7], 4
          %s350 = int_to_ptr.vmem [resolvable:$true] %s349
          %352 = dma.hbm_to_vmem [thread:$0]  %s348, 128, %s350, [#allocation6]
        $region40: #{tpu_custom_call.1} parent=11 // pred_fallthru
          _
        // Predicated region
        $region41: #{tpu_custom_call.1} parent=11 // pred_check
          %p353 = pneg %p243
        $region42: #{tpu_custom_call.1} parent=11 // pred_check_branch
          %355 = sbr.rel (%p353) target = $region44
        $region43: #{tpu_custom_call.1} parent=11 // pred_region
          %357 = vsyncadd [#allocation9], 0
          %s359 = sshll.u32 %s9, 4
          %s360 = int_to_ptr.hbm [resolvable:$true] %s359
          %s361 = sshll.u32 [#allocation8], 4
          %s362 = int_to_ptr.vmem [resolvable:$true] %s361
          %364 = dma.hbm_to_vmem [thread:$0]  %s360, 128, %s362, [#allocation9]
        $region44: #{tpu_custom_call.1} parent=11 // pred_fallthru
          _
        // Predicated region
        $region45: #{tpu_custom_call.1} parent=11 // pred_check
          %p365 = pneg %p264
        $region46: #{tpu_custom_call.1} parent=11 // pred_check_branch
          %367 = sbr.rel (%p365) target = $region48
        $region47: #{tpu_custom_call.1} parent=11 // pred_region
          %369 = vsyncadd [#allocation9], 0
          %s371 = sshll.u32 %s10, 4
          %s372 = int_to_ptr.hbm [resolvable:$true] %s371
          %s373 = sshll.u32 [#allocation10], 4
          %s374 = int_to_ptr.vmem [resolvable:$true] %s373
          %376 = dma.hbm_to_vmem [thread:$0]  %s372, 128, %s374, [#allocation9]
        $region48: #{tpu_custom_call.1} parent=11 // pred_fallthru
          _
      $region12: #{tpu_custom_call.1} parent=5 // pred_fallthru
        _
      %p377 = scmp.lt.s32.totalorder %s23, 2
      // Predicated region
      $region49: #{tpu_custom_call.1} parent=5 // pred_check
        %p378 = pneg %p377
      $region50: #{tpu_custom_call.1} parent=5 // pred_check_branch
        %380 = sbr.rel (%p378) target = $region52
      $region51: #{tpu_custom_call.1} parent=5 // pred_region
        // Predicated region
        $region53: #{tpu_custom_call.1} parent=51 // pred_check
          %p381 = pneg %p43
        $region54: #{tpu_custom_call.1} parent=51 // pred_check_branch
          %383 = sbr.rel (%p381) target = $region56
        $region55: #{tpu_custom_call.1} parent=51 // pred_region
          %p384 = scmp.lt.s32.totalorder %s23, 1
          %s385 = scalar_select %p384, %s23, 1
          %s386 = smul.addr %s385, 2
          %s387 = smul.addr %s386, 4
          %s388 = scalar_lea.vmem %s0, %s387
        $region56: #{tpu_custom_call.1} parent=51 // pred_fallthru
          _
        // Predicated region
        $region57: #{tpu_custom_call.1} parent=51 // pred_check
          %p389 = pneg %p69
        $region58: #{tpu_custom_call.1} parent=51 // pred_check_branch
          %391 = sbr.rel (%p389) target = $region60
        $region59: #{tpu_custom_call.1} parent=51 // pred_region
          %p392 = scmp.lt.s32.totalorder %s23, 1
          %s393 = scalar_select %p392, %s23, 1
          %s394 = smul.addr %s393, 8
          %s395 = scalar_lea.vmem %s1, %s394
        $region60: #{tpu_custom_call.1} parent=51 // pred_fallthru
          _
      $region52: #{tpu_custom_call.1} parent=5 // pred_fallthru
        _
      %p396 = scmp.le.s32.totalorder 1, %s23
      %p397 = scmp.lt.s32.totalorder %s23, 3
      %p398 = pnand %p396, %p397
      %p399 = pneg %p398
      // Predicated region
      $region61: #{tpu_custom_call.1} parent=5 // pred_check
        _
      $region62: #{tpu_custom_call.1} parent=5 // pred_check_branch
        %401 = sbr.rel (%p398) target = $region64
      $region63: #{tpu_custom_call.1} parent=5 // pred_region
        %s402 = ssub.s32 %s23, 1
        // Predicated region
        $region65: #{tpu_custom_call.1} parent=63 // pred_check
          %p403 = pneg %p138
        $region66: #{tpu_custom_call.1} parent=63 // pred_check_branch
          %405 = sbr.rel (%p403) target = $region68
        $region67: #{tpu_custom_call.1} parent=63 // pred_region
          %407 = dma.done [#allocation3], 128
        $region68: #{tpu_custom_call.1} parent=63 // pred_fallthru
          _
        // Predicated region
        $region69: #{tpu_custom_call.1} parent=63 // pred_check
          %p408 = pneg %p159
        $region70: #{tpu_custom_call.1} parent=63 // pred_check_branch
          %410 = sbr.rel (%p408) target = $region72
        $region71: #{tpu_custom_call.1} parent=63 // pred_region
          %412 = dma.done [#allocation6], 128
        $region72: #{tpu_custom_call.1} parent=63 // pred_fallthru
          _
        // Predicated region
        $region73: #{tpu_custom_call.1} parent=63 // pred_check
          %p413 = pneg %p222
        $region74: #{tpu_custom_call.1} parent=63 // pred_check_branch
          %415 = sbr.rel (%p413) target = $region76
        $region75: #{tpu_custom_call.1} parent=63 // pred_region
          %417 = dma.done [#allocation6], 128
        $region76: #{tpu_custom_call.1} parent=63 // pred_fallthru
          _
        // Predicated region
        $region77: #{tpu_custom_call.1} parent=63 // pred_check
          %p418 = pneg %p243
        $region78: #{tpu_custom_call.1} parent=63 // pred_check_branch
          %420 = sbr.rel (%p418) target = $region80
        $region79: #{tpu_custom_call.1} parent=63 // pred_region
          %422 = dma.done [#allocation9], 128
        $region80: #{tpu_custom_call.1} parent=63 // pred_fallthru
          _
        // Predicated region
        $region81: #{tpu_custom_call.1} parent=63 // pred_check
          %p423 = pneg %p264
        $region82: #{tpu_custom_call.1} parent=63 // pred_check_branch
          %425 = sbr.rel (%p423) target = $region84
        $region83: #{tpu_custom_call.1} parent=63 // pred_region
          %427 = dma.done [#allocation9], 128
        $region84: #{tpu_custom_call.1} parent=63 // pred_fallthru
          _
        %p428 = scmp.lt.s32.totalorder %s28, 1
        %s429 = scalar_select %p428, %s28, 1
        %s430 = smul.addr %s429, 2
        %s431 = smul.addr %s430, 4
        %s432 = scalar_lea.vmem %s0, %s431
        %p433 = pneg %p49
        %p434 = pneg %p46
        %p435 = scmp.lt.s32.totalorder %s28, 1
        %s436 = scalar_select %p435, %s28, 1
        %s437 = smul.addr %s436, 8
        %s438 = scalar_lea.vmem %s1, %s437
        %p439 = pneg %p75
        %p440 = pneg %p72
        %p441 = pneg %p96
        %p442 = pneg %p93
        %p443 = pneg %p117
        %p444 = pneg %p114
        %p445 = pneg %p138
        %p446 = pneg %p135
        %p447 = pneg %p159
        %p448 = pneg %p156
        %p449 = pneg %p180
        %p450 = pneg %p177
        %p451 = pneg %p201
        %p452 = pneg %p198
        %p453 = pneg %p222
        %p454 = pneg %p219
        %p455 = pneg %p243
        %p456 = pneg %p240
        %p457 = pneg %p264
        %p458 = pneg %p261
        %p459 = pneg %p290
        %p460 = pneg %p287
        %s461 = sand.u32 %s277, 1
        %s462 = scalar_lea.sflag [#allocation4], %s461
        %s463 = sand.u32 %s277, 1
        %s464 = smul.addr %s463, 16
        %s465 = scalar_lea.vmem [#allocation11], %s464
        %p466 = scmp.lt.s32.totalorder %s28, 1
        %s467 = scalar_select %p466, %s28, 1
        %s468 = smul.addr %s467, 2
        %s469 = smul.addr %s468, 4
        %s470 = scalar_lea.vmem %s0, %s469
        %p471 = scmp.lt.s32.totalorder %s28, 1
        %s472 = scalar_select %p471, %s28, 1
        %s473 = smul.addr %s472, 8
        %s474 = scalar_lea.vmem %s1, %s473
        %v475 = vld [vmem:[%s470] sm:$0xff]
        %v476 = vld [vmem:[%s2] sm:$0xf]
        %v477 = vld [vmem:[%s3] sm:$0xff]
        %v479 = vrot.slane %v475, 2
        %vm480 = vcmask 1041408
        %v481 = vsel %vm480, %v475, %v479
        %vm482 = vcmask 1043458
        %v483 = vsel %vm482, %v475, %v479
        %v484 = vrot.slane %v483, 2
        %487 = vst [vmem:[#allocation1] ss:$4 sm:$0xff] %v481
        %v488 = vld.sshfl [vmem:[#allocation1] sm:$0xff pattern:$0x73625140]
        %v489 = vld.sshfl [vmem:[#allocation1 + $0x8] sm:$0xff pattern:$0x73625140]
        %s490 = scalar_lea.vmem [#allocation1], 32
        %491 = vst [vmem:[%s490] ss:$4 sm:$0xff] %v484
        %v492 = vld.sshfl [vmem:[#allocation1 + $0x20] sm:$0xff pattern:$0x73625140]
        %v493 = vld.sshfl [vmem:[#allocation1 + $0x28] sm:$0xff pattern:$0x73625140]
        %v498 = vsel %vm480, %v488, 0.0
        %v499 = vsel %vm480, %v489, 0.0
        %v500 = vadd.f32 %v498, %v499
        %501 = vadd.xlane.f32.xlu0 %v500
        %v502 = vpop.xlane.xlu0 %501
        %v503 = vsel %vm480, %v492, 0.0
        %v504 = vsel %vm480, %v493, 0.0
        %v505 = vadd.f32 %v503, %v504
        %506 = vadd.xlane.f32.xlu0 %v505
        %v507 = vpop.xlane.xlu0 %506
        %v508 = vsel %vm480, %v502, 0.0
        %v509 = vrot.slane %v508, 4
        %v510 = vadd.f32 %v508, %v509
        %v511 = vrot.slane %v510, 2
        %v512 = vadd.f32 %v510, %v511
        %v513 = vrot.slane %v512, 1
        %v514 = vadd.f32 %v512, %v513
        %v515 = vsel %vm480, %v507, 0.0
        %v516 = vrot.slane %v515, 4
        %v517 = vadd.f32 %v515, %v516
        %v518 = vrot.slane %v517, 2
        %v519 = vadd.f32 %v517, %v518
        %v520 = vrot.slane %v519, 1
        %v521 = vadd.f32 %v519, %v520
        %v522 = vmul.f32 %v514, 0.001953125
        %v523 = vmul.f32 %v521, 0.001953125
        %v524 = vsub.f32 %v481, %v522
        %v525 = vsub.f32 %v484, %v523
        %v526 = vmul.f32 %v524, %v524
        %v527 = vmul.f32 %v525, %v525
        %530 = vst [vmem:[#allocation1] ss:$4 sm:$0xff] %v526
        %v531 = vld.sshfl [vmem:[#allocation1] sm:$0xff pattern:$0x73625140]
        %v532 = vld.sshfl [vmem:[#allocation1 + $0x8] sm:$0xff pattern:$0x73625140]
        %s533 = scalar_lea.vmem [#allocation1], 32
        %534 = vst [vmem:[%s533] ss:$4 sm:$0xff] %v527
        %v535 = vld.sshfl [vmem:[#allocation1 + $0x20] sm:$0xff pattern:$0x73625140]
        %v536 = vld.sshfl [vmem:[#allocation1 + $0x28] sm:$0xff pattern:$0x73625140]
        %v541 = vsel %vm480, %v531, 0.0
        %v542 = vsel %vm480, %v532, 0.0
        %v543 = vadd.f32 %v541, %v542
        %544 = vadd.xlane.f32.xlu0 %v543
        %v545 = vpop.xlane.xlu0 %544
        %v546 = vsel %vm480, %v535, 0.0
        %v547 = vsel %vm480, %v536, 0.0
        %v548 = vadd.f32 %v546, %v547
        %549 = vadd.xlane.f32.xlu0 %v548
        %v550 = vpop.xlane.xlu0 %549
        %v551 = vsel %vm480, %v545, 0.0
        %v552 = vrot.slane %v551, 4
        %v553 = vadd.f32 %v551, %v552
        %v554 = vrot.slane %v553, 2
        %v555 = vadd.f32 %v553, %v554
        %v556 = vrot.slane %v555, 1
        %v557 = vadd.f32 %v555, %v556
        %v558 = vsel %vm480, %v550, 0.0
        %v559 = vrot.slane %v558, 4
        %v560 = vadd.f32 %v558, %v559
        %v561 = vrot.slane %v560, 2
        %v562 = vadd.f32 %v560, %v561
        %v563 = vrot.slane %v562, 1
        %v564 = vadd.f32 %v562, %v563
        %v565 = vmul.f32 %v557, 0.001953125
        %v566 = vmul.f32 %v564, 0.001953125
        %v567 = vadd.f32 %v565, 1e-05
        %v568 = vadd.f32 %v566, 1e-05
        %v569 = vrsqrt.pop %v567
        %v570 = vmul.f32 %v569, %v567
        %v571 = vmul.f32 %v570, %v569
        %v572 = vmul.f32 0.5, %v571
        %v573 = vsub.f32 1.5, %v572
        %v574 = vmul.f32 %v569, %v573
        %vm575 = vweird.f32 %v567
        %vm576 = vweird.f32 %v569
        %vm577 = vmor %vm575, %vm576
        %v578 = vsel %vm577, %v569, %v574
        %v579 = vrsqrt.pop %v568
        %v580 = vmul.f32 %v579, %v568
        %v581 = vmul.f32 %v580, %v579
        %v582 = vmul.f32 0.5, %v581
        %v583 = vsub.f32 1.5, %v582
        %v584 = vmul.f32 %v579, %v583
        %vm585 = vweird.f32 %v568
        %vm586 = vweird.f32 %v579
        %vm587 = vmor %vm585, %vm586
        %v588 = vsel %vm587, %v579, %v584
        %v590 = vrot.slane %v476, 2
        %v592 = vmul.f32 %v578, %v476
        %v593 = vmul.f32 %v588, %v590
        %595 = vset.pattern.permute.xlu0 0
        %596 = vperm.xlu0 %595, %v592
        %v597 = vpop.permute.xlu0 %596
        %v600 = vunpack.c.l.s4 269488144
        %v601 = vunpack.c.0.s8 %v600
        %v602 = vperm.slane %v597, %v601
        %604 = vset.pattern.permute.xlu0 0
        %605 = vperm.xlu0 %604, %v593
        %v606 = vpop.permute.xlu0 %605
        %v609 = vunpack.c.l.s4 269488144
        %v610 = vunpack.c.0.s8 %v609
        %v611 = vperm.slane %v606, %v610
        %v612 = vmul.f32 %v524, %v602
        %v613 = vmul.f32 %v525, %v611
        %614 = vset.pattern.permute.xlu0 1
        %615 = vperm.xlu0 %614, %v476
        %v616 = vpop.permute.xlu0 %615
        %v619 = vunpack.c.l.s4 269488144
        %v620 = vunpack.c.0.s8 %v619
        %v621 = vperm.slane %v616, %v620
        %622 = vset.pattern.permute.xlu0 1
        %623 = vperm.xlu0 %622, %v590
        %v624 = vpop.permute.xlu0 %623
        %v627 = vunpack.c.l.s4 269488144
        %v628 = vunpack.c.0.s8 %v627
        %v629 = vperm.slane %v624, %v628
        %v630 = vadd.f32 %v612, %v621
        %v631 = vadd.f32 %v613, %v629
        %v632 = vxor.u32 %v630, 2147483648
        %v633 = vxor.u32 %v631, 2147483648
        %v634 = vmul.f32 %v632, 1.442695
        %v635 = vpow.pop %v634
        %v636 = vmul.f32 %v633, 1.442695
        %v637 = vpow.pop %v636
        %v638 = vadd.f32 %v635, 1.0
        %v639 = vadd.f32 %v637, 1.0
        %v640 = vrcp.pop %v638
        %v641 = vmul.f32 %v638, %v640
        %v642 = vsub.f32 1.0, %v641
        %v643 = vmul.f32 %v640, %v642
        %v644 = vadd.f32 %v640, %v643
        %vm645 = vweird.f32 %v638
        %vm646 = vweird.f32 %v640
        %vm647 = vmor %vm645, %vm646
        %v648 = vsel %vm647, %v640, %v644
        %v649 = vand.u32 2147483647, %v638
        %vm650 = vcmp.eq.f32.partialorder %v649, 8.507059e+37
        %v651 = vand.u32 %v638, 2147483648
        %v652 = vor.u32 1.1754944e-38, %v651
        %v653 = vsel %vm650, %v652, %v648
        %v654 = vmul.f32 1.0, %v653
        %v655 = vrcp.pop %v639
        %v656 = vmul.f32 %v639, %v655
        %v657 = vsub.f32 1.0, %v656
        %v658 = vmul.f32 %v655, %v657
        %v659 = vadd.f32 %v655, %v658
        %vm660 = vweird.f32 %v639
        %vm661 = vweird.f32 %v655
        %vm662 = vmor %vm660, %vm661
        %v663 = vsel %vm662, %v655, %v659
        %v664 = vand.u32 2147483647, %v639
        %vm665 = vcmp.eq.f32.partialorder %v664, 8.507059e+37
        %v666 = vand.u32 %v639, 2147483648
        %v667 = vor.u32 1.1754944e-38, %v666
        %v668 = vsel %vm665, %v667, %v663
        %v669 = vmul.f32 1.0, %v668
        %v670 = vmul.f32 %v630, %v654
        %v671 = vmul.f32 %v631, %v669
        %v672 = vld [vmem:[#allocation2] sm:$0xff]
        %675 = vst [vmem:[#allocation1] ss:$4 sm:$0xff] %v670
        %s676 = scalar_lea.vmem [#allocation1], 1
        %677 = vst [vmem:[%s676] ss:$4 sm:$0xff] %v671
        %v678 = vld.sshfl [vmem:[#allocation1] sm:$0xff pattern:$0x73625140]
        %v679 = vld.sshfl [vmem:[#allocation1 + $0x8] sm:$0xff pattern:$0x73625140]
        %vm682 = vcmask 1043456
        %v683 = vsel %vm682, %v678, 0.0
        %v684 = vsel %vm682, %v679, 0.0
        %v685 = vlaneseq
        %v686 = vand.u32 %v685, 127
        %v687 = vadd.s32 %v686, 128
        %v688 = vand.u32 %v686, 15
        %v689 = vand.u32 %v687, 15
        %692 = vrot.lane.b32.xlu0 %v683, 17
        %v693 = vpop.permute.xlu0 %692
        %694 = vrot.lane.b32.xlu0 %v684, 17
        %v695 = vpop.permute.xlu0 %694
        %vm696 = vcmask 138240
        %v697 = vsel %vm696, %v693, %v695
        %v700 = vsel %vm696, 0.0, %v693
        %vm701 = vcmp.eq.s32.totalorder %v688, 0
        %vm702 = vcmp.eq.s32.totalorder %v689, 0
        %v703 = vsel %vm701, 1, 0
        %v704 = vsel %vm702, 1, 0
        %vm705 = vcmp.eq.s32.totalorder %v703, 1
        %vm706 = vcmp.eq.s32.totalorder %v704, 1
        %v707 = vsel %vm705, 0.0, %v700
        %v708 = vsel %vm706, 0.0, %v697
        %709 = vrot.lane.b32.xlu0 %v683, 16
        %v710 = vpop.permute.xlu0 %709
        %711 = vrot.lane.b32.xlu0 %v684, 16
        %v712 = vpop.permute.xlu0 %711
        %vm713 = vcmask 130048
        %v714 = vsel %vm713, %v710, %v712
        %v717 = vsel %vm713, 0.0, %v710
        %718 = vrot.lane.b32.xlu0 %v683, 15
        %v719 = vpop.permute.xlu0 %718
        %720 = vrot.lane.b32.xlu0 %v684, 15
        %v721 = vpop.permute.xlu0 %720
        %vm722 = vcmask 121856
        %v723 = vsel %vm722, %v719, %v721
        %v726 = vsel %vm722, 0.0, %v719
        %vm727 = vcmp.eq.s32.totalorder %v688, 15
        %vm728 = vcmp.eq.s32.totalorder %v689, 15
        %v729 = vsel %vm727, 1, 0
        %v730 = vsel %vm728, 1, 0
        %vm731 = vcmp.eq.s32.totalorder %v729, 1
        %vm732 = vcmp.eq.s32.totalorder %v730, 1
        %v733 = vsel %vm731, 0.0, %v726
        %v734 = vsel %vm732, 0.0, %v723
        %735 = vrot.lane.b32.xlu0 %v683, 1
        %v736 = vpop.permute.xlu0 %735
        %737 = vrot.lane.b32.xlu0 %v684, 1
        %v738 = vpop.permute.xlu0 %737
        %vm739 = vcmask 7168
        %v740 = vsel %vm739, %v736, %v738
        %v743 = vsel %vm739, 0.0, %v736
        %v744 = vsel %vm705, 0.0, %v743
        %v745 = vsel %vm706, 0.0, %v740
        %746 = vrot.lane.b32.xlu0 %v683, 127
        %v747 = vpop.permute.xlu0 %746
        %748 = vrot.lane.b32.xlu0 %v684, 127
        %v749 = vpop.permute.xlu0 %748
        %vm750 = vcmask 1039360
        %v751 = vsel %vm750, %v747, %v749
        %v754 = vsel %vm750, %v749, 0.0
        %v755 = vsel %vm731, 0.0, %v751
        %v756 = vsel %vm732, 0.0, %v754
        %757 = vrot.lane.b32.xlu0 %v683, 113
        %v758 = vpop.permute.xlu0 %757
        %759 = vrot.lane.b32.xlu0 %v684, 113
        %v760 = vpop.permute.xlu0 %759
        %vm761 = vcmask 924672
        %v762 = vsel %vm761, %v758, %v760
        %v765 = vsel %vm761, %v760, 0.0
        %v766 = vsel %vm705, 0.0, %v762
        %v767 = vsel %vm706, 0.0, %v765
        %768 = vrot.lane.b32.xlu0 %v683, 112
        %v769 = vpop.permute.xlu0 %768
        %770 = vrot.lane.b32.xlu0 %v684, 112
        %v771 = vpop.permute.xlu0 %770
        %vm772 = vcmask 916480
        %v773 = vsel %vm772, %v769, %v771
        %v776 = vsel %vm772, %v771, 0.0
        %777 = vrot.lane.b32.xlu0 %v683, 111
        %v778 = vpop.permute.xlu0 %777
        %779 = vrot.lane.b32.xlu0 %v684, 111
        %v780 = vpop.permute.xlu0 %779
        %vm781 = vcmask 908288
        %v782 = vsel %vm781, %v778, %v780
        %v785 = vsel %vm781, %v780, 0.0
        %v786 = vsel %vm731, 0.0, %v782
        %v787 = vsel %vm732, 0.0, %v785
        %789 = vset.pattern.permute.xlu0 0
        %790 = vperm.xlu0 %789, %v477
        %v791 = vpop.permute.xlu0 %790
        %vm793 = vcmask 588800
        %v795 = vsel %vm793, %v672, 0
        %797 = vmatpush.msra.mxu0 0.0
        %798 = vmatpush.msra.mxu0 0.0
        %799 = vmatpush.msra.mxu0 0.0
        %800 = vmatpush.msra.mxu0 0.0
        %801 = vmatpush.msra.mxu0 0.0
        %802 = vmatpush.msra.mxu0 0.0
        %803 = vmatpush.msra.mxu0 0.0
        %804 = vmatpush.msra.mxu0 %v786
        %805 = vmatpush.msra.mxu0 %v773
        %806 = vmatpush.msra.mxu0 %v766
        %807 = vmatpush.msra.mxu0 %v755
        %808 = vmatpush.msra.mxu0 %v683
        %809 = vmatpush.msra.mxu0 %v744
        %810 = vmatpush.msra.mxu0 %v733
        %811 = vmatpush.msra.mxu0 %v717
        %812 = vmatpush.msra.mxu0 %v707
        %813 = vmatmul.f32.gmra.mxu0 %v795
        %v814 = vpop.f32.mrf.mxu0
        %v815 = vadd.f32 %v791, %v814
        %816 = vdwg.mxu0
        %817 = vmatpush.msra.mxu0 0.0
        %818 = vmatpush.msra.mxu0 0.0
        %819 = vmatpush.msra.mxu0 0.0
        %820 = vmatpush.msra.mxu0 0.0
        %821 = vmatpush.msra.mxu0 0.0
        %822 = vmatpush.msra.mxu0 0.0
        %823 = vmatpush.msra.mxu0 0.0
        %824 = vmatpush.msra.mxu0 %v787
        %825 = vmatpush.msra.mxu0 %v776
        %826 = vmatpush.msra.mxu0 %v767
        %827 = vmatpush.msra.mxu0 %v756
        %828 = vmatpush.msra.mxu0 %v684
        %829 = vmatpush.msra.mxu0 %v745
        %830 = vmatpush.msra.mxu0 %v734
        %831 = vmatpush.msra.mxu0 %v714
        %832 = vmatpush.msra.mxu0 %v708
        %833 = vmatmul.f32.gmra.mxu0 %v795
        %v834 = vpop.f32.mrf.mxu0
        %v835 = vadd.f32 %v791, %v834
        %836 = vdwg.mxu0
        %v837 = vld [vmem:[%s474] sm:$0xff]
        %v838 = vadd.f32 %v837, 1.0
        %840 = vset.pattern.permute.xlu0 0
        %841 = vperm.xlu0 %840, %v838
        %v842 = vpop.permute.xlu0 %841
        %v844 = vmul.f32 %v815, %v842
        %v845 = vmul.f32 %v835, %v842
        %847 = vset.pattern.permute.xlu0 0
        %848 = vperm.xlu0 %847, %v837
        %v849 = vpop.permute.xlu0 %848
        %v851 = vadd.f32 %v844, %v849
        %v852 = vadd.f32 %v845, %v849
        %v855 = vrot.slane %v852, 4
        %v856 = vsel %vm682, %v851, %v855
        %v857 = vsel %vm682, %v855, %v851
        %v858 = vrot.slane %v857, 4
        %861 = vst [vmem:[#allocation1] ss:$2 sm:$0xff] %v856
        %v862 = vld.sshfl [vmem:[#allocation1] sm:$0xff pattern:$0x75316420]
        %v863 = vld.sshfl [vmem:[#allocation1 + $0x8] sm:$0xff pattern:$0x75316420]
        %s864 = scalar_lea.vmem [#allocation1], 16
        %865 = vst [vmem:[%s864] ss:$2 sm:$0xff] %v858
        %v866 = vld.sshfl [vmem:[#allocation1 + $0x10] sm:$0xff pattern:$0x75316420]
        %v867 = vld.sshfl [vmem:[#allocation1 + $0x18] sm:$0xff pattern:$0x75316420]
        %v872 = vsel %vm682, %v862, 0.0
        %v873 = vsel %vm682, %v863, 0.0
        %v874 = vadd.f32 %v872, %v873
        %875 = vadd.xlane.f32.xlu0 %v874
        %v876 = vpop.xlane.xlu0 %875
        %v877 = vsel %vm682, %v866, 0.0
        %v878 = vsel %vm682, %v867, 0.0
        %v879 = vadd.f32 %v877, %v878
        %880 = vadd.xlane.f32.xlu0 %v879
        %v881 = vpop.xlane.xlu0 %880
        %v882 = vsel %vm682, %v876, 0.0
        %v883 = vrot.slane %v882, 4
        %v884 = vadd.f32 %v882, %v883
        %v885 = vrot.slane %v884, 2
        %v886 = vadd.f32 %v884, %v885
        %v887 = vrot.slane %v886, 1
        %v888 = vadd.f32 %v886, %v887
        %v889 = vsel %vm682, %v881, 0.0
        %v890 = vrot.slane %v889, 4
        %v891 = vadd.f32 %v889, %v890
        %v892 = vrot.slane %v891, 2
        %v893 = vadd.f32 %v891, %v892
        %v894 = vrot.slane %v893, 1
        %v895 = vadd.f32 %v893, %v894
        %v896 = vmul.f32 %v888, 0.0009765625
        %v897 = vmul.f32 %v895, 0.0009765625
        %v898 = vsub.f32 %v856, %v896
        %v899 = vsub.f32 %v858, %v897
        %v900 = vmul.f32 %v898, %v898
        %v901 = vmul.f32 %v899, %v899
        %904 = vst [vmem:[#allocation1] ss:$2 sm:$0xff] %v900
        %v905 = vld.sshfl [vmem:[#allocation1] sm:$0xff pattern:$0x75316420]
        %v906 = vld.sshfl [vmem:[#allocation1 + $0x8] sm:$0xff pattern:$0x75316420]
        %s907 = scalar_lea.vmem [#allocation1], 16
        %908 = vst [vmem:[%s907] ss:$2 sm:$0xff] %v901
        %v909 = vld.sshfl [vmem:[#allocation1 + $0x10] sm:$0xff pattern:$0x75316420]
        %v910 = vld.sshfl [vmem:[#allocation1 + $0x18] sm:$0xff pattern:$0x75316420]
        %v915 = vsel %vm682, %v905, 0.0
        %v916 = vsel %vm682, %v906, 0.0
        %v917 = vadd.f32 %v915, %v916
        %918 = vadd.xlane.f32.xlu0 %v917
        %v919 = vpop.xlane.xlu0 %918
        %v920 = vsel %vm682, %v909, 0.0
        %v921 = vsel %vm682, %v910, 0.0
        %v922 = vadd.f32 %v920, %v921
        %923 = vadd.xlane.f32.xlu0 %v922
        %v924 = vpop.xlane.xlu0 %923
        %v925 = vsel %vm682, %v919, 0.0
        %v926 = vrot.slane %v925, 4
        %v927 = vadd.f32 %v925, %v926
        %v928 = vrot.slane %v927, 2
        %v929 = vadd.f32 %v927, %v928
        %v930 = vrot.slane %v929, 1
        %v931 = vadd.f32 %v929, %v930
        %v932 = vsel %vm682, %v924, 0.0
        %v933 = vrot.slane %v932, 4
        %v934 = vadd.f32 %v932, %v933
        %v935 = vrot.slane %v934, 2
        %v936 = vadd.f32 %v934, %v935
        %v937 = vrot.slane %v936, 1
        %v938 = vadd.f32 %v936, %v937
        %v939 = vmul.f32 %v931, 0.0009765625
        %v940 = vmul.f32 %v938, 0.0009765625
        %v941 = vadd.f32 %v939, 1e-05
        %v942 = vadd.f32 %v940, 1e-05
        %v943 = vrsqrt.pop %v941
        %v944 = vmul.f32 %v943, %v941
        %v945 = vmul.f32 %v944, %v943
        %v946 = vmul.f32 0.5, %v945
        %v947 = vsub.f32 1.5, %v946
        %v948 = vmul.f32 %v943, %v947
        %vm949 = vweird.f32 %v941
        %vm950 = vweird.f32 %v943
        %vm951 = vmor %vm949, %vm950
        %v952 = vsel %vm951, %v943, %v948
        %v953 = vrsqrt.pop %v942
        %v954 = vmul.f32 %v953, %v942
        %v955 = vmul.f32 %v954, %v953
        %v956 = vmul.f32 0.5, %v955
        %v957 = vsub.f32 1.5, %v956
        %v958 = vmul.f32 %v953, %v957
        %vm959 = vweird.f32 %v942
        %vm960 = vweird.f32 %v953
        %vm961 = vmor %vm959, %vm960
        %v962 = vsel %vm961, %v953, %v958
        %v963 = vrot.slane %v477, 4
        %v965 = vmul.f32 %v952, %v477
        %v966 = vmul.f32 %v962, %v963
        %968 = vset.pattern.permute.xlu0 1
        %969 = vperm.xlu0 %968, %v965
        %v970 = vpop.permute.xlu0 %969
        %v973 = vunpack.c.l.s4 839922192
        %v974 = vunpack.c.0.s8 %v973
        %v975 = vperm.slane %v970, %v974
        %977 = vset.pattern.permute.xlu0 1
        %978 = vperm.xlu0 %977, %v966
        %v979 = vpop.permute.xlu0 %978
        %v982 = vunpack.c.l.s4 839922192
        %v983 = vunpack.c.0.s8 %v982
        %v984 = vperm.slane %v979, %v983
        %v985 = vmul.f32 %v898, %v975
        %v986 = vmul.f32 %v899, %v984
        %987 = vset.pattern.permute.xlu0 2
        %988 = vperm.xlu0 %987, %v477
        %v989 = vpop.permute.xlu0 %988
        %v992 = vunpack.c.l.s4 839922192
        %v993 = vunpack.c.0.s8 %v992
        %v994 = vperm.slane %v989, %v993
        %995 = vset.pattern.permute.xlu0 2
        %996 = vperm.xlu0 %995, %v963
        %v997 = vpop.permute.xlu0 %996
        %v1000 = vunpack.c.l.s4 839922192
        %v1001 = vunpack.c.0.s8 %v1000
        %v1002 = vperm.slane %v997, %v1001
        %v1003 = vadd.f32 %v985, %v994
        %v1004 = vadd.f32 %v986, %v1002
        %v1005 = vxor.u32 %v1003, 2147483648
        %v1006 = vxor.u32 %v1004, 2147483648
        %v1007 = vmul.f32 %v1005, 1.442695
        %v1008 = vpow.pop %v1007
        %v1009 = vmul.f32 %v1006, 1.442695
        %v1010 = vpow.pop %v1009
        %v1011 = vadd.f32 %v1008, 1.0
        %v1012 = vadd.f32 %v1010, 1.0
        %v1013 = vrcp.pop %v1011
        %v1014 = vmul.f32 %v1011, %v1013
        %v1015 = vsub.f32 1.0, %v1014
        %v1016 = vmul.f32 %v1013, %v1015
        %v1017 = vadd.f32 %v1013, %v1016
        %vm1018 = vweird.f32 %v1011
        %vm1019 = vweird.f32 %v1013
        %vm1020 = vmor %vm1018, %vm1019
        %v1021 = vsel %vm1020, %v1013, %v1017
        %v1022 = vand.u32 2147483647, %v1011
        %vm1023 = vcmp.eq.f32.partialorder %v1022, 8.507059e+37
        %v1024 = vand.u32 %v1011, 2147483648
        %v1025 = vor.u32 1.1754944e-38, %v1024
        %v1026 = vsel %vm1023, %v1025, %v1021
        %v1027 = vmul.f32 1.0, %v1026
        %v1028 = vrcp.pop %v1012
        %v1029 = vmul.f32 %v1012, %v1028
        %v1030 = vsub.f32 1.0, %v1029
        %v1031 = vmul.f32 %v1028, %v1030
        %v1032 = vadd.f32 %v1028, %v1031
        %vm1033 = vweird.f32 %v1012
        %vm1034 = vweird.f32 %v1028
        %vm1035 = vmor %vm1033, %vm1034
        %v1036 = vsel %vm1035, %v1028, %v1032
        %v1037 = vand.u32 2147483647, %v1012
        %vm1038 = vcmp.eq.f32.partialorder %v1037, 8.507059e+37
        %v1039 = vand.u32 %v1012, 2147483648
        %v1040 = vor.u32 1.1754944e-38, %v1039
        %v1041 = vsel %vm1038, %v1040, %v1036
        %v1042 = vmul.f32 1.0, %v1041
        %v1043 = vmul.f32 %v1003, %v1027
        %v1044 = vmul.f32 %v1004, %v1042
        %v1045 = vld [vmem:[#allocation5] sm:$0xff]
        %1048 = vst [vmem:[#allocation1] ss:$2 sm:$0xff] %v1043
        %s1049 = scalar_lea.vmem [#allocation1], 1
        %1050 = vst [vmem:[%s1049] ss:$2 sm:$0xff] %v1044
        %v1051 = vld.sshfl [vmem:[#allocation1] sm:$0xff pattern:$0x75316420]
        %v1052 = vld.sshfl [vmem:[#allocation1 + $0x8] sm:$0xff pattern:$0x75316420]
        %1053 = vrot.lane.b32.xlu0 %v1051, 17
        %v1054 = vpop.permute.xlu0 %1053
        %1055 = vrot.lane.b32.xlu0 %v1052, 17
        %v1056 = vpop.permute.xlu0 %1055
        %v1057 = vsel %vm696, %v1054, %v1056
        %v1060 = vsel %vm696, 0.0, %v1054
        %v1061 = vsel %vm705, 0.0, %v1060
        %v1062 = vsel %vm706, 0.0, %v1057
        %1063 = vst [vmem:[#allocation1] ss:$2 sm:$0xff] %v1043
        %s1064 = scalar_lea.vmem [#allocation1], 1
        %1065 = vst [vmem:[%s1064] ss:$2 sm:$0xff] %v1044
        %v1066 = vld.sshfl [vmem:[#allocation1] sm:$0xff pattern:$0x75316420]
        %v1067 = vld.sshfl [vmem:[#allocation1 + $0x8] sm:$0xff pattern:$0x75316420]
        %1068 = vrot.lane.b32.xlu0 %v1066, 16
        %v1069 = vpop.permute.xlu0 %1068
        %1070 = vrot.lane.b32.xlu0 %v1067, 16
        %v1071 = vpop.permute.xlu0 %1070
        %v1072 = vsel %vm713, %v1069, %v1071
        %v1075 = vsel %vm713, 0.0, %v1069
        %1076 = vst [vmem:[#allocation1] ss:$2 sm:$0xff] %v1043
        %s1077 = scalar_lea.vmem [#allocation1], 1
        %1078 = vst [vmem:[%s1077] ss:$2 sm:$0xff] %v1044
        %v1079 = vld.sshfl [vmem:[#allocation1] sm:$0xff pattern:$0x75316420]
        %v1080 = vld.sshfl [vmem:[#allocation1 + $0x8] sm:$0xff pattern:$0x75316420]
        %1081 = vrot.lane.b32.xlu0 %v1079, 15
        %v1082 = vpop.permute.xlu0 %1081
        %1083 = vrot.lane.b32.xlu0 %v1080, 15
        %v1084 = vpop.permute.xlu0 %1083
        %v1085 = vsel %vm722, %v1082, %v1084
        %v1088 = vsel %vm722, 0.0, %v1082
        %v1089 = vsel %vm731, 0.0, %v1088
        %v1090 = vsel %vm732, 0.0, %v1085
        %1091 = vst [vmem:[#allocation1] ss:$2 sm:$0xff] %v1043
        %s1092 = scalar_lea.vmem [#allocation1], 1
        %1093 = vst [vmem:[%s1092] ss:$2 sm:$0xff] %v1044
        %v1094 = vld.sshfl [vmem:[#allocation1] sm:$0xff pattern:$0x75316420]
        %v1095 = vld.sshfl [vmem:[#allocation1 + $0x8] sm:$0xff pattern:$0x75316420]
        %1096 = vrot.lane.b32.xlu0 %v1094, 1
        %v1097 = vpop.permute.xlu0 %1096
        %1098 = vrot.lane.b32.xlu0 %v1095, 1
        %v1099 = vpop.permute.xlu0 %1098
        %v1100 = vsel %vm739, %v1097, %v1099
        %v1103 = vsel %vm739, 0.0, %v1097
        %v1104 = vsel %vm705, 0.0, %v1103
        %v1105 = vsel %vm706, 0.0, %v1100
        %1106 = vst [vmem:[#allocation1] ss:$2 sm:$0xff] %v1043
        %s1107 = scalar_lea.vmem [#allocation1], 1
        %1108 = vst [vmem:[%s1107] ss:$2 sm:$0xff] %v1044
        %v1109 = vld.sshfl [vmem:[#allocation1] sm:$0xff pattern:$0x75316420]
        %v1110 = vld.sshfl [vmem:[#allocation1 + $0x8] sm:$0xff pattern:$0x75316420]
        %1111 = vrot.lane.b32.xlu0 %v1109, 127
        %v1112 = vpop.permute.xlu0 %1111
        %1113 = vrot.lane.b32.xlu0 %v1110, 127
        %v1114 = vpop.permute.xlu0 %1113
        %v1115 = vsel %vm750, %v1112, %v1114
        %v1118 = vsel %vm750, %v1114, 0.0
        %v1119 = vsel %vm731, 0.0, %v1115
        %v1120 = vsel %vm732, 0.0, %v1118
        %1121 = vst [vmem:[#allocation1] ss:$2 sm:$0xff] %v1043
        %s1122 = scalar_lea.vmem [#allocation1], 1
        %1123 = vst [vmem:[%s1122] ss:$2 sm:$0xff] %v1044
        %v1124 = vld.sshfl [vmem:[#allocation1] sm:$0xff pattern:$0x75316420]
        %v1125 = vld.sshfl [vmem:[#allocation1 + $0x8] sm:$0xff pattern:$0x75316420]
        %1126 = vrot.lane.b32.xlu0 %v1124, 113
        %v1127 = vpop.permute.xlu0 %1126
        %1128 = vrot.lane.b32.xlu0 %v1125, 113
        %v1129 = vpop.permute.xlu0 %1128
        %v1130 = vsel %vm761, %v1127, %v1129
        %v1133 = vsel %vm761, %v1129, 0.0
        %v1134 = vsel %vm705, 0.0, %v1130
        %v1135 = vsel %vm706, 0.0, %v1133
        %1136 = vst [vmem:[#allocation1] ss:$2 sm:$0xff] %v1043
        %s1137 = scalar_lea.vmem [#allocation1], 1
        %1138 = vst [vmem:[%s1137] ss:$2 sm:$0xff] %v1044
        %v1139 = vld.sshfl [vmem:[#allocation1] sm:$0xff pattern:$0x75316420]
        %v1140 = vld.sshfl [vmem:[#allocation1 + $0x8] sm:$0xff pattern:$0x75316420]
        %1141 = vrot.lane.b32.xlu0 %v1139, 112
        %v1142 = vpop.permute.xlu0 %1141
        %1143 = vrot.lane.b32.xlu0 %v1140, 112
        %v1144 = vpop.permute.xlu0 %1143
        %v1145 = vsel %vm772, %v1142, %v1144
        %v1148 = vsel %vm772, %v1144, 0.0
        %1149 = vst [vmem:[#allocation1] ss:$2 sm:$0xff] %v1043
        %s1150 = scalar_lea.vmem [#allocation1], 1
        %1151 = vst [vmem:[%s1150] ss:$2 sm:$0xff] %v1044
        %v1152 = vld.sshfl [vmem:[#allocation1] sm:$0xff pattern:$0x75316420]
        %v1153 = vld.sshfl [vmem:[#allocation1 + $0x8] sm:$0xff pattern:$0x75316420]
        %1154 = vrot.lane.b32.xlu0 %v1152, 111
        %v1155 = vpop.permute.xlu0 %1154
        %1156 = vrot.lane.b32.xlu0 %v1153, 111
        %v1157 = vpop.permute.xlu0 %1156
        %v1158 = vsel %vm781, %v1155, %v1157
        %v1161 = vsel %vm781, %v1157, 0.0
        %v1162 = vsel %vm731, 0.0, %v1158
        %v1163 = vsel %vm732, 0.0, %v1161
        %1164 = vst [vmem:[#allocation1] ss:$2 sm:$0xff] %v1043
        %s1165 = scalar_lea.vmem [#allocation1], 1
        %1166 = vst [vmem:[%s1165] ss:$2 sm:$0xff] %v1044
        %v1167 = vld.sshfl [vmem:[#allocation1] sm:$0xff pattern:$0x75316420]
        %v1168 = vld.sshfl [vmem:[#allocation1 + $0x8] sm:$0xff pattern:$0x75316420]
        %1171 = vset.pattern.permute.xlu0 3
        %1172 = vperm.xlu0 %1171, %v477
        %v1173 = vpop.permute.xlu0 %1172
        %v1176 = vsel %vm793, %v1045, 0
        %1178 = vmatpush.msra.mxu0 0.0
        %1179 = vmatpush.msra.mxu0 0.0
        %1180 = vmatpush.msra.mxu0 0.0
        %1181 = vmatpush.msra.mxu0 0.0
        %1182 = vmatpush.msra.mxu0 0.0
        %1183 = vmatpush.msra.mxu0 0.0
        %1184 = vmatpush.msra.mxu0 0.0
        %1185 = vmatpush.msra.mxu0 %v1162
        %1186 = vmatpush.msra.mxu0 %v1145
        %1187 = vmatpush.msra.mxu0 %v1134
        %1188 = vmatpush.msra.mxu0 %v1119
        %1189 = vmatpush.msra.mxu0 %v1167
        %1190 = vmatpush.msra.mxu0 %v1104
        %1191 = vmatpush.msra.mxu0 %v1089
        %1192 = vmatpush.msra.mxu0 %v1075
        %1193 = vmatpush.msra.mxu0 %v1061
        %1194 = vmatmul.f32.gmra.mxu0 %v1176
        %v1195 = vpop.f32.mrf.mxu0
        %v1196 = vadd.f32 %v1173, %v1195
        %1197 = vdwg.mxu0
        %1198 = vmatpush.msra.mxu0 0.0
        %1199 = vmatpush.msra.mxu0 0.0
        %1200 = vmatpush.msra.mxu0 0.0
        %1201 = vmatpush.msra.mxu0 0.0
        %1202 = vmatpush.msra.mxu0 0.0
        %1203 = vmatpush.msra.mxu0 0.0
        %1204 = vmatpush.msra.mxu0 0.0
        %1205 = vmatpush.msra.mxu0 %v1163
        %1206 = vmatpush.msra.mxu0 %v1148
        %1207 = vmatpush.msra.mxu0 %v1135
        %1208 = vmatpush.msra.mxu0 %v1120
        %1209 = vmatpush.msra.mxu0 %v1168
        %1210 = vmatpush.msra.mxu0 %v1105
        %1211 = vmatpush.msra.mxu0 %v1090
        %1212 = vmatpush.msra.mxu0 %v1072
        %1213 = vmatpush.msra.mxu0 %v1062
        %1214 = vmatmul.f32.gmra.mxu0 %v1176
        %v1215 = vpop.f32.mrf.mxu0
        %v1216 = vadd.f32 %v1173, %v1215
        %1217 = vdwg.mxu0
        %v1218 = vld [vmem:[%s6] sm:$0xff]
        %1219 = vset.pattern.permute.xlu0 4
        %1220 = vperm.xlu0 %1219, %v477
        %v1221 = vpop.permute.xlu0 %1220
        %1223 = vst [vmem:[#allocation1] ss:$2 sm:$0xff] %v475
        %v1224 = vld.sshfl [vmem:[#allocation1] sm:$0xff pattern:$0x75316420]
        %v1225 = vld.sshfl [vmem:[#allocation1 + $0x8] sm:$0xff pattern:$0x75316420]
        %vm1226 = vcmask 31744
        %v1228 = vsel %vm1226, %v1218, 0
        %v1230 = vsel %vm682, %v1224, 0
        %v1232 = vsel %vm682, %v1225, 0
        %1234 = vmatpush.msra.mxu0 0.0
        %1235 = vmatpush.msra.mxu0 0.0
        %1236 = vmatpush.msra.mxu0 0.0
        %1237 = vmatpush.msra.mxu0 0.0
        %1238 = vmatpush.msra.mxu0 0.0
        %1239 = vmatpush.msra.mxu0 0.0
        %1240 = vmatpush.msra.mxu0 0.0
        %1241 = vmatpush.msra.mxu0 0.0
        %1242 = vmatpush.msra.mxu0 0.0
        %1243 = vmatpush.msra.mxu0 0.0
        %1244 = vmatpush.msra.mxu0 0.0
        %1245 = vmatpush.msra.mxu0 0.0
        %1246 = vmatpush.msra.mxu0 0.0
        %1247 = vmatpush.msra.mxu0 0.0
        %1248 = vmatpush.msra.mxu0 0.0
        %1249 = vmatpush.msra.mxu0 %v1230
        %1250 = vmatmul.f32.gmra.mxu0 %v1228
        %v1251 = vpop.f32.mrf.mxu0
        %v1252 = vadd.f32 %v1221, %v1251
        %1253 = vdwg.mxu0
        %1254 = vmatpush.msra.mxu0 0.0
        %1255 = vmatpush.msra.mxu0 0.0
        %1256 = vmatpush.msra.mxu0 0.0
        %1257 = vmatpush.msra.mxu0 0.0
        %1258 = vmatpush.msra.mxu0 0.0
        %1259 = vmatpush.msra.mxu0 0.0
        %1260 = vmatpush.msra.mxu0 0.0
        %1261 = vmatpush.msra.mxu0 0.0
        %1262 = vmatpush.msra.mxu0 0.0
        %1263 = vmatpush.msra.mxu0 0.0
        %1264 = vmatpush.msra.mxu0 0.0
        %1265 = vmatpush.msra.mxu0 0.0
        %1266 = vmatpush.msra.mxu0 0.0
        %1267 = vmatpush.msra.mxu0 0.0
        %1268 = vmatpush.msra.mxu0 0.0
        %1269 = vmatpush.msra.mxu0 %v1232
        %1270 = vmatmul.f32.gmra.mxu0 %v1228
        %v1271 = vpop.f32.mrf.mxu0
        %v1272 = vadd.f32 %v1221, %v1271
        %1273 = vdwg.mxu0
        %v1274 = vadd.f32 %v1196, %v1252
        %v1275 = vadd.f32 %v1216, %v1272
        %v1278 = vrot.slane %v1275, 4
        %v1279 = vsel %vm682, %v1274, %v1278
        %v1280 = vsel %vm682, %v1278, %v1274
        %v1281 = vrot.slane %v1280, 4
        %1284 = vst [vmem:[#allocation1] ss:$2 sm:$0xff] %v1279
        %v1285 = vld.sshfl [vmem:[#allocation1] sm:$0xff pattern:$0x75316420]
        %v1286 = vld.sshfl [vmem:[#allocation1 + $0x8] sm:$0xff pattern:$0x75316420]
        %s1287 = scalar_lea.vmem [#allocation1], 16
        %1288 = vst [vmem:[%s1287] ss:$2 sm:$0xff] %v1281
        %v1289 = vld.sshfl [vmem:[#allocation1 + $0x10] sm:$0xff pattern:$0x75316420]
        %v1290 = vld.sshfl [vmem:[#allocation1 + $0x18] sm:$0xff pattern:$0x75316420]
        %v1295 = vsel %vm682, %v1285, 0.0
        %v1296 = vsel %vm682, %v1286, 0.0
        %v1297 = vadd.f32 %v1295, %v1296
        %1298 = vadd.xlane.f32.xlu0 %v1297
        %v1299 = vpop.xlane.xlu0 %1298
        %v1300 = vsel %vm682, %v1289, 0.0
        %v1301 = vsel %vm682, %v1290, 0.0
        %v1302 = vadd.f32 %v1300, %v1301
        %1303 = vadd.xlane.f32.xlu0 %v1302
        %v1304 = vpop.xlane.xlu0 %1303
        %v1305 = vsel %vm682, %v1299, 0.0
        %v1306 = vrot.slane %v1305, 4
        %v1307 = vadd.f32 %v1305, %v1306
        %v1308 = vrot.slane %v1307, 2
        %v1309 = vadd.f32 %v1307, %v1308
        %v1310 = vrot.slane %v1309, 1
        %v1311 = vadd.f32 %v1309, %v1310
        %v1312 = vsel %vm682, %v1304, 0.0
        %v1313 = vrot.slane %v1312, 4
        %v1314 = vadd.f32 %v1312, %v1313
        %v1315 = vrot.slane %v1314, 2
        %v1316 = vadd.f32 %v1314, %v1315
        %v1317 = vrot.slane %v1316, 1
        %v1318 = vadd.f32 %v1316, %v1317
        %v1319 = vmul.f32 %v1311, 0.0009765625
        %v1320 = vmul.f32 %v1318, 0.0009765625
        %v1321 = vsub.f32 %v1279, %v1319
        %v1322 = vsub.f32 %v1281, %v1320
        %v1323 = vmul.f32 %v1321, %v1321
        %v1324 = vmul.f32 %v1322, %v1322
        %1327 = vst [vmem:[#allocation1] ss:$2 sm:$0xff] %v1323
        %v1328 = vld.sshfl [vmem:[#allocation1] sm:$0xff pattern:$0x75316420]
        %v1329 = vld.sshfl [vmem:[#allocation1 + $0x8] sm:$0xff pattern:$0x75316420]
        %s1330 = scalar_lea.vmem [#allocation1], 16
        %1331 = vst [vmem:[%s1330] ss:$2 sm:$0xff] %v1324
        %v1332 = vld.sshfl [vmem:[#allocation1 + $0x10] sm:$0xff pattern:$0x75316420]
        %v1333 = vld.sshfl [vmem:[#allocation1 + $0x18] sm:$0xff pattern:$0x75316420]
        %v1338 = vsel %vm682, %v1328, 0.0
        %v1339 = vsel %vm682, %v1329, 0.0
        %v1340 = vadd.f32 %v1338, %v1339
        %1341 = vadd.xlane.f32.xlu0 %v1340
        %v1342 = vpop.xlane.xlu0 %1341
        %v1343 = vsel %vm682, %v1332, 0.0
        %v1344 = vsel %vm682, %v1333, 0.0
        %v1345 = vadd.f32 %v1343, %v1344
        %1346 = vadd.xlane.f32.xlu0 %v1345
        %v1347 = vpop.xlane.xlu0 %1346
        %v1348 = vsel %vm682, %v1342, 0.0
        %v1349 = vrot.slane %v1348, 4
        %v1350 = vadd.f32 %v1348, %v1349
        %v1351 = vrot.slane %v1350, 2
        %v1352 = vadd.f32 %v1350, %v1351
        %v1353 = vrot.slane %v1352, 1
        %v1354 = vadd.f32 %v1352, %v1353
        %v1355 = vsel %vm682, %v1347, 0.0
        %v1356 = vrot.slane %v1355, 4
        %v1357 = vadd.f32 %v1355, %v1356
        %v1358 = vrot.slane %v1357, 2
        %v1359 = vadd.f32 %v1357, %v1358
        %v1360 = vrot.slane %v1359, 1
        %v1361 = vadd.f32 %v1359, %v1360
        %v1362 = vmul.f32 %v1354, 0.0009765625
        %v1363 = vmul.f32 %v1361, 0.0009765625
        %v1364 = vadd.f32 %v1362, 1e-05
        %v1365 = vadd.f32 %v1363, 1e-05
        %v1366 = vrsqrt.pop %v1364
        %v1367 = vmul.f32 %v1366, %v1364
        %v1368 = vmul.f32 %v1367, %v1366
        %v1369 = vmul.f32 0.5, %v1368
        %v1370 = vsub.f32 1.5, %v1369
        %v1371 = vmul.f32 %v1366, %v1370
        %vm1372 = vweird.f32 %v1364
        %vm1373 = vweird.f32 %v1366
        %vm1374 = vmor %vm1372, %vm1373
        %v1375 = vsel %vm1374, %v1366, %v1371
        %v1376 = vrsqrt.pop %v1365
        %v1377 = vmul.f32 %v1376, %v1365
        %v1378 = vmul.f32 %v1377, %v1376
        %v1379 = vmul.f32 0.5, %v1378
        %v1380 = vsub.f32 1.5, %v1379
        %v1381 = vmul.f32 %v1376, %v1380
        %vm1382 = vweird.f32 %v1365
        %vm1383 = vweird.f32 %v1376
        %vm1384 = vmor %vm1382, %vm1383
        %v1385 = vsel %vm1384, %v1376, %v1381
        %v1386 = vmul.f32 %v1375, %v477
        %v1387 = vmul.f32 %v1385, %v963
        %1389 = vset.pattern.permute.xlu0 5
        %1390 = vperm.xlu0 %1389, %v1386
        %v1391 = vpop.permute.xlu0 %1390
        %v1394 = vunpack.c.l.s4 839922192
        %v1395 = vunpack.c.0.s8 %v1394
        %v1396 = vperm.slane %v1391, %v1395
        %1398 = vset.pattern.permute.xlu0 5
        %1399 = vperm.xlu0 %1398, %v1387
        %v1400 = vpop.permute.xlu0 %1399
        %v1403 = vunpack.c.l.s4 839922192
        %v1404 = vunpack.c.0.s8 %v1403
        %v1405 = vperm.slane %v1400, %v1404
        %v1406 = vmul.f32 %v1321, %v1396
        %v1407 = vmul.f32 %v1322, %v1405
        %1408 = vset.pattern.permute.xlu0 6
        %1409 = vperm.xlu0 %1408, %v477
        %v1410 = vpop.permute.xlu0 %1409
        %v1413 = vunpack.c.l.s4 839922192
        %v1414 = vunpack.c.0.s8 %v1413
        %v1415 = vperm.slane %v1410, %v1414
        %1416 = vset.pattern.permute.xlu0 6
        %1417 = vperm.xlu0 %1416, %v963
        %v1418 = vpop.permute.xlu0 %1417
        %v1421 = vunpack.c.l.s4 839922192
        %v1422 = vunpack.c.0.s8 %v1421
        %v1423 = vperm.slane %v1418, %v1422
        %v1424 = vadd.f32 %v1406, %v1415
        %v1425 = vadd.f32 %v1407, %v1423
        %v1426 = vld [vmem:[%s7] sm:$0xff]
        %1429 = vst [vmem:[#allocation1] ss:$2 sm:$0xff] %v1424
        %s1430 = scalar_lea.vmem [#allocation1], 1
        %1431 = vst [vmem:[%s1430] ss:$2 sm:$0xff] %v1425
        %v1432 = vld.sshfl [vmem:[#allocation1] sm:$0xff pattern:$0x75316420]
        %v1433 = vld.sshfl [vmem:[#allocation1 + $0x8] sm:$0xff pattern:$0x75316420]
        %vm1436 = vcmask 64512
        %v1438 = vsel %vm1436, %v1426, 0
        %1440 = vmatpush.msra.mxu0 0.0
        %1441 = vmatpush.msra.mxu0 0.0
        %1442 = vmatpush.msra.mxu0 0.0
        %1443 = vmatpush.msra.mxu0 0.0
        %1444 = vmatpush.msra.mxu0 0.0
        %1445 = vmatpush.msra.mxu0 0.0
        %1446 = vmatpush.msra.mxu0 0.0
        %1447 = vmatpush.msra.mxu0 0.0
        %1448 = vmatpush.msra.mxu0 0.0
        %1449 = vmatpush.msra.mxu0 0.0
        %1450 = vmatpush.msra.mxu0 0.0
        %1451 = vmatpush.msra.mxu0 0.0
        %1452 = vmatpush.msra.mxu0 0.0
        %1453 = vmatpush.msra.mxu0 0.0
        %1454 = vmatpush.msra.mxu0 0.0
        %1455 = vmatpush.msra.mxu0 %v1432
        %1456 = vmatmul.f32.gmra.mxu0 %v1438
        %v1457 = vpop.f32.mrf.mxu0
        %v1458 = vadd.f32 0.0, %v1457
        %1459 = vdwg.mxu0
        %1460 = vmatpush.msra.mxu0 0.0
        %1461 = vmatpush.msra.mxu0 0.0
        %1462 = vmatpush.msra.mxu0 0.0
        %1463 = vmatpush.msra.mxu0 0.0
        %1464 = vmatpush.msra.mxu0 0.0
        %1465 = vmatpush.msra.mxu0 0.0
        %1466 = vmatpush.msra.mxu0 0.0
        %1467 = vmatpush.msra.mxu0 0.0
        %1468 = vmatpush.msra.mxu0 0.0
        %1469 = vmatpush.msra.mxu0 0.0
        %1470 = vmatpush.msra.mxu0 0.0
        %1471 = vmatpush.msra.mxu0 0.0
        %1472 = vmatpush.msra.mxu0 0.0
        %1473 = vmatpush.msra.mxu0 0.0
        %1474 = vmatpush.msra.mxu0 0.0
        %1475 = vmatpush.msra.mxu0 %v1433
        %1476 = vmatmul.f32.gmra.mxu0 %v1438
        %v1477 = vpop.f32.mrf.mxu0
        %v1478 = vadd.f32 0.0, %v1477
        %1479 = vdwg.mxu0
        %v1480 = vld [vmem:[#allocation7] sm:$0xff]
        %1481 = vst [vmem:[#allocation1] ss:$2 sm:$0xff] %v1424
        %s1482 = scalar_lea.vmem [#allocation1], 1
        %1483 = vst [vmem:[%s1482] ss:$2 sm:$0xff] %v1425
        %v1484 = vld.sshfl [vmem:[#allocation1] sm:$0xff pattern:$0x75316420]
        %v1485 = vld.sshfl [vmem:[#allocation1 + $0x8] sm:$0xff pattern:$0x75316420]
        %v1489 = vsel %vm1436, %v1480, 0
        %1491 = vmatpush.msra.mxu0 0.0
        %1492 = vmatpush.msra.mxu0 0.0
        %1493 = vmatpush.msra.mxu0 0.0
        %1494 = vmatpush.msra.mxu0 0.0
        %1495 = vmatpush.msra.mxu0 0.0
        %1496 = vmatpush.msra.mxu0 0.0
        %1497 = vmatpush.msra.mxu0 0.0
        %1498 = vmatpush.msra.mxu0 0.0
        %1499 = vmatpush.msra.mxu0 0.0
        %1500 = vmatpush.msra.mxu0 0.0
        %1501 = vmatpush.msra.mxu0 0.0
        %1502 = vmatpush.msra.mxu0 0.0
        %1503 = vmatpush.msra.mxu0 0.0
        %1504 = vmatpush.msra.mxu0 0.0
        %1505 = vmatpush.msra.mxu0 0.0
        %1506 = vmatpush.msra.mxu0 %v1484
        %1507 = vmatmul.f32.gmra.mxu0 %v1489
        %v1508 = vpop.f32.mrf.mxu0
        %v1509 = vadd.f32 0.0, %v1508
        %1510 = vdwg.mxu0
        %1511 = vmatpush.msra.mxu0 0.0
        %1512 = vmatpush.msra.mxu0 0.0
        %1513 = vmatpush.msra.mxu0 0.0
        %1514 = vmatpush.msra.mxu0 0.0
        %1515 = vmatpush.msra.mxu0 0.0
        %1516 = vmatpush.msra.mxu0 0.0
        %1517 = vmatpush.msra.mxu0 0.0
        %1518 = vmatpush.msra.mxu0 0.0
        %1519 = vmatpush.msra.mxu0 0.0
        %1520 = vmatpush.msra.mxu0 0.0
        %1521 = vmatpush.msra.mxu0 0.0
        %1522 = vmatpush.msra.mxu0 0.0
        %1523 = vmatpush.msra.mxu0 0.0
        %1524 = vmatpush.msra.mxu0 0.0
        %1525 = vmatpush.msra.mxu0 0.0
        %1526 = vmatpush.msra.mxu0 %v1485
        %1527 = vmatmul.f32.gmra.mxu0 %v1489
        %v1528 = vpop.f32.mrf.mxu0
        %v1529 = vadd.f32 0.0, %v1528
        %1530 = vdwg.mxu0
        %v1531 = vld [vmem:[#allocation8] sm:$0xff]
        %1532 = vst [vmem:[#allocation1] ss:$2 sm:$0xff] %v1424
        %s1533 = scalar_lea.vmem [#allocation1], 1
        %1534 = vst [vmem:[%s1533] ss:$2 sm:$0xff] %v1425
        %v1535 = vld.sshfl [vmem:[#allocation1] sm:$0xff pattern:$0x75316420]
        %v1536 = vld.sshfl [vmem:[#allocation1 + $0x8] sm:$0xff pattern:$0x75316420]
        %v1540 = vsel %vm1436, %v1531, 0
        %1542 = vmatpush.msra.mxu0 0.0
        %1543 = vmatpush.msra.mxu0 0.0
        %1544 = vmatpush.msra.mxu0 0.0
        %1545 = vmatpush.msra.mxu0 0.0
        %1546 = vmatpush.msra.mxu0 0.0
        %1547 = vmatpush.msra.mxu0 0.0
        %1548 = vmatpush.msra.mxu0 0.0
        %1549 = vmatpush.msra.mxu0 0.0
        %1550 = vmatpush.msra.mxu0 0.0
        %1551 = vmatpush.msra.mxu0 0.0
        %1552 = vmatpush.msra.mxu0 0.0
        %1553 = vmatpush.msra.mxu0 0.0
        %1554 = vmatpush.msra.mxu0 0.0
        %1555 = vmatpush.msra.mxu0 0.0
        %1556 = vmatpush.msra.mxu0 0.0
        %1557 = vmatpush.msra.mxu0 %v1535
        %1558 = vmatmul.f32.gmra.mxu0 %v1540
        %v1559 = vpop.f32.mrf.mxu0
        %v1560 = vadd.f32 0.0, %v1559
        %1561 = vdwg.mxu0
        %1562 = vmatpush.msra.mxu0 0.0
        %1563 = vmatpush.msra.mxu0 0.0
        %1564 = vmatpush.msra.mxu0 0.0
        %1565 = vmatpush.msra.mxu0 0.0
        %1566 = vmatpush.msra.mxu0 0.0
        %1567 = vmatpush.msra.mxu0 0.0
        %1568 = vmatpush.msra.mxu0 0.0
        %1569 = vmatpush.msra.mxu0 0.0
        %1570 = vmatpush.msra.mxu0 0.0
        %1571 = vmatpush.msra.mxu0 0.0
        %1572 = vmatpush.msra.mxu0 0.0
        %1573 = vmatpush.msra.mxu0 0.0
        %1574 = vmatpush.msra.mxu0 0.0
        %1575 = vmatpush.msra.mxu0 0.0
        %1576 = vmatpush.msra.mxu0 0.0
        %1577 = vmatpush.msra.mxu0 %v1536
        %1578 = vmatmul.f32.gmra.mxu0 %v1540
        %v1579 = vpop.f32.mrf.mxu0
        %v1580 = vadd.f32 0.0, %v1579
        %1581 = vdwg.mxu0
        %1582 = vxpose.xlu0.b32.start [1/16] %v1458, 128
        %1583 = vxpose.xlu0.b32.cont [2/16] 0.0, 128
        %1584 = vxpose.xlu0.b32.cont [3/16] 0.0, 128
        %1585 = vxpose.xlu0.b32.cont [4/16] 0.0, 128
        %1586 = vxpose.xlu0.b32.cont [5/16] 0.0, 128
        %1587 = vxpose.xlu0.b32.cont [6/16] 0.0, 128
        %1588 = vxpose.xlu0.b32.cont [7/16] 0.0, 128
        %1589 = vxpose.xlu0.b32.cont [8/16] 0.0, 128
        %1590 = vxpose.xlu0.b32.cont [9/16] 0.0, 128
        %1591 = vxpose.xlu0.b32.cont [10/16] 0.0, 128
        %1592 = vxpose.xlu0.b32.cont [11/16] 0.0, 128
        %1593 = vxpose.xlu0.b32.cont [12/16] 0.0, 128
        %1594 = vxpose.xlu0.b32.cont [13/16] 0.0, 128
        %1595 = vxpose.xlu0.b32.cont [14/16] 0.0, 128
        %1596 = vxpose.xlu0.b32.cont [15/16] 0.0, 128
        %1597 = vxpose.xlu0.b32.end [16/16] 0.0, 128
        %v1598 = vpop.trf.xlu0
        %v1599 = vpop.trf.xlu0
        %v1600 = vpop.trf.xlu0
        %v1601 = vpop.trf.xlu0
        %v1602 = vpop.trf.xlu0
        %v1603 = vpop.trf.xlu0
        %v1604 = vpop.trf.xlu0
        %v1605 = vpop.trf.xlu0
        %v1606 = vpop.trf.xlu0
        %v1607 = vpop.trf.xlu0
        %v1608 = vpop.trf.xlu0
        %v1609 = vpop.trf.xlu0
        %v1610 = vpop.trf.xlu0
        %v1611 = vpop.trf.xlu0
        %v1612 = vpop.trf.xlu0
        %v1613 = vpop.trf.xlu0
        %1614 = vxpose.xlu0.b32.start [1/16] %v1478, 128
        %1615 = vxpose.xlu0.b32.cont [2/16] 0.0, 128
        %1616 = vxpose.xlu0.b32.cont [3/16] 0.0, 128
        %1617 = vxpose.xlu0.b32.cont [4/16] 0.0, 128
        %1618 = vxpose.xlu0.b32.cont [5/16] 0.0, 128
        %1619 = vxpose.xlu0.b32.cont [6/16] 0.0, 128
        %1620 = vxpose.xlu0.b32.cont [7/16] 0.0, 128
        %1621 = vxpose.xlu0.b32.cont [8/16] 0.0, 128
        %1622 = vxpose.xlu0.b32.cont [9/16] 0.0, 128
        %1623 = vxpose.xlu0.b32.cont [10/16] 0.0, 128
        %1624 = vxpose.xlu0.b32.cont [11/16] 0.0, 128
        %1625 = vxpose.xlu0.b32.cont [12/16] 0.0, 128
        %1626 = vxpose.xlu0.b32.cont [13/16] 0.0, 128
        %1627 = vxpose.xlu0.b32.cont [14/16] 0.0, 128
        %1628 = vxpose.xlu0.b32.cont [15/16] 0.0, 128
        %1629 = vxpose.xlu0.b32.end [16/16] 0.0, 128
        %v1630 = vpop.trf.xlu0
        %v1631 = vpop.trf.xlu0
        %v1632 = vpop.trf.xlu0
        %v1633 = vpop.trf.xlu0
        %v1634 = vpop.trf.xlu0
        %v1635 = vpop.trf.xlu0
        %v1636 = vpop.trf.xlu0
        %v1637 = vpop.trf.xlu0
        %v1638 = vpop.trf.xlu0
        %v1639 = vpop.trf.xlu0
        %v1640 = vpop.trf.xlu0
        %v1641 = vpop.trf.xlu0
        %v1642 = vpop.trf.xlu0
        %v1643 = vpop.trf.xlu0
        %v1644 = vpop.trf.xlu0
        %v1645 = vpop.trf.xlu0
        %v1647 = vsel %vm1436, %v1598, 0
        %v1650 = vsel %vm1436, %v1599, 0
        %v1653 = vsel %vm1436, %v1600, 0
        %v1656 = vsel %vm1436, %v1601, 0
        %v1659 = vsel %vm1436, %v1602, 0
        %v1662 = vsel %vm1436, %v1603, 0
        %v1665 = vsel %vm1436, %v1604, 0
        %v1668 = vsel %vm1436, %v1605, 0
        %v1671 = vsel %vm1436, %v1606, 0
        %v1674 = vsel %vm1436, %v1607, 0
        %v1677 = vsel %vm1436, %v1608, 0
        %v1680 = vsel %vm1436, %v1609, 0
        %v1683 = vsel %vm1436, %v1610, 0
        %v1686 = vsel %vm1436, %v1611, 0
        %v1689 = vsel %vm1436, %v1612, 0
        %v1692 = vsel %vm1436, %v1613, 0
        %v1695 = vsel %vm1436, %v1630, 0
        %v1698 = vsel %vm1436, %v1631, 0
        %v1701 = vsel %vm1436, %v1632, 0
        %v1704 = vsel %vm1436, %v1633, 0
        %v1707 = vsel %vm1436, %v1634, 0
        %v1710 = vsel %vm1436, %v1635, 0
        %v1713 = vsel %vm1436, %v1636, 0
        %v1716 = vsel %vm1436, %v1637, 0
        %v1719 = vsel %vm1436, %v1638, 0
        %v1722 = vsel %vm1436, %v1639, 0
        %v1725 = vsel %vm1436, %v1640, 0
        %v1728 = vsel %vm1436, %v1641, 0
        %v1731 = vsel %vm1436, %v1642, 0
        %v1734 = vsel %vm1436, %v1643, 0
        %v1737 = vsel %vm1436, %v1644, 0
        %v1740 = vsel %vm1436, %v1645, 0
        %1742 = vmatpush.msra.mxu0 0.0
        %1743 = vmatpush.msra.mxu0 0.0
        %1744 = vmatpush.msra.mxu0 0.0
        %1745 = vmatpush.msra.mxu0 0.0
        %1746 = vmatpush.msra.mxu0 0.0
        %1747 = vmatpush.msra.mxu0 0.0
        %1748 = vmatpush.msra.mxu0 0.0
        %1749 = vmatpush.msra.mxu0 0.0
        %1750 = vmatpush.msra.mxu0 0.0
        %1751 = vmatpush.msra.mxu0 0.0
        %1752 = vmatpush.msra.mxu0 0.0
        %1753 = vmatpush.msra.mxu0 0.0
        %1754 = vmatpush.msra.mxu0 0.0
        %1755 = vmatpush.msra.mxu0 0.0
        %1756 = vmatpush.msra.mxu0 0.0
        %1757 = vmatpush.msra.mxu0 %v1509
        %1758 = vmatmul.f32.gmra.mxu0 %v1647
        %v1759 = vpop.f32.mrf.mxu0
        %v1760 = vadd.f32 0.0, %v1759
        %1761 = vmatmul.f32.gmra.mxu0 %v1650
        %v1762 = vpop.f32.mrf.mxu0
        %v1763 = vadd.f32 0.0, %v1762
        %1764 = vmatmul.f32.gmra.mxu0 %v1653
        %v1765 = vpop.f32.mrf.mxu0
        %v1766 = vadd.f32 0.0, %v1765
        %1767 = vmatmul.f32.gmra.mxu0 %v1656
        %v1768 = vpop.f32.mrf.mxu0
        %v1769 = vadd.f32 0.0, %v1768
        %1770 = vmatmul.f32.gmra.mxu0 %v1659
        %v1771 = vpop.f32.mrf.mxu0
        %v1772 = vadd.f32 0.0, %v1771
        %1773 = vmatmul.f32.gmra.mxu0 %v1662
        %v1774 = vpop.f32.mrf.mxu0
        %v1775 = vadd.f32 0.0, %v1774
        %1776 = vmatmul.f32.gmra.mxu0 %v1665
        %v1777 = vpop.f32.mrf.mxu0
        %v1778 = vadd.f32 0.0, %v1777
        %1779 = vmatmul.f32.gmra.mxu0 %v1668
        %v1780 = vpop.f32.mrf.mxu0
        %v1781 = vadd.f32 0.0, %v1780
        %1782 = vmatmul.f32.gmra.mxu0 %v1671
        %v1783 = vpop.f32.mrf.mxu0
        %v1784 = vadd.f32 0.0, %v1783
        %1785 = vmatmul.f32.gmra.mxu0 %v1674
        %v1786 = vpop.f32.mrf.mxu0
        %v1787 = vadd.f32 0.0, %v1786
        %1788 = vmatmul.f32.gmra.mxu0 %v1677
        %v1789 = vpop.f32.mrf.mxu0
        %v1790 = vadd.f32 0.0, %v1789
        %1791 = vmatmul.f32.gmra.mxu0 %v1680
        %v1792 = vpop.f32.mrf.mxu0
        %v1793 = vadd.f32 0.0, %v1792
        %1794 = vmatmul.f32.gmra.mxu0 %v1683
        %v1795 = vpop.f32.mrf.mxu0
        %v1796 = vadd.f32 0.0, %v1795
        %1797 = vmatmul.f32.gmra.mxu0 %v1686
        %v1798 = vpop.f32.mrf.mxu0
        %v1799 = vadd.f32 0.0, %v1798
        %1800 = vmatmul.f32.gmra.mxu0 %v1689
        %v1801 = vpop.f32.mrf.mxu0
        %v1802 = vadd.f32 0.0, %v1801
        %1803 = vmatmul.f32.gmra.mxu0 %v1692
        %v1804 = vpop.f32.mrf.mxu0
        %v1805 = vadd.f32 0.0, %v1804
        %1806 = vmatmul.f32.gmra.mxu0 %v1695
        %v1807 = vpop.f32.mrf.mxu0
        %v1808 = vadd.f32 0.0, %v1807
        %1809 = vmatmul.f32.gmra.mxu0 %v1698
        %v1810 = vpop.f32.mrf.mxu0
        %v1811 = vadd.f32 0.0, %v1810
        %1812 = vmatmul.f32.gmra.mxu0 %v1701
        %v1813 = vpop.f32.mrf.mxu0
        %v1814 = vadd.f32 0.0, %v1813
        %1815 = vmatmul.f32.gmra.mxu0 %v1704
        %v1816 = vpop.f32.mrf.mxu0
        %v1817 = vadd.f32 0.0, %v1816
        %1818 = vmatmul.f32.gmra.mxu0 %v1707
        %v1819 = vpop.f32.mrf.mxu0
        %v1820 = vadd.f32 0.0, %v1819
        %1821 = vmatmul.f32.gmra.mxu0 %v1710
        %v1822 = vpop.f32.mrf.mxu0
        %v1823 = vadd.f32 0.0, %v1822
        %1824 = vmatmul.f32.gmra.mxu0 %v1713
        %v1825 = vpop.f32.mrf.mxu0
        %v1826 = vadd.f32 0.0, %v1825
        %1827 = vmatmul.f32.gmra.mxu0 %v1716
        %v1828 = vpop.f32.mrf.mxu0
        %v1829 = vadd.f32 0.0, %v1828
        %1830 = vmatmul.f32.gmra.mxu0 %v1719
        %v1831 = vpop.f32.mrf.mxu0
        %v1832 = vadd.f32 0.0, %v1831
        %1833 = vmatmul.f32.gmra.mxu0 %v1722
        %v1834 = vpop.f32.mrf.mxu0
        %v1835 = vadd.f32 0.0, %v1834
        %1836 = vmatmul.f32.gmra.mxu0 %v1725
        %v1837 = vpop.f32.mrf.mxu0
        %v1838 = vadd.f32 0.0, %v1837
        %1839 = vmatmul.f32.gmra.mxu0 %v1728
        %v1840 = vpop.f32.mrf.mxu0
        %v1841 = vadd.f32 0.0, %v1840
        %1842 = vmatmul.f32.gmra.mxu0 %v1731
        %v1843 = vpop.f32.mrf.mxu0
        %v1844 = vadd.f32 0.0, %v1843
        %1845 = vmatmul.f32.gmra.mxu0 %v1734
        %v1846 = vpop.f32.mrf.mxu0
        %v1847 = vadd.f32 0.0, %v1846
        %1848 = vmatmul.f32.gmra.mxu0 %v1737
        %v1849 = vpop.f32.mrf.mxu0
        %v1850 = vadd.f32 0.0, %v1849
        %1851 = vmatmul.f32.gmra.mxu0 %v1740
        %v1852 = vpop.f32.mrf.mxu0
        %v1853 = vadd.f32 0.0, %v1852
        %1854 = vdwg.mxu0
        %1855 = vmatpush.msra.mxu0 0.0
        %1856 = vmatpush.msra.mxu0 0.0
        %1857 = vmatpush.msra.mxu0 0.0
        %1858 = vmatpush.msra.mxu0 0.0
        %1859 = vmatpush.msra.mxu0 0.0
        %1860 = vmatpush.msra.mxu0 0.0
        %1861 = vmatpush.msra.mxu0 0.0
        %1862 = vmatpush.msra.mxu0 0.0
        %1863 = vmatpush.msra.mxu0 0.0
        %1864 = vmatpush.msra.mxu0 0.0
        %1865 = vmatpush.msra.mxu0 0.0
        %1866 = vmatpush.msra.mxu0 0.0
        %1867 = vmatpush.msra.mxu0 0.0
        %1868 = vmatpush.msra.mxu0 0.0
        %1869 = vmatpush.msra.mxu0 0.0
        %1870 = vmatpush.msra.mxu0 %v1529
        %1871 = vmatmul.f32.gmra.mxu0 %v1647
        %v1872 = vpop.f32.mrf.mxu0
        %v1873 = vadd.f32 0.0, %v1872
        %1874 = vmatmul.f32.gmra.mxu0 %v1650
        %v1875 = vpop.f32.mrf.mxu0
        %v1876 = vadd.f32 0.0, %v1875
        %1877 = vmatmul.f32.gmra.mxu0 %v1653
        %v1878 = vpop.f32.mrf.mxu0
        %v1879 = vadd.f32 0.0, %v1878
        %1880 = vmatmul.f32.gmra.mxu0 %v1656
        %v1881 = vpop.f32.mrf.mxu0
        %v1882 = vadd.f32 0.0, %v1881
        %1883 = vmatmul.f32.gmra.mxu0 %v1659
        %v1884 = vpop.f32.mrf.mxu0
        %v1885 = vadd.f32 0.0, %v1884
        %1886 = vmatmul.f32.gmra.mxu0 %v1662
        %v1887 = vpop.f32.mrf.mxu0
        %v1888 = vadd.f32 0.0, %v1887
        %1889 = vmatmul.f32.gmra.mxu0 %v1665
        %v1890 = vpop.f32.mrf.mxu0
        %v1891 = vadd.f32 0.0, %v1890
        %1892 = vmatmul.f32.gmra.mxu0 %v1668
        %v1893 = vpop.f32.mrf.mxu0
        %v1894 = vadd.f32 0.0, %v1893
        %1895 = vmatmul.f32.gmra.mxu0 %v1671
        %v1896 = vpop.f32.mrf.mxu0
        %v1897 = vadd.f32 0.0, %v1896
        %1898 = vmatmul.f32.gmra.mxu0 %v1674
        %v1899 = vpop.f32.mrf.mxu0
        %v1900 = vadd.f32 0.0, %v1899
        %1901 = vmatmul.f32.gmra.mxu0 %v1677
        %v1902 = vpop.f32.mrf.mxu0
        %v1903 = vadd.f32 0.0, %v1902
        %1904 = vmatmul.f32.gmra.mxu0 %v1680
        %v1905 = vpop.f32.mrf.mxu0
        %v1906 = vadd.f32 0.0, %v1905
        %1907 = vmatmul.f32.gmra.mxu0 %v1683
        %v1908 = vpop.f32.mrf.mxu0
        %v1909 = vadd.f32 0.0, %v1908
        %1910 = vmatmul.f32.gmra.mxu0 %v1686
        %v1911 = vpop.f32.mrf.mxu0
        %v1912 = vadd.f32 0.0, %v1911
        %1913 = vmatmul.f32.gmra.mxu0 %v1689
        %v1914 = vpop.f32.mrf.mxu0
        %v1915 = vadd.f32 0.0, %v1914
        %1916 = vmatmul.f32.gmra.mxu0 %v1692
        %v1917 = vpop.f32.mrf.mxu0
        %v1918 = vadd.f32 0.0, %v1917
        %1919 = vmatmul.f32.gmra.mxu0 %v1695
        %v1920 = vpop.f32.mrf.mxu0
        %v1921 = vadd.f32 0.0, %v1920
        %1922 = vmatmul.f32.gmra.mxu0 %v1698
        %v1923 = vpop.f32.mrf.mxu0
        %v1924 = vadd.f32 0.0, %v1923
        %1925 = vmatmul.f32.gmra.mxu0 %v1701
        %v1926 = vpop.f32.mrf.mxu0
        %v1927 = vadd.f32 0.0, %v1926
        %1928 = vmatmul.f32.gmra.mxu0 %v1704
        %v1929 = vpop.f32.mrf.mxu0
        %v1930 = vadd.f32 0.0, %v1929
        %1931 = vmatmul.f32.gmra.mxu0 %v1707
        %v1932 = vpop.f32.mrf.mxu0
        %v1933 = vadd.f32 0.0, %v1932
        %1934 = vmatmul.f32.gmra.mxu0 %v1710
        %v1935 = vpop.f32.mrf.mxu0
        %v1936 = vadd.f32 0.0, %v1935
        %1937 = vmatmul.f32.gmra.mxu0 %v1713
        %v1938 = vpop.f32.mrf.mxu0
        %v1939 = vadd.f32 0.0, %v1938
        %1940 = vmatmul.f32.gmra.mxu0 %v1716
        %v1941 = vpop.f32.mrf.mxu0
        %v1942 = vadd.f32 0.0, %v1941
        %1943 = vmatmul.f32.gmra.mxu0 %v1719
        %v1944 = vpop.f32.mrf.mxu0
        %v1945 = vadd.f32 0.0, %v1944
        %1946 = vmatmul.f32.gmra.mxu0 %v1722
        %v1947 = vpop.f32.mrf.mxu0
        %v1948 = vadd.f32 0.0, %v1947
        %1949 = vmatmul.f32.gmra.mxu0 %v1725
        %v1950 = vpop.f32.mrf.mxu0
        %v1951 = vadd.f32 0.0, %v1950
        %1952 = vmatmul.f32.gmra.mxu0 %v1728
        %v1953 = vpop.f32.mrf.mxu0
        %v1954 = vadd.f32 0.0, %v1953
        %1955 = vmatmul.f32.gmra.mxu0 %v1731
        %v1956 = vpop.f32.mrf.mxu0
        %v1957 = vadd.f32 0.0, %v1956
        %1958 = vmatmul.f32.gmra.mxu0 %v1734
        %v1959 = vpop.f32.mrf.mxu0
        %v1960 = vadd.f32 0.0, %v1959
        %1961 = vmatmul.f32.gmra.mxu0 %v1737
        %v1962 = vpop.f32.mrf.mxu0
        %v1963 = vadd.f32 0.0, %v1962
        %1964 = vmatmul.f32.gmra.mxu0 %v1740
        %v1965 = vpop.f32.mrf.mxu0
        %v1966 = vadd.f32 0.0, %v1965
        %1967 = vdwg.mxu0
        %v1968 = vmul.f32 %v1760, 0.35355338
        %v1969 = vmul.f32 %v1873, 0.35355338
        %v1970 = vmul.f32 %v1763, 0.35355338
        %v1971 = vmul.f32 %v1876, 0.35355338
        %v1972 = vmul.f32 %v1766, 0.35355338
        %v1973 = vmul.f32 %v1879, 0.35355338
        %v1974 = vmul.f32 %v1769, 0.35355338
        %v1975 = vmul.f32 %v1882, 0.35355338
        %v1976 = vmul.f32 %v1772, 0.35355338
        %v1977 = vmul.f32 %v1885, 0.35355338
        %v1978 = vmul.f32 %v1775, 0.35355338
        %v1979 = vmul.f32 %v1888, 0.35355338
        %v1980 = vmul.f32 %v1778, 0.35355338
        %v1981 = vmul.f32 %v1891, 0.35355338
        %v1982 = vmul.f32 %v1781, 0.35355338
        %v1983 = vmul.f32 %v1894, 0.35355338
        %v1984 = vmul.f32 %v1784, 0.35355338
        %v1985 = vmul.f32 %v1897, 0.35355338
        %v1986 = vmul.f32 %v1787, 0.35355338
        %v1987 = vmul.f32 %v1900, 0.35355338
        %v1988 = vmul.f32 %v1790, 0.35355338
        %v1989 = vmul.f32 %v1903, 0.35355338
        %v1990 = vmul.f32 %v1793, 0.35355338
        %v1991 = vmul.f32 %v1906, 0.35355338
        %v1992 = vmul.f32 %v1796, 0.35355338
        %v1993 = vmul.f32 %v1909, 0.35355338
        %v1994 = vmul.f32 %v1799, 0.35355338
        %v1995 = vmul.f32 %v1912, 0.35355338
        %v1996 = vmul.f32 %v1802, 0.35355338
        %v1997 = vmul.f32 %v1915, 0.35355338
        %v1998 = vmul.f32 %v1805, 0.35355338
        %v1999 = vmul.f32 %v1918, 0.35355338
        %v2000 = vmul.f32 %v1808, 0.35355338
        %v2001 = vmul.f32 %v1921, 0.35355338
        %v2002 = vmul.f32 %v1811, 0.35355338
        %v2003 = vmul.f32 %v1924, 0.35355338
        %v2004 = vmul.f32 %v1814, 0.35355338
        %v2005 = vmul.f32 %v1927, 0.35355338
        %v2006 = vmul.f32 %v1817, 0.35355338
        %v2007 = vmul.f32 %v1930, 0.35355338
        %v2008 = vmul.f32 %v1820, 0.35355338
        %v2009 = vmul.f32 %v1933, 0.35355338
        %v2010 = vmul.f32 %v1823, 0.35355338
        %v2011 = vmul.f32 %v1936, 0.35355338
        %v2012 = vmul.f32 %v1826, 0.35355338
        %v2013 = vmul.f32 %v1939, 0.35355338
        %v2014 = vmul.f32 %v1829, 0.35355338
        %v2015 = vmul.f32 %v1942, 0.35355338
        %v2016 = vmul.f32 %v1832, 0.35355338
        %v2017 = vmul.f32 %v1945, 0.35355338
        %v2018 = vmul.f32 %v1835, 0.35355338
        %v2019 = vmul.f32 %v1948, 0.35355338
        %v2020 = vmul.f32 %v1838, 0.35355338
        %v2021 = vmul.f32 %v1951, 0.35355338
        %v2022 = vmul.f32 %v1841, 0.35355338
        %v2023 = vmul.f32 %v1954, 0.35355338
        %v2024 = vmul.f32 %v1844, 0.35355338
        %v2025 = vmul.f32 %v1957, 0.35355338
        %v2026 = vmul.f32 %v1847, 0.35355338
        %v2027 = vmul.f32 %v1960, 0.35355338
        %v2028 = vmul.f32 %v1850, 0.35355338
        %v2029 = vmul.f32 %v1963, 0.35355338
        %v2030 = vmul.f32 %v1853, 0.35355338
        %v2031 = vmul.f32 %v1966, 0.35355338
        %v2032 = vmax.f32 %v1968, %v1969
        %2033 = vmax.xlane.f32.xlu0 %v2032
        %v2034 = vpop.xlane.xlu0 %2033
        %v2035 = vmax.f32 %v1970, %v1971
        %2036 = vmax.xlane.f32.xlu0 %v2035
        %v2037 = vpop.xlane.xlu0 %2036
        %v2038 = vmax.f32 %v1972, %v1973
        %2039 = vmax.xlane.f32.xlu0 %v2038
        %v2040 = vpop.xlane.xlu0 %2039
        %v2041 = vmax.f32 %v1974, %v1975
        %2042 = vmax.xlane.f32.xlu0 %v2041
        %v2043 = vpop.xlane.xlu0 %2042
        %v2044 = vmax.f32 %v1976, %v1977
        %2045 = vmax.xlane.f32.xlu0 %v2044
        %v2046 = vpop.xlane.xlu0 %2045
        %v2047 = vmax.f32 %v1978, %v1979
        %2048 = vmax.xlane.f32.xlu0 %v2047
        %v2049 = vpop.xlane.xlu0 %2048
        %v2050 = vmax.f32 %v1980, %v1981
        %2051 = vmax.xlane.f32.xlu0 %v2050
        %v2052 = vpop.xlane.xlu0 %2051
        %v2053 = vmax.f32 %v1982, %v1983
        %2054 = vmax.xlane.f32.xlu0 %v2053
        %v2055 = vpop.xlane.xlu0 %2054
        %v2056 = vmax.f32 %v1984, %v1985
        %2057 = vmax.xlane.f32.xlu0 %v2056
        %v2058 = vpop.xlane.xlu0 %2057
        %v2059 = vmax.f32 %v1986, %v1987
        %2060 = vmax.xlane.f32.xlu0 %v2059
        %v2061 = vpop.xlane.xlu0 %2060
        %v2062 = vmax.f32 %v1988, %v1989
        %2063 = vmax.xlane.f32.xlu0 %v2062
        %v2064 = vpop.xlane.xlu0 %2063
        %v2065 = vmax.f32 %v1990, %v1991
        %2066 = vmax.xlane.f32.xlu0 %v2065
        %v2067 = vpop.xlane.xlu0 %2066
        %v2068 = vmax.f32 %v1992, %v1993
        %2069 = vmax.xlane.f32.xlu0 %v2068
        %v2070 = vpop.xlane.xlu0 %2069
        %v2071 = vmax.f32 %v1994, %v1995
        %2072 = vmax.xlane.f32.xlu0 %v2071
        %v2073 = vpop.xlane.xlu0 %2072
        %v2074 = vmax.f32 %v1996, %v1997
        %2075 = vmax.xlane.f32.xlu0 %v2074
        %v2076 = vpop.xlane.xlu0 %2075
        %v2077 = vmax.f32 %v1998, %v1999
        %2078 = vmax.xlane.f32.xlu0 %v2077
        %v2079 = vpop.xlane.xlu0 %2078
        %v2080 = vmax.f32 %v2000, %v2001
        %2081 = vmax.xlane.f32.xlu0 %v2080
        %v2082 = vpop.xlane.xlu0 %2081
        %v2083 = vmax.f32 %v2002, %v2003
        %2084 = vmax.xlane.f32.xlu0 %v2083
        %v2085 = vpop.xlane.xlu0 %2084
        %v2086 = vmax.f32 %v2004, %v2005
        %2087 = vmax.xlane.f32.xlu0 %v2086
        %v2088 = vpop.xlane.xlu0 %2087
        %v2089 = vmax.f32 %v2006, %v2007
        %2090 = vmax.xlane.f32.xlu0 %v2089
        %v2091 = vpop.xlane.xlu0 %2090
        %v2092 = vmax.f32 %v2008, %v2009
        %2093 = vmax.xlane.f32.xlu0 %v2092
        %v2094 = vpop.xlane.xlu0 %2093
        %v2095 = vmax.f32 %v2010, %v2011
        %2096 = vmax.xlane.f32.xlu0 %v2095
        %v2097 = vpop.xlane.xlu0 %2096
        %v2098 = vmax.f32 %v2012, %v2013
        %2099 = vmax.xlane.f32.xlu0 %v2098
        %v2100 = vpop.xlane.xlu0 %2099
        %v2101 = vmax.f32 %v2014, %v2015
        %2102 = vmax.xlane.f32.xlu0 %v2101
        %v2103 = vpop.xlane.xlu0 %2102
        %v2104 = vmax.f32 %v2016, %v2017
        %2105 = vmax.xlane.f32.xlu0 %v2104
        %v2106 = vpop.xlane.xlu0 %2105
        %v2107 = vmax.f32 %v2018, %v2019
        %2108 = vmax.xlane.f32.xlu0 %v2107
        %v2109 = vpop.xlane.xlu0 %2108
        %v2110 = vmax.f32 %v2020, %v2021
        %2111 = vmax.xlane.f32.xlu0 %v2110
        %v2112 = vpop.xlane.xlu0 %2111
        %v2113 = vmax.f32 %v2022, %v2023
        %2114 = vmax.xlane.f32.xlu0 %v2113
        %v2115 = vpop.xlane.xlu0 %2114
        %v2116 = vmax.f32 %v2024, %v2025
        %2117 = vmax.xlane.f32.xlu0 %v2116
        %v2118 = vpop.xlane.xlu0 %2117
        %v2119 = vmax.f32 %v2026, %v2027
        %2120 = vmax.xlane.f32.xlu0 %v2119
        %v2121 = vpop.xlane.xlu0 %2120
        %v2122 = vmax.f32 %v2028, %v2029
        %2123 = vmax.xlane.f32.xlu0 %v2122
        %v2124 = vpop.xlane.xlu0 %2123
        %v2125 = vmax.f32 %v2030, %v2031
        %2126 = vmax.xlane.f32.xlu0 %v2125
        %v2127 = vpop.xlane.xlu0 %2126
        %v2128 = vsub.f32 %v1968, %v2034
        %v2129 = vsub.f32 %v1969, %v2034
        %v2130 = vsub.f32 %v1970, %v2037
        %v2131 = vsub.f32 %v1971, %v2037
        %v2132 = vsub.f32 %v1972, %v2040
        %v2133 = vsub.f32 %v1973, %v2040
        %v2134 = vsub.f32 %v1974, %v2043
        %v2135 = vsub.f32 %v1975, %v2043
        %v2136 = vsub.f32 %v1976, %v2046
        %v2137 = vsub.f32 %v1977, %v2046
        %v2138 = vsub.f32 %v1978, %v2049
        %v2139 = vsub.f32 %v1979, %v2049
        %v2140 = vsub.f32 %v1980, %v2052
        %v2141 = vsub.f32 %v1981, %v2052
        %v2142 = vsub.f32 %v1982, %v2055
        %v2143 = vsub.f32 %v1983, %v2055
        %v2144 = vsub.f32 %v1984, %v2058
        %v2145 = vsub.f32 %v1985, %v2058
        %v2146 = vsub.f32 %v1986, %v2061
        %v2147 = vsub.f32 %v1987, %v2061
        %v2148 = vsub.f32 %v1988, %v2064
        %v2149 = vsub.f32 %v1989, %v2064
        %v2150 = vsub.f32 %v1990, %v2067
        %v2151 = vsub.f32 %v1991, %v2067
        %v2152 = vsub.f32 %v1992, %v2070
        %v2153 = vsub.f32 %v1993, %v2070
        %v2154 = vsub.f32 %v1994, %v2073
        %v2155 = vsub.f32 %v1995, %v2073
        %v2156 = vsub.f32 %v1996, %v2076
        %v2157 = vsub.f32 %v1997, %v2076
        %v2158 = vsub.f32 %v1998, %v2079
        %v2159 = vsub.f32 %v1999, %v2079
        %v2160 = vsub.f32 %v2000, %v2082
        %v2161 = vsub.f32 %v2001, %v2082
        %v2162 = vsub.f32 %v2002, %v2085
        %v2163 = vsub.f32 %v2003, %v2085
        %v2164 = vsub.f32 %v2004, %v2088
        %v2165 = vsub.f32 %v2005, %v2088
        %v2166 = vsub.f32 %v2006, %v2091
        %v2167 = vsub.f32 %v2007, %v2091
        %v2168 = vsub.f32 %v2008, %v2094
        %v2169 = vsub.f32 %v2009, %v2094
        %v2170 = vsub.f32 %v2010, %v2097
        %v2171 = vsub.f32 %v2011, %v2097
        %v2172 = vsub.f32 %v2012, %v2100
        %v2173 = vsub.f32 %v2013, %v2100
        %v2174 = vsub.f32 %v2014, %v2103
        %v2175 = vsub.f32 %v2015, %v2103
        %v2176 = vsub.f32 %v2016, %v2106
        %v2177 = vsub.f32 %v2017, %v2106
        %v2178 = vsub.f32 %v2018, %v2109
        %v2179 = vsub.f32 %v2019, %v2109
        %v2180 = vsub.f32 %v2020, %v2112
        %v2181 = vsub.f32 %v2021, %v2112
        %v2182 = vsub.f32 %v2022, %v2115
        %v2183 = vsub.f32 %v2023, %v2115
        %v2184 = vsub.f32 %v2024, %v2118
        %v2185 = vsub.f32 %v2025, %v2118
        %v2186 = vsub.f32 %v2026, %v2121
        %v2187 = vsub.f32 %v2027, %v2121
        %v2188 = vsub.f32 %v2028, %v2124
        %v2189 = vsub.f32 %v2029, %v2124
        %v2190 = vsub.f32 %v2030, %v2127
        %v2191 = vsub.f32 %v2031, %v2127
        %v2192 = vmul.f32 %v2128, 1.442695
        %v2193 = vpow.pop %v2192
        %v2194 = vmul.f32 %v2129, 1.442695
        %v2195 = vpow.pop %v2194
        %v2196 = vmul.f32 %v2130, 1.442695
        %v2197 = vpow.pop %v2196
        %v2198 = vmul.f32 %v2131, 1.442695
        %v2199 = vpow.pop %v2198
        %v2200 = vmul.f32 %v2132, 1.442695
        %v2201 = vpow.pop %v2200
        %v2202 = vmul.f32 %v2133, 1.442695
        %v2203 = vpow.pop %v2202
        %v2204 = vmul.f32 %v2134, 1.442695
        %v2205 = vpow.pop %v2204
        %v2206 = vmul.f32 %v2135, 1.442695
        %v2207 = vpow.pop %v2206
        %v2208 = vmul.f32 %v2136, 1.442695
        %v2209 = vpow.pop %v2208
        %v2210 = vmul.f32 %v2137, 1.442695
        %v2211 = vpow.pop %v2210
        %v2212 = vmul.f32 %v2138, 1.442695
        %v2213 = vpow.pop %v2212
        %v2214 = vmul.f32 %v2139, 1.442695
        %v2215 = vpow.pop %v2214
        %v2216 = vmul.f32 %v2140, 1.442695
        %v2217 = vpow.pop %v2216
        %v2218 = vmul.f32 %v2141, 1.442695
        %v2219 = vpow.pop %v2218
        %v2220 = vmul.f32 %v2142, 1.442695
        %v2221 = vpow.pop %v2220
        %v2222 = vmul.f32 %v2143, 1.442695
        %v2223 = vpow.pop %v2222
        %v2224 = vmul.f32 %v2144, 1.442695
        %v2225 = vpow.pop %v2224
        %v2226 = vmul.f32 %v2145, 1.442695
        %v2227 = vpow.pop %v2226
        %v2228 = vmul.f32 %v2146, 1.442695
        %v2229 = vpow.pop %v2228
        %v2230 = vmul.f32 %v2147, 1.442695
        %v2231 = vpow.pop %v2230
        %v2232 = vmul.f32 %v2148, 1.442695
        %v2233 = vpow.pop %v2232
        %v2234 = vmul.f32 %v2149, 1.442695
        %v2235 = vpow.pop %v2234
        %v2236 = vmul.f32 %v2150, 1.442695
        %v2237 = vpow.pop %v2236
        %v2238 = vmul.f32 %v2151, 1.442695
        %v2239 = vpow.pop %v2238
        %v2240 = vmul.f32 %v2152, 1.442695
        %v2241 = vpow.pop %v2240
        %v2242 = vmul.f32 %v2153, 1.442695
        %v2243 = vpow.pop %v2242
        %v2244 = vmul.f32 %v2154, 1.442695
        %v2245 = vpow.pop %v2244
        %v2246 = vmul.f32 %v2155, 1.442695
        %v2247 = vpow.pop %v2246
        %v2248 = vmul.f32 %v2156, 1.442695
        %v2249 = vpow.pop %v2248
        %v2250 = vmul.f32 %v2157, 1.442695
        %v2251 = vpow.pop %v2250
        %v2252 = vmul.f32 %v2158, 1.442695
        %v2253 = vpow.pop %v2252
        %v2254 = vmul.f32 %v2159, 1.442695
        %v2255 = vpow.pop %v2254
        %v2256 = vmul.f32 %v2160, 1.442695
        %v2257 = vpow.pop %v2256
        %v2258 = vmul.f32 %v2161, 1.442695
        %v2259 = vpow.pop %v2258
        %v2260 = vmul.f32 %v2162, 1.442695
        %v2261 = vpow.pop %v2260
        %v2262 = vmul.f32 %v2163, 1.442695
        %v2263 = vpow.pop %v2262
        %v2264 = vmul.f32 %v2164, 1.442695
        %v2265 = vpow.pop %v2264
        %v2266 = vmul.f32 %v2165, 1.442695
        %v2267 = vpow.pop %v2266
        %v2268 = vmul.f32 %v2166, 1.442695
        %v2269 = vpow.pop %v2268
        %v2270 = vmul.f32 %v2167, 1.442695
        %v2271 = vpow.pop %v2270
        %v2272 = vmul.f32 %v2168, 1.442695
        %v2273 = vpow.pop %v2272
        %v2274 = vmul.f32 %v2169, 1.442695
        %v2275 = vpow.pop %v2274
        %v2276 = vmul.f32 %v2170, 1.442695
        %v2277 = vpow.pop %v2276
        %v2278 = vmul.f32 %v2171, 1.442695
        %v2279 = vpow.pop %v2278
        %v2280 = vmul.f32 %v2172, 1.442695
        %v2281 = vpow.pop %v2280
        %v2282 = vmul.f32 %v2173, 1.442695
        %v2283 = vpow.pop %v2282
        %v2284 = vmul.f32 %v2174, 1.442695
        %v2285 = vpow.pop %v2284
        %v2286 = vmul.f32 %v2175, 1.442695
        %v2287 = vpow.pop %v2286
        %v2288 = vmul.f32 %v2176, 1.442695
        %v2289 = vpow.pop %v2288
        %v2290 = vmul.f32 %v2177, 1.442695
        %v2291 = vpow.pop %v2290
        %v2292 = vmul.f32 %v2178, 1.442695
        %v2293 = vpow.pop %v2292
        %v2294 = vmul.f32 %v2179, 1.442695
        %v2295 = vpow.pop %v2294
        %v2296 = vmul.f32 %v2180, 1.442695
        %v2297 = vpow.pop %v2296
        %v2298 = vmul.f32 %v2181, 1.442695
        %v2299 = vpow.pop %v2298
        %v2300 = vmul.f32 %v2182, 1.442695
        %v2301 = vpow.pop %v2300
        %v2302 = vmul.f32 %v2183, 1.442695
        %v2303 = vpow.pop %v2302
        %v2304 = vmul.f32 %v2184, 1.442695
        %v2305 = vpow.pop %v2304
        %v2306 = vmul.f32 %v2185, 1.442695
        %v2307 = vpow.pop %v2306
        %v2308 = vmul.f32 %v2186, 1.442695
        %v2309 = vpow.pop %v2308
        %v2310 = vmul.f32 %v2187, 1.442695
        %v2311 = vpow.pop %v2310
        %v2312 = vmul.f32 %v2188, 1.442695
        %v2313 = vpow.pop %v2312
        %v2314 = vmul.f32 %v2189, 1.442695
        %v2315 = vpow.pop %v2314
        %v2316 = vmul.f32 %v2190, 1.442695
        %v2317 = vpow.pop %v2316
        %v2318 = vmul.f32 %v2191, 1.442695
        %v2319 = vpow.pop %v2318
        %v2320 = vadd.f32 %v2193, %v2195
        %2321 = vadd.xlane.f32.xlu0 %v2320
        %v2322 = vpop.xlane.xlu0 %2321
        %v2323 = vadd.f32 %v2197, %v2199
        %2324 = vadd.xlane.f32.xlu0 %v2323
        %v2325 = vpop.xlane.xlu0 %2324
        %v2326 = vadd.f32 %v2201, %v2203
        %2327 = vadd.xlane.f32.xlu0 %v2326
        %v2328 = vpop.xlane.xlu0 %2327
        %v2329 = vadd.f32 %v2205, %v2207
        %2330 = vadd.xlane.f32.xlu0 %v2329
        %v2331 = vpop.xlane.xlu0 %2330
        %v2332 = vadd.f32 %v2209, %v2211
        %2333 = vadd.xlane.f32.xlu0 %v2332
        %v2334 = vpop.xlane.xlu0 %2333
        %v2335 = vadd.f32 %v2213, %v2215
        %2336 = vadd.xlane.f32.xlu0 %v2335
        %v2337 = vpop.xlane.xlu0 %2336
        %v2338 = vadd.f32 %v2217, %v2219
        %2339 = vadd.xlane.f32.xlu0 %v2338
        %v2340 = vpop.xlane.xlu0 %2339
        %v2341 = vadd.f32 %v2221, %v2223
        %2342 = vadd.xlane.f32.xlu0 %v2341
        %v2343 = vpop.xlane.xlu0 %2342
        %v2344 = vadd.f32 %v2225, %v2227
        %2345 = vadd.xlane.f32.xlu0 %v2344
        %v2346 = vpop.xlane.xlu0 %2345
        %v2347 = vadd.f32 %v2229, %v2231
        %2348 = vadd.xlane.f32.xlu0 %v2347
        %v2349 = vpop.xlane.xlu0 %2348
        %v2350 = vadd.f32 %v2233, %v2235
        %2351 = vadd.xlane.f32.xlu0 %v2350
        %v2352 = vpop.xlane.xlu0 %2351
        %v2353 = vadd.f32 %v2237, %v2239
        %2354 = vadd.xlane.f32.xlu0 %v2353
        %v2355 = vpop.xlane.xlu0 %2354
        %v2356 = vadd.f32 %v2241, %v2243
        %2357 = vadd.xlane.f32.xlu0 %v2356
        %v2358 = vpop.xlane.xlu0 %2357
        %v2359 = vadd.f32 %v2245, %v2247
        %2360 = vadd.xlane.f32.xlu0 %v2359
        %v2361 = vpop.xlane.xlu0 %2360
        %v2362 = vadd.f32 %v2249, %v2251
        %2363 = vadd.xlane.f32.xlu0 %v2362
        %v2364 = vpop.xlane.xlu0 %2363
        %v2365 = vadd.f32 %v2253, %v2255
        %2366 = vadd.xlane.f32.xlu0 %v2365
        %v2367 = vpop.xlane.xlu0 %2366
        %v2368 = vadd.f32 %v2257, %v2259
        %2369 = vadd.xlane.f32.xlu0 %v2368
        %v2370 = vpop.xlane.xlu0 %2369
        %v2371 = vadd.f32 %v2261, %v2263
        %2372 = vadd.xlane.f32.xlu0 %v2371
        %v2373 = vpop.xlane.xlu0 %2372
        %v2374 = vadd.f32 %v2265, %v2267
        %2375 = vadd.xlane.f32.xlu0 %v2374
        %v2376 = vpop.xlane.xlu0 %2375
        %v2377 = vadd.f32 %v2269, %v2271
        %2378 = vadd.xlane.f32.xlu0 %v2377
        %v2379 = vpop.xlane.xlu0 %2378
        %v2380 = vadd.f32 %v2273, %v2275
        %2381 = vadd.xlane.f32.xlu0 %v2380
        %v2382 = vpop.xlane.xlu0 %2381
        %v2383 = vadd.f32 %v2277, %v2279
        %2384 = vadd.xlane.f32.xlu0 %v2383
        %v2385 = vpop.xlane.xlu0 %2384
        %v2386 = vadd.f32 %v2281, %v2283
        %2387 = vadd.xlane.f32.xlu0 %v2386
        %v2388 = vpop.xlane.xlu0 %2387
        %v2389 = vadd.f32 %v2285, %v2287
        %2390 = vadd.xlane.f32.xlu0 %v2389
        %v2391 = vpop.xlane.xlu0 %2390
        %v2392 = vadd.f32 %v2289, %v2291
        %2393 = vadd.xlane.f32.xlu0 %v2392
        %v2394 = vpop.xlane.xlu0 %2393
        %v2395 = vadd.f32 %v2293, %v2295
        %2396 = vadd.xlane.f32.xlu0 %v2395
        %v2397 = vpop.xlane.xlu0 %2396
        %v2398 = vadd.f32 %v2297, %v2299
        %2399 = vadd.xlane.f32.xlu0 %v2398
        %v2400 = vpop.xlane.xlu0 %2399
        %v2401 = vadd.f32 %v2301, %v2303
        %2402 = vadd.xlane.f32.xlu0 %v2401
        %v2403 = vpop.xlane.xlu0 %2402
        %v2404 = vadd.f32 %v2305, %v2307
        %2405 = vadd.xlane.f32.xlu0 %v2404
        %v2406 = vpop.xlane.xlu0 %2405
        %v2407 = vadd.f32 %v2309, %v2311
        %2408 = vadd.xlane.f32.xlu0 %v2407
        %v2409 = vpop.xlane.xlu0 %2408
        %v2410 = vadd.f32 %v2313, %v2315
        %2411 = vadd.xlane.f32.xlu0 %v2410
        %v2412 = vpop.xlane.xlu0 %2411
        %v2413 = vadd.f32 %v2317, %v2319
        %2414 = vadd.xlane.f32.xlu0 %v2413
        %v2415 = vpop.xlane.xlu0 %2414
        %v2416 = vrcp.pop %v2322
        %v2417 = vmul.f32 %v2322, %v2416
        %v2418 = vsub.f32 1.0, %v2417
        %v2419 = vmul.f32 %v2416, %v2418
        %v2420 = vadd.f32 %v2416, %v2419
        %vm2421 = vweird.f32 %v2322
        %vm2422 = vweird.f32 %v2416
        %vm2423 = vmor %vm2421, %vm2422
        %v2424 = vsel %vm2423, %v2416, %v2420
        %v2425 = vand.u32 2147483647, %v2322
        %vm2426 = vcmp.eq.f32.partialorder %v2425, 8.507059e+37
        %v2427 = vand.u32 %v2322, 2147483648
        %v2428 = vor.u32 1.1754944e-38, %v2427
        %v2429 = vsel %vm2426, %v2428, %v2424
        %v2430 = vmul.f32 %v2193, %v2429
        %v2431 = vmul.f32 %v2195, %v2429
        %v2432 = vrcp.pop %v2325
        %v2433 = vmul.f32 %v2325, %v2432
        %v2434 = vsub.f32 1.0, %v2433
        %v2435 = vmul.f32 %v2432, %v2434
        %v2436 = vadd.f32 %v2432, %v2435
        %vm2437 = vweird.f32 %v2325
        %vm2438 = vweird.f32 %v2432
        %vm2439 = vmor %vm2437, %vm2438
        %v2440 = vsel %vm2439, %v2432, %v2436
        %v2441 = vand.u32 2147483647, %v2325
        %vm2442 = vcmp.eq.f32.partialorder %v2441, 8.507059e+37
        %v2443 = vand.u32 %v2325, 2147483648
        %v2444 = vor.u32 1.1754944e-38, %v2443
        %v2445 = vsel %vm2442, %v2444, %v2440
        %v2446 = vmul.f32 %v2197, %v2445
        %v2447 = vmul.f32 %v2199, %v2445
        %v2448 = vrcp.pop %v2328
        %v2449 = vmul.f32 %v2328, %v2448
        %v2450 = vsub.f32 1.0, %v2449
        %v2451 = vmul.f32 %v2448, %v2450
        %v2452 = vadd.f32 %v2448, %v2451
        %vm2453 = vweird.f32 %v2328
        %vm2454 = vweird.f32 %v2448
        %vm2455 = vmor %vm2453, %vm2454
        %v2456 = vsel %vm2455, %v2448, %v2452
        %v2457 = vand.u32 2147483647, %v2328
        %vm2458 = vcmp.eq.f32.partialorder %v2457, 8.507059e+37
        %v2459 = vand.u32 %v2328, 2147483648
        %v2460 = vor.u32 1.1754944e-38, %v2459
        %v2461 = vsel %vm2458, %v2460, %v2456
        %v2462 = vmul.f32 %v2201, %v2461
        %v2463 = vmul.f32 %v2203, %v2461
        %v2464 = vrcp.pop %v2331
        %v2465 = vmul.f32 %v2331, %v2464
        %v2466 = vsub.f32 1.0, %v2465
        %v2467 = vmul.f32 %v2464, %v2466
        %v2468 = vadd.f32 %v2464, %v2467
        %vm2469 = vweird.f32 %v2331
        %vm2470 = vweird.f32 %v2464
        %vm2471 = vmor %vm2469, %vm2470
        %v2472 = vsel %vm2471, %v2464, %v2468
        %v2473 = vand.u32 2147483647, %v2331
        %vm2474 = vcmp.eq.f32.partialorder %v2473, 8.507059e+37
        %v2475 = vand.u32 %v2331, 2147483648
        %v2476 = vor.u32 1.1754944e-38, %v2475
        %v2477 = vsel %vm2474, %v2476, %v2472
        %v2478 = vmul.f32 %v2205, %v2477
        %v2479 = vmul.f32 %v2207, %v2477
        %v2480 = vrcp.pop %v2334
        %v2481 = vmul.f32 %v2334, %v2480
        %v2482 = vsub.f32 1.0, %v2481
        %v2483 = vmul.f32 %v2480, %v2482
        %v2484 = vadd.f32 %v2480, %v2483
        %vm2485 = vweird.f32 %v2334
        %vm2486 = vweird.f32 %v2480
        %vm2487 = vmor %vm2485, %vm2486
        %v2488 = vsel %vm2487, %v2480, %v2484
        %v2489 = vand.u32 2147483647, %v2334
        %vm2490 = vcmp.eq.f32.partialorder %v2489, 8.507059e+37
        %v2491 = vand.u32 %v2334, 2147483648
        %v2492 = vor.u32 1.1754944e-38, %v2491
        %v2493 = vsel %vm2490, %v2492, %v2488
        %v2494 = vmul.f32 %v2209, %v2493
        %v2495 = vmul.f32 %v2211, %v2493
        %v2496 = vrcp.pop %v2337
        %v2497 = vmul.f32 %v2337, %v2496
        %v2498 = vsub.f32 1.0, %v2497
        %v2499 = vmul.f32 %v2496, %v2498
        %v2500 = vadd.f32 %v2496, %v2499
        %vm2501 = vweird.f32 %v2337
        %vm2502 = vweird.f32 %v2496
        %vm2503 = vmor %vm2501, %vm2502
        %v2504 = vsel %vm2503, %v2496, %v2500
        %v2505 = vand.u32 2147483647, %v2337
        %vm2506 = vcmp.eq.f32.partialorder %v2505, 8.507059e+37
        %v2507 = vand.u32 %v2337, 2147483648
        %v2508 = vor.u32 1.1754944e-38, %v2507
        %v2509 = vsel %vm2506, %v2508, %v2504
        %v2510 = vmul.f32 %v2213, %v2509
        %v2511 = vmul.f32 %v2215, %v2509
        %v2512 = vrcp.pop %v2340
        %v2513 = vmul.f32 %v2340, %v2512
        %v2514 = vsub.f32 1.0, %v2513
        %v2515 = vmul.f32 %v2512, %v2514
        %v2516 = vadd.f32 %v2512, %v2515
        %vm2517 = vweird.f32 %v2340
        %vm2518 = vweird.f32 %v2512
        %vm2519 = vmor %vm2517, %vm2518
        %v2520 = vsel %vm2519, %v2512, %v2516
        %v2521 = vand.u32 2147483647, %v2340
        %vm2522 = vcmp.eq.f32.partialorder %v2521, 8.507059e+37
        %v2523 = vand.u32 %v2340, 2147483648
        %v2524 = vor.u32 1.1754944e-38, %v2523
        %v2525 = vsel %vm2522, %v2524, %v2520
        %v2526 = vmul.f32 %v2217, %v2525
        %v2527 = vmul.f32 %v2219, %v2525
        %v2528 = vrcp.pop %v2343
        %v2529 = vmul.f32 %v2343, %v2528
        %v2530 = vsub.f32 1.0, %v2529
        %v2531 = vmul.f32 %v2528, %v2530
        %v2532 = vadd.f32 %v2528, %v2531
        %vm2533 = vweird.f32 %v2343
        %vm2534 = vweird.f32 %v2528
        %vm2535 = vmor %vm2533, %vm2534
        %v2536 = vsel %vm2535, %v2528, %v2532
        %v2537 = vand.u32 2147483647, %v2343
        %vm2538 = vcmp.eq.f32.partialorder %v2537, 8.507059e+37
        %v2539 = vand.u32 %v2343, 2147483648
        %v2540 = vor.u32 1.1754944e-38, %v2539
        %v2541 = vsel %vm2538, %v2540, %v2536
        %v2542 = vmul.f32 %v2221, %v2541
        %v2543 = vmul.f32 %v2223, %v2541
        %v2544 = vrcp.pop %v2346
        %v2545 = vmul.f32 %v2346, %v2544
        %v2546 = vsub.f32 1.0, %v2545
        %v2547 = vmul.f32 %v2544, %v2546
        %v2548 = vadd.f32 %v2544, %v2547
        %vm2549 = vweird.f32 %v2346
        %vm2550 = vweird.f32 %v2544
        %vm2551 = vmor %vm2549, %vm2550
        %v2552 = vsel %vm2551, %v2544, %v2548
        %v2553 = vand.u32 2147483647, %v2346
        %vm2554 = vcmp.eq.f32.partialorder %v2553, 8.507059e+37
        %v2555 = vand.u32 %v2346, 2147483648
        %v2556 = vor.u32 1.1754944e-38, %v2555
        %v2557 = vsel %vm2554, %v2556, %v2552
        %v2558 = vmul.f32 %v2225, %v2557
        %v2559 = vmul.f32 %v2227, %v2557
        %v2560 = vrcp.pop %v2349
        %v2561 = vmul.f32 %v2349, %v2560
        %v2562 = vsub.f32 1.0, %v2561
        %v2563 = vmul.f32 %v2560, %v2562
        %v2564 = vadd.f32 %v2560, %v2563
        %vm2565 = vweird.f32 %v2349
        %vm2566 = vweird.f32 %v2560
        %vm2567 = vmor %vm2565, %vm2566
        %v2568 = vsel %vm2567, %v2560, %v2564
        %v2569 = vand.u32 2147483647, %v2349
        %vm2570 = vcmp.eq.f32.partialorder %v2569, 8.507059e+37
        %v2571 = vand.u32 %v2349, 2147483648
        %v2572 = vor.u32 1.1754944e-38, %v2571
        %v2573 = vsel %vm2570, %v2572, %v2568
        %v2574 = vmul.f32 %v2229, %v2573
        %v2575 = vmul.f32 %v2231, %v2573
        %v2576 = vrcp.pop %v2352
        %v2577 = vmul.f32 %v2352, %v2576
        %v2578 = vsub.f32 1.0, %v2577
        %v2579 = vmul.f32 %v2576, %v2578
        %v2580 = vadd.f32 %v2576, %v2579
        %vm2581 = vweird.f32 %v2352
        %vm2582 = vweird.f32 %v2576
        %vm2583 = vmor %vm2581, %vm2582
        %v2584 = vsel %vm2583, %v2576, %v2580
        %v2585 = vand.u32 2147483647, %v2352
        %vm2586 = vcmp.eq.f32.partialorder %v2585, 8.507059e+37
        %v2587 = vand.u32 %v2352, 2147483648
        %v2588 = vor.u32 1.1754944e-38, %v2587
        %v2589 = vsel %vm2586, %v2588, %v2584
        %v2590 = vmul.f32 %v2233, %v2589
        %v2591 = vmul.f32 %v2235, %v2589
        %v2592 = vrcp.pop %v2355
        %v2593 = vmul.f32 %v2355, %v2592
        %v2594 = vsub.f32 1.0, %v2593
        %v2595 = vmul.f32 %v2592, %v2594
        %v2596 = vadd.f32 %v2592, %v2595
        %vm2597 = vweird.f32 %v2355
        %vm2598 = vweird.f32 %v2592
        %vm2599 = vmor %vm2597, %vm2598
        %v2600 = vsel %vm2599, %v2592, %v2596
        %v2601 = vand.u32 2147483647, %v2355
        %vm2602 = vcmp.eq.f32.partialorder %v2601, 8.507059e+37
        %v2603 = vand.u32 %v2355, 2147483648
        %v2604 = vor.u32 1.1754944e-38, %v2603
        %v2605 = vsel %vm2602, %v2604, %v2600
        %v2606 = vmul.f32 %v2237, %v2605
        %v2607 = vmul.f32 %v2239, %v2605
        %v2608 = vrcp.pop %v2358
        %v2609 = vmul.f32 %v2358, %v2608
        %v2610 = vsub.f32 1.0, %v2609
        %v2611 = vmul.f32 %v2608, %v2610
        %v2612 = vadd.f32 %v2608, %v2611
        %vm2613 = vweird.f32 %v2358
        %vm2614 = vweird.f32 %v2608
        %vm2615 = vmor %vm2613, %vm2614
        %v2616 = vsel %vm2615, %v2608, %v2612
        %v2617 = vand.u32 2147483647, %v2358
        %vm2618 = vcmp.eq.f32.partialorder %v2617, 8.507059e+37
        %v2619 = vand.u32 %v2358, 2147483648
        %v2620 = vor.u32 1.1754944e-38, %v2619
        %v2621 = vsel %vm2618, %v2620, %v2616
        %v2622 = vmul.f32 %v2241, %v2621
        %v2623 = vmul.f32 %v2243, %v2621
        %v2624 = vrcp.pop %v2361
        %v2625 = vmul.f32 %v2361, %v2624
        %v2626 = vsub.f32 1.0, %v2625
        %v2627 = vmul.f32 %v2624, %v2626
        %v2628 = vadd.f32 %v2624, %v2627
        %vm2629 = vweird.f32 %v2361
        %vm2630 = vweird.f32 %v2624
        %vm2631 = vmor %vm2629, %vm2630
        %v2632 = vsel %vm2631, %v2624, %v2628
        %v2633 = vand.u32 2147483647, %v2361
        %vm2634 = vcmp.eq.f32.partialorder %v2633, 8.507059e+37
        %v2635 = vand.u32 %v2361, 2147483648
        %v2636 = vor.u32 1.1754944e-38, %v2635
        %v2637 = vsel %vm2634, %v2636, %v2632
        %v2638 = vmul.f32 %v2245, %v2637
        %v2639 = vmul.f32 %v2247, %v2637
        %v2640 = vrcp.pop %v2364
        %v2641 = vmul.f32 %v2364, %v2640
        %v2642 = vsub.f32 1.0, %v2641
        %v2643 = vmul.f32 %v2640, %v2642
        %v2644 = vadd.f32 %v2640, %v2643
        %vm2645 = vweird.f32 %v2364
        %vm2646 = vweird.f32 %v2640
        %vm2647 = vmor %vm2645, %vm2646
        %v2648 = vsel %vm2647, %v2640, %v2644
        %v2649 = vand.u32 2147483647, %v2364
        %vm2650 = vcmp.eq.f32.partialorder %v2649, 8.507059e+37
        %v2651 = vand.u32 %v2364, 2147483648
        %v2652 = vor.u32 1.1754944e-38, %v2651
        %v2653 = vsel %vm2650, %v2652, %v2648
        %v2654 = vmul.f32 %v2249, %v2653
        %v2655 = vmul.f32 %v2251, %v2653
        %v2656 = vrcp.pop %v2367
        %v2657 = vmul.f32 %v2367, %v2656
        %v2658 = vsub.f32 1.0, %v2657
        %v2659 = vmul.f32 %v2656, %v2658
        %v2660 = vadd.f32 %v2656, %v2659
        %vm2661 = vweird.f32 %v2367
        %vm2662 = vweird.f32 %v2656
        %vm2663 = vmor %vm2661, %vm2662
        %v2664 = vsel %vm2663, %v2656, %v2660
        %v2665 = vand.u32 2147483647, %v2367
        %vm2666 = vcmp.eq.f32.partialorder %v2665, 8.507059e+37
        %v2667 = vand.u32 %v2367, 2147483648
        %v2668 = vor.u32 1.1754944e-38, %v2667
        %v2669 = vsel %vm2666, %v2668, %v2664
        %v2670 = vmul.f32 %v2253, %v2669
        %v2671 = vmul.f32 %v2255, %v2669
        %v2672 = vrcp.pop %v2370
        %v2673 = vmul.f32 %v2370, %v2672
        %v2674 = vsub.f32 1.0, %v2673
        %v2675 = vmul.f32 %v2672, %v2674
        %v2676 = vadd.f32 %v2672, %v2675
        %vm2677 = vweird.f32 %v2370
        %vm2678 = vweird.f32 %v2672
        %vm2679 = vmor %vm2677, %vm2678
        %v2680 = vsel %vm2679, %v2672, %v2676
        %v2681 = vand.u32 2147483647, %v2370
        %vm2682 = vcmp.eq.f32.partialorder %v2681, 8.507059e+37
        %v2683 = vand.u32 %v2370, 2147483648
        %v2684 = vor.u32 1.1754944e-38, %v2683
        %v2685 = vsel %vm2682, %v2684, %v2680
        %v2686 = vmul.f32 %v2257, %v2685
        %v2687 = vmul.f32 %v2259, %v2685
        %v2688 = vrcp.pop %v2373
        %v2689 = vmul.f32 %v2373, %v2688
        %v2690 = vsub.f32 1.0, %v2689
        %v2691 = vmul.f32 %v2688, %v2690
        %v2692 = vadd.f32 %v2688, %v2691
        %vm2693 = vweird.f32 %v2373
        %vm2694 = vweird.f32 %v2688
        %vm2695 = vmor %vm2693, %vm2694
        %v2696 = vsel %vm2695, %v2688, %v2692
        %v2697 = vand.u32 2147483647, %v2373
        %vm2698 = vcmp.eq.f32.partialorder %v2697, 8.507059e+37
        %v2699 = vand.u32 %v2373, 2147483648
        %v2700 = vor.u32 1.1754944e-38, %v2699
        %v2701 = vsel %vm2698, %v2700, %v2696
        %v2702 = vmul.f32 %v2261, %v2701
        %v2703 = vmul.f32 %v2263, %v2701
        %v2704 = vrcp.pop %v2376
        %v2705 = vmul.f32 %v2376, %v2704
        %v2706 = vsub.f32 1.0, %v2705
        %v2707 = vmul.f32 %v2704, %v2706
        %v2708 = vadd.f32 %v2704, %v2707
        %vm2709 = vweird.f32 %v2376
        %vm2710 = vweird.f32 %v2704
        %vm2711 = vmor %vm2709, %vm2710
        %v2712 = vsel %vm2711, %v2704, %v2708
        %v2713 = vand.u32 2147483647, %v2376
        %vm2714 = vcmp.eq.f32.partialorder %v2713, 8.507059e+37
        %v2715 = vand.u32 %v2376, 2147483648
        %v2716 = vor.u32 1.1754944e-38, %v2715
        %v2717 = vsel %vm2714, %v2716, %v2712
        %v2718 = vmul.f32 %v2265, %v2717
        %v2719 = vmul.f32 %v2267, %v2717
        %v2720 = vrcp.pop %v2379
        %v2721 = vmul.f32 %v2379, %v2720
        %v2722 = vsub.f32 1.0, %v2721
        %v2723 = vmul.f32 %v2720, %v2722
        %v2724 = vadd.f32 %v2720, %v2723
        %vm2725 = vweird.f32 %v2379
        %vm2726 = vweird.f32 %v2720
        %vm2727 = vmor %vm2725, %vm2726
        %v2728 = vsel %vm2727, %v2720, %v2724
        %v2729 = vand.u32 2147483647, %v2379
        %vm2730 = vcmp.eq.f32.partialorder %v2729, 8.507059e+37
        %v2731 = vand.u32 %v2379, 2147483648
        %v2732 = vor.u32 1.1754944e-38, %v2731
        %v2733 = vsel %vm2730, %v2732, %v2728
        %v2734 = vmul.f32 %v2269, %v2733
        %v2735 = vmul.f32 %v2271, %v2733
        %v2736 = vrcp.pop %v2382
        %v2737 = vmul.f32 %v2382, %v2736
        %v2738 = vsub.f32 1.0, %v2737
        %v2739 = vmul.f32 %v2736, %v2738
        %v2740 = vadd.f32 %v2736, %v2739
        %vm2741 = vweird.f32 %v2382
        %vm2742 = vweird.f32 %v2736
        %vm2743 = vmor %vm2741, %vm2742
        %v2744 = vsel %vm2743, %v2736, %v2740
        %v2745 = vand.u32 2147483647, %v2382
        %vm2746 = vcmp.eq.f32.partialorder %v2745, 8.507059e+37
        %v2747 = vand.u32 %v2382, 2147483648
        %v2748 = vor.u32 1.1754944e-38, %v2747
        %v2749 = vsel %vm2746, %v2748, %v2744
        %v2750 = vmul.f32 %v2273, %v2749
        %v2751 = vmul.f32 %v2275, %v2749
        %v2752 = vrcp.pop %v2385
        %v2753 = vmul.f32 %v2385, %v2752
        %v2754 = vsub.f32 1.0, %v2753
        %v2755 = vmul.f32 %v2752, %v2754
        %v2756 = vadd.f32 %v2752, %v2755
        %vm2757 = vweird.f32 %v2385
        %vm2758 = vweird.f32 %v2752
        %vm2759 = vmor %vm2757, %vm2758
        %v2760 = vsel %vm2759, %v2752, %v2756
        %v2761 = vand.u32 2147483647, %v2385
        %vm2762 = vcmp.eq.f32.partialorder %v2761, 8.507059e+37
        %v2763 = vand.u32 %v2385, 2147483648
        %v2764 = vor.u32 1.1754944e-38, %v2763
        %v2765 = vsel %vm2762, %v2764, %v2760
        %v2766 = vmul.f32 %v2277, %v2765
        %v2767 = vmul.f32 %v2279, %v2765
        %v2768 = vrcp.pop %v2388
        %v2769 = vmul.f32 %v2388, %v2768
        %v2770 = vsub.f32 1.0, %v2769
        %v2771 = vmul.f32 %v2768, %v2770
        %v2772 = vadd.f32 %v2768, %v2771
        %vm2773 = vweird.f32 %v2388
        %vm2774 = vweird.f32 %v2768
        %vm2775 = vmor %vm2773, %vm2774
        %v2776 = vsel %vm2775, %v2768, %v2772
        %v2777 = vand.u32 2147483647, %v2388
        %vm2778 = vcmp.eq.f32.partialorder %v2777, 8.507059e+37
        %v2779 = vand.u32 %v2388, 2147483648
        %v2780 = vor.u32 1.1754944e-38, %v2779
        %v2781 = vsel %vm2778, %v2780, %v2776
        %v2782 = vmul.f32 %v2281, %v2781
        %v2783 = vmul.f32 %v2283, %v2781
        %v2784 = vrcp.pop %v2391
        %v2785 = vmul.f32 %v2391, %v2784
        %v2786 = vsub.f32 1.0, %v2785
        %v2787 = vmul.f32 %v2784, %v2786
        %v2788 = vadd.f32 %v2784, %v2787
        %vm2789 = vweird.f32 %v2391
        %vm2790 = vweird.f32 %v2784
        %vm2791 = vmor %vm2789, %vm2790
        %v2792 = vsel %vm2791, %v2784, %v2788
        %v2793 = vand.u32 2147483647, %v2391
        %vm2794 = vcmp.eq.f32.partialorder %v2793, 8.507059e+37
        %v2795 = vand.u32 %v2391, 2147483648
        %v2796 = vor.u32 1.1754944e-38, %v2795
        %v2797 = vsel %vm2794, %v2796, %v2792
        %v2798 = vmul.f32 %v2285, %v2797
        %v2799 = vmul.f32 %v2287, %v2797
        %v2800 = vrcp.pop %v2394
        %v2801 = vmul.f32 %v2394, %v2800
        %v2802 = vsub.f32 1.0, %v2801
        %v2803 = vmul.f32 %v2800, %v2802
        %v2804 = vadd.f32 %v2800, %v2803
        %vm2805 = vweird.f32 %v2394
        %vm2806 = vweird.f32 %v2800
        %vm2807 = vmor %vm2805, %vm2806
        %v2808 = vsel %vm2807, %v2800, %v2804
        %v2809 = vand.u32 2147483647, %v2394
        %vm2810 = vcmp.eq.f32.partialorder %v2809, 8.507059e+37
        %v2811 = vand.u32 %v2394, 2147483648
        %v2812 = vor.u32 1.1754944e-38, %v2811
        %v2813 = vsel %vm2810, %v2812, %v2808
        %v2814 = vmul.f32 %v2289, %v2813
        %v2815 = vmul.f32 %v2291, %v2813
        %v2816 = vrcp.pop %v2397
        %v2817 = vmul.f32 %v2397, %v2816
        %v2818 = vsub.f32 1.0, %v2817
        %v2819 = vmul.f32 %v2816, %v2818
        %v2820 = vadd.f32 %v2816, %v2819
        %vm2821 = vweird.f32 %v2397
        %vm2822 = vweird.f32 %v2816
        %vm2823 = vmor %vm2821, %vm2822
        %v2824 = vsel %vm2823, %v2816, %v2820
        %v2825 = vand.u32 2147483647, %v2397
        %vm2826 = vcmp.eq.f32.partialorder %v2825, 8.507059e+37
        %v2827 = vand.u32 %v2397, 2147483648
        %v2828 = vor.u32 1.1754944e-38, %v2827
        %v2829 = vsel %vm2826, %v2828, %v2824
        %v2830 = vmul.f32 %v2293, %v2829
        %v2831 = vmul.f32 %v2295, %v2829
        %v2832 = vrcp.pop %v2400
        %v2833 = vmul.f32 %v2400, %v2832
        %v2834 = vsub.f32 1.0, %v2833
        %v2835 = vmul.f32 %v2832, %v2834
        %v2836 = vadd.f32 %v2832, %v2835
        %vm2837 = vweird.f32 %v2400
        %vm2838 = vweird.f32 %v2832
        %vm2839 = vmor %vm2837, %vm2838
        %v2840 = vsel %vm2839, %v2832, %v2836
        %v2841 = vand.u32 2147483647, %v2400
        %vm2842 = vcmp.eq.f32.partialorder %v2841, 8.507059e+37
        %v2843 = vand.u32 %v2400, 2147483648
        %v2844 = vor.u32 1.1754944e-38, %v2843
        %v2845 = vsel %vm2842, %v2844, %v2840
        %v2846 = vmul.f32 %v2297, %v2845
        %v2847 = vmul.f32 %v2299, %v2845
        %v2848 = vrcp.pop %v2403
        %v2849 = vmul.f32 %v2403, %v2848
        %v2850 = vsub.f32 1.0, %v2849
        %v2851 = vmul.f32 %v2848, %v2850
        %v2852 = vadd.f32 %v2848, %v2851
        %vm2853 = vweird.f32 %v2403
        %vm2854 = vweird.f32 %v2848
        %vm2855 = vmor %vm2853, %vm2854
        %v2856 = vsel %vm2855, %v2848, %v2852
        %v2857 = vand.u32 2147483647, %v2403
        %vm2858 = vcmp.eq.f32.partialorder %v2857, 8.507059e+37
        %v2859 = vand.u32 %v2403, 2147483648
        %v2860 = vor.u32 1.1754944e-38, %v2859
        %v2861 = vsel %vm2858, %v2860, %v2856
        %v2862 = vmul.f32 %v2301, %v2861
        %v2863 = vmul.f32 %v2303, %v2861
        %v2864 = vrcp.pop %v2406
        %v2865 = vmul.f32 %v2406, %v2864
        %v2866 = vsub.f32 1.0, %v2865
        %v2867 = vmul.f32 %v2864, %v2866
        %v2868 = vadd.f32 %v2864, %v2867
        %vm2869 = vweird.f32 %v2406
        %vm2870 = vweird.f32 %v2864
        %vm2871 = vmor %vm2869, %vm2870
        %v2872 = vsel %vm2871, %v2864, %v2868
        %v2873 = vand.u32 2147483647, %v2406
        %vm2874 = vcmp.eq.f32.partialorder %v2873, 8.507059e+37
        %v2875 = vand.u32 %v2406, 2147483648
        %v2876 = vor.u32 1.1754944e-38, %v2875
        %v2877 = vsel %vm2874, %v2876, %v2872
        %v2878 = vmul.f32 %v2305, %v2877
        %v2879 = vmul.f32 %v2307, %v2877
        %v2880 = vrcp.pop %v2409
        %v2881 = vmul.f32 %v2409, %v2880
        %v2882 = vsub.f32 1.0, %v2881
        %v2883 = vmul.f32 %v2880, %v2882
        %v2884 = vadd.f32 %v2880, %v2883
        %vm2885 = vweird.f32 %v2409
        %vm2886 = vweird.f32 %v2880
        %vm2887 = vmor %vm2885, %vm2886
        %v2888 = vsel %vm2887, %v2880, %v2884
        %v2889 = vand.u32 2147483647, %v2409
        %vm2890 = vcmp.eq.f32.partialorder %v2889, 8.507059e+37
        %v2891 = vand.u32 %v2409, 2147483648
        %v2892 = vor.u32 1.1754944e-38, %v2891
        %v2893 = vsel %vm2890, %v2892, %v2888
        %v2894 = vmul.f32 %v2309, %v2893
        %v2895 = vmul.f32 %v2311, %v2893
        %v2896 = vrcp.pop %v2412
        %v2897 = vmul.f32 %v2412, %v2896
        %v2898 = vsub.f32 1.0, %v2897
        %v2899 = vmul.f32 %v2896, %v2898
        %v2900 = vadd.f32 %v2896, %v2899
        %vm2901 = vweird.f32 %v2412
        %vm2902 = vweird.f32 %v2896
        %vm2903 = vmor %vm2901, %vm2902
        %v2904 = vsel %vm2903, %v2896, %v2900
        %v2905 = vand.u32 2147483647, %v2412
        %vm2906 = vcmp.eq.f32.partialorder %v2905, 8.507059e+37
        %v2907 = vand.u32 %v2412, 2147483648
        %v2908 = vor.u32 1.1754944e-38, %v2907
        %v2909 = vsel %vm2906, %v2908, %v2904
        %v2910 = vmul.f32 %v2313, %v2909
        %v2911 = vmul.f32 %v2315, %v2909
        %v2912 = vrcp.pop %v2415
        %v2913 = vmul.f32 %v2415, %v2912
        %v2914 = vsub.f32 1.0, %v2913
        %v2915 = vmul.f32 %v2912, %v2914
        %v2916 = vadd.f32 %v2912, %v2915
        %vm2917 = vweird.f32 %v2415
        %vm2918 = vweird.f32 %v2912
        %vm2919 = vmor %vm2917, %vm2918
        %v2920 = vsel %vm2919, %v2912, %v2916
        %v2921 = vand.u32 2147483647, %v2415
        %vm2922 = vcmp.eq.f32.partialorder %v2921, 8.507059e+37
        %v2923 = vand.u32 %v2415, 2147483648
        %v2924 = vor.u32 1.1754944e-38, %v2923
        %v2925 = vsel %vm2922, %v2924, %v2920
        %v2926 = vmul.f32 %v2317, %v2925
        %v2927 = vmul.f32 %v2319, %v2925
        %2928 = vmatpush.xpose.msra.mxu0 %v2670
        %2929 = vmatpush.xpose.msra.mxu0 %v2654
        %2930 = vmatpush.xpose.msra.mxu0 %v2638
        %2931 = vmatpush.xpose.msra.mxu0 %v2622
        %2932 = vmatpush.xpose.msra.mxu0 %v2606
        %2933 = vmatpush.xpose.msra.mxu0 %v2590
        %2934 = vmatpush.xpose.msra.mxu0 %v2574
        %2935 = vmatpush.xpose.msra.mxu0 %v2558
        %2936 = vmatpush.xpose.msra.mxu0 %v2542
        %2937 = vmatpush.xpose.msra.mxu0 %v2526
        %2938 = vmatpush.xpose.msra.mxu0 %v2510
        %2939 = vmatpush.xpose.msra.mxu0 %v2494
        %2940 = vmatpush.xpose.msra.mxu0 %v2478
        %2941 = vmatpush.xpose.msra.mxu0 %v2462
        %2942 = vmatpush.xpose.msra.mxu0 %v2446
        %2943 = vmatpush.xpose.msra.mxu0 %v2430
        %2944 = vmatmul.f32.gmra.mxu0 %v1560
        %v2945 = vpop.f32.mrf.mxu0
        %v2946 = vadd.f32 0.0, %v2945
        %2947 = vdwg.mxu0
        %2948 = vmatpush.xpose.msra.mxu0 %v2671
        %2949 = vmatpush.xpose.msra.mxu0 %v2655
        %2950 = vmatpush.xpose.msra.mxu0 %v2639
        %2951 = vmatpush.xpose.msra.mxu0 %v2623
        %2952 = vmatpush.xpose.msra.mxu0 %v2607
        %2953 = vmatpush.xpose.msra.mxu0 %v2591
        %2954 = vmatpush.xpose.msra.mxu0 %v2575
        %2955 = vmatpush.xpose.msra.mxu0 %v2559
        %2956 = vmatpush.xpose.msra.mxu0 %v2543
        %2957 = vmatpush.xpose.msra.mxu0 %v2527
        %2958 = vmatpush.xpose.msra.mxu0 %v2511
        %2959 = vmatpush.xpose.msra.mxu0 %v2495
        %2960 = vmatpush.xpose.msra.mxu0 %v2479
        %2961 = vmatpush.xpose.msra.mxu0 %v2463
        %2962 = vmatpush.xpose.msra.mxu0 %v2447
        %2963 = vmatpush.xpose.msra.mxu0 %v2431
        %2964 = vmatmul.f32.gmra.mxu0 %v1580
        %v2965 = vpop.f32.mrf.mxu0
        %v2966 = vadd.f32 %v2946, %v2965
        %2967 = vdwg.mxu0
        %2968 = vmatpush.xpose.msra.mxu0 %v2926
        %2969 = vmatpush.xpose.msra.mxu0 %v2910
        %2970 = vmatpush.xpose.msra.mxu0 %v2894
        %2971 = vmatpush.xpose.msra.mxu0 %v2878
        %2972 = vmatpush.xpose.msra.mxu0 %v2862
        %2973 = vmatpush.xpose.msra.mxu0 %v2846
        %2974 = vmatpush.xpose.msra.mxu0 %v2830
        %2975 = vmatpush.xpose.msra.mxu0 %v2814
        %2976 = vmatpush.xpose.msra.mxu0 %v2798
        %2977 = vmatpush.xpose.msra.mxu0 %v2782
        %2978 = vmatpush.xpose.msra.mxu0 %v2766
        %2979 = vmatpush.xpose.msra.mxu0 %v2750
        %2980 = vmatpush.xpose.msra.mxu0 %v2734
        %2981 = vmatpush.xpose.msra.mxu0 %v2718
        %2982 = vmatpush.xpose.msra.mxu0 %v2702
        %2983 = vmatpush.xpose.msra.mxu0 %v2686
        %2984 = vmatmul.f32.gmra.mxu0 %v1560
        %v2985 = vpop.f32.mrf.mxu0
        %v2986 = vadd.f32 0.0, %v2985
        %2987 = vdwg.mxu0
        %2988 = vmatpush.xpose.msra.mxu0 %v2927
        %2989 = vmatpush.xpose.msra.mxu0 %v2911
        %2990 = vmatpush.xpose.msra.mxu0 %v2895
        %2991 = vmatpush.xpose.msra.mxu0 %v2879
        %2992 = vmatpush.xpose.msra.mxu0 %v2863
        %2993 = vmatpush.xpose.msra.mxu0 %v2847
        %2994 = vmatpush.xpose.msra.mxu0 %v2831
        %2995 = vmatpush.xpose.msra.mxu0 %v2815
        %2996 = vmatpush.xpose.msra.mxu0 %v2799
        %2997 = vmatpush.xpose.msra.mxu0 %v2783
        %2998 = vmatpush.xpose.msra.mxu0 %v2767
        %2999 = vmatpush.xpose.msra.mxu0 %v2751
        %3000 = vmatpush.xpose.msra.mxu0 %v2735
        %3001 = vmatpush.xpose.msra.mxu0 %v2719
        %3002 = vmatpush.xpose.msra.mxu0 %v2703
        %3003 = vmatpush.xpose.msra.mxu0 %v2687
        %3004 = vmatmul.f32.gmra.mxu0 %v1580
        %v3005 = vpop.f32.mrf.mxu0
        %v3006 = vadd.f32 %v2986, %v3005
        %3007 = vdwg.mxu0
        %v3008 = vld [vmem:[#allocation10] sm:$0xff]
        %3009 = vset.pattern.permute.xlu0 7
        %3010 = vperm.xlu0 %3009, %v477
        %v3011 = vpop.permute.xlu0 %3010
        %v3014 = vsel %vm1436, %v3008, 0
        %3016 = vmatpush.msra.mxu0 0.0
        %3017 = vmatpush.msra.mxu0 0.0
        %3018 = vmatpush.msra.mxu0 0.0
        %3019 = vmatpush.msra.mxu0 0.0
        %3020 = vmatpush.msra.mxu0 0.0
        %3021 = vmatpush.msra.mxu0 0.0
        %3022 = vmatpush.msra.mxu0 0.0
        %3023 = vmatpush.msra.mxu0 0.0
        %3024 = vmatpush.msra.mxu0 0.0
        %3025 = vmatpush.msra.mxu0 0.0
        %3026 = vmatpush.msra.mxu0 0.0
        %3027 = vmatpush.msra.mxu0 0.0
        %3028 = vmatpush.msra.mxu0 0.0
        %3029 = vmatpush.msra.mxu0 0.0
        %3030 = vmatpush.msra.mxu0 0.0
        %3031 = vmatpush.msra.mxu0 %v2966
        %3032 = vmatmul.f32.gmra.mxu0 %v3014
        %v3033 = vpop.f32.mrf.mxu0
        %v3034 = vadd.f32 %v3011, %v3033
        %3035 = vdwg.mxu0
        %3036 = vmatpush.msra.mxu0 0.0
        %3037 = vmatpush.msra.mxu0 0.0
        %3038 = vmatpush.msra.mxu0 0.0
        %3039 = vmatpush.msra.mxu0 0.0
        %3040 = vmatpush.msra.mxu0 0.0
        %3041 = vmatpush.msra.mxu0 0.0
        %3042 = vmatpush.msra.mxu0 0.0
        %3043 = vmatpush.msra.mxu0 0.0
        %3044 = vmatpush.msra.mxu0 0.0
        %3045 = vmatpush.msra.mxu0 0.0
        %3046 = vmatpush.msra.mxu0 0.0
        %3047 = vmatpush.msra.mxu0 0.0
        %3048 = vmatpush.msra.mxu0 0.0
        %3049 = vmatpush.msra.mxu0 0.0
        %3050 = vmatpush.msra.mxu0 0.0
        %3051 = vmatpush.msra.mxu0 %v3006
        %3052 = vmatmul.f32.gmra.mxu0 %v3014
        %v3053 = vpop.f32.mrf.mxu0
        %v3054 = vadd.f32 %v3011, %v3053
        %3055 = vdwg.mxu0
        %v3056 = vadd.f32 %v3034, %v1274
        %v3057 = vadd.f32 %v3054, %v1275
        %3058 = vst [vmem:[%s465] sm:$0xff] %v3056
        %3059 = vst [vmem:[%s465 + $0x8] sm:$0xff] %v3057
        %s3060 = sand.u32 %s277, 1
        %s3061 = scalar_lea.sflag [#allocation4], %s3060
        %s3062 = sand.u32 %s277, 1
        %s3063 = smul.addr %s3062, 16
        %s3064 = scalar_lea.vmem [#allocation11], %s3063
        // Predicated region
        $region85: #{tpu_custom_call.1} parent=63 // pred_check
          %p3065 = pneg %p287
        $region86: #{tpu_custom_call.1} parent=63 // pred_check_branch
          %3067 = sbr.rel (%p3065) target = $region88
        $region87: #{tpu_custom_call.1} parent=63 // pred_region
          %3069 = vsyncadd %s3061, 0
          %s3070 = smul.addr %s28, 2
          %s3071 = smul.addr %s3070, 8
          %s3072 = scalar_lea.hbm %s11, %s3071
          %s3074 = sshll.u32 %s3064, 4
          %s3075 = int_to_ptr.vmem [resolvable:$true] %s3074
          %s3076 = sshll.u32 %s3072, 4
          %s3077 = int_to_ptr.hbm [resolvable:$true] %s3076
          %3079 = dma.vmem_to_hbm [thread:$0]  %s3075, 256, %s3077, %s3061
        $region88: #{tpu_custom_call.1} parent=63 // pred_fallthru
          _
      $region64: #{tpu_custom_call.1} parent=5 // pred_fallthru
        _
      %p3080 = scmp.le.s32.totalorder 2, %s23
      // Predicated region
      $region89: #{tpu_custom_call.1} parent=5 // pred_check
        %p3081 = pneg %p3080
      $region90: #{tpu_custom_call.1} parent=5 // pred_check_branch
        %3083 = sbr.rel (%p3081) target = $region92
      $region91: #{tpu_custom_call.1} parent=5 // pred_region
        %s3084 = ssub.s32 %s23, 2
        // Predicated region
        $region93: #{tpu_custom_call.1} parent=91 // pred_check
          %p3085 = pneg %p293
        $region94: #{tpu_custom_call.1} parent=91 // pred_check_branch
          %3087 = sbr.rel (%p3085) target = $region96
        $region95: #{tpu_custom_call.1} parent=91 // pred_region
          %s3088 = sand.u32 %s278, 1
          %s3089 = scalar_lea.sflag [#allocation4], %s3088
          %s3090 = sand.u32 %s278, 1
          %s3091 = smul.addr %s3090, 16
          %s3092 = scalar_lea.vmem [#allocation11], %s3091
          %3094 = dma.done %s3089, 256
        $region96: #{tpu_custom_call.1} parent=91 // pred_fallthru
          _
      $region92: #{tpu_custom_call.1} parent=5 // pred_fallthru
        _
    $region6: #{tpu_custom_call.1} parent=1 // loop_footer
      %s27 = sadd.s32 1, %s23
    $region7: #{tpu_custom_call.1} parent=1 // loop_footer_branch
      %22 = sbr.rel target = $region3
    $region8: #{tpu_custom_call.1} parent=1 // loop_exit
      _
    %3095 = vsyncpa [#allocation3], 1
    %s3096 = scalar_lea.sflag [#allocation3], 1
    %3097 = vsyncpa %s3096, 1
    %3098 = vsyncpa [#allocation6], 1
    %3099 = vsyncpa [#allocation9], 1
    %3100 = vsyncpa [#allocation4], 1
    %s3101 = scalar_lea.sflag [#allocation4], 1
    %3102 = vsyncpa %s3101, 1

</llo_original>
